<compile_context>
chip_gen: v6e
topology: v6e:2x2x1
jax: 0.10.0
libtpu: 0.0.40
codegen_flags: <defaults>
</compile_context>

<pallas_src>
import math
import numpy as np
import jax
import jax.numpy as jnp
from jax.experimental import pallas as pl
from jax.experimental.pallas import tpu as pltpu

_CONV_CACHE = {}
_GROUP_CACHE = {}

_TAPS = [(ky, kx) for ky in range(3) for kx in range(3)]


# ---------------------------------------------------------------------------
# Layout helpers (width-padded activation layout)
# ---------------------------------------------------------------------------
def _wmask(H, W):
    """(H*(W+2), 1) f32 mask: 1 on real pixels, 0 on the two pad columns."""
    Wp = W + 2
    m = (np.arange(H * Wp) % Wp) < W
    return jnp.asarray(m.astype(np.float32)).reshape(H * Wp, 1)


def _pad_w(x4):
    """(N,H,W,C) -> width-padded flat (N, H*(W+2), C) with zero pad columns."""
    N, H, W, C = x4.shape
    xp = jnp.pad(x4, ((0, 0), (0, 0), (0, 2), (0, 0)))
    return xp.reshape(N, H * (W + 2), C)


def _unpad_w(xf, H, W):
    N, _, C = xf.shape
    Wp = W + 2
    return xf.reshape(N, H, Wp, C)[:, :, :W, :]


# ---------------------------------------------------------------------------
# Standalone fused 3x3 conv kernel (head / body-tail / upsample / tail: cold path)
# ---------------------------------------------------------------------------
def _get_conv_call(N, H, W, Cin, Cout, relu, add_res):
    key = (N, H, W, Cin, Cout, relu, add_res)
    if key in _CONV_CACHE:
        return _CONV_CACHE[key]
    # RCAN never combines relu and a residual add in one conv; refuse the ambiguous
    # ordering instead of silently picking one.
    assert not (relu and add_res)

    Wp = W + 2
    M = H * Wp                  # rows of the width-padded activation
    Mp = (H + 2) * Wp           # rows of the fully padded scratch image
    OFF = Wp + 1                # flat offset of data pixel (0, 0) inside the scratch
    K9 = 9 * Cin

    def kernel(*refs):
        if add_res:
            x_ref, w_ref, b_ref, m_ref, r_ref, o_ref, xp_sc = refs
        else:
            x_ref, w_ref, b_ref, m_ref, o_ref, xp_sc = refs
        # in-kernel zero padding: zero the bordered scratch, drop the activation at (1,1)
        xp_sc[...] = jnp.zeros((Mp + 8, Cin), jnp.float32)
        xp_sc[OFF:OFF + M, :] = x_ref[0]
        acc = jnp.zeros((M, Cout), jnp.float32)
        for t, (ky, kx) in enumerate(_TAPS):
            off = ky * Wp + kx                       # contiguous tap slice
            acc = acc + jnp.dot(
                xp_sc[off:off + M, :].astype(jnp.bfloat16),
                w_ref[t * Cin:(t + 1) * Cin, :].astype(jnp.bfloat16),
                preferred_element_type=jnp.float32)
        y = (acc + b_ref[...]) * m_ref[...]          # mask zeroes the pad columns
        if relu:
            y = jnp.maximum(y, 0.0)
        if add_res:
            y = y + r_ref[0]
        o_ref[0] = y

    in_specs = [
        pl.BlockSpec((1, M, Cin), lambda n: (n, 0, 0)),
        pl.BlockSpec((K9, Cout), lambda n: (0, 0)),
        pl.BlockSpec((1, Cout), lambda n: (0, 0)),
        pl.BlockSpec((M, 1), lambda n: (0, 0)),
    ]
    if add_res:
        in_specs.append(pl.BlockSpec((1, M, Cout), lambda n: (n, 0, 0)))

    call = pl.pallas_call(
        kernel,
        grid=(N,),
        in_specs=in_specs,
        out_specs=pl.BlockSpec((1, M, Cout), lambda n: (n, 0, 0)),
        out_shape=jax.ShapeDtypeStruct((N, M, Cout), jnp.float32),
        scratch_shapes=[pltpu.VMEM((Mp + 8, Cin), jnp.float32)],
        compiler_params=pltpu.CompilerParams(dimension_semantics=("parallel",)),
    )
    _CONV_CACHE[key] = call
    return call


def _conv3x3(p, x4, relu=False, res4=None):
    """3x3 same conv + bias (+ optional ReLU / residual).  Dense NHWC in/out."""
    N, H, W, Cin = x4.shape
    Cout = p["w"].shape[-1]
    call = _get_conv_call(N, H, W, Cin, Cout, relu, res4 is not None)
    xf = _pad_w(x4)
    mask = _wmask(H, W)
    if res4 is not None:
        yf = call(xf, p["w"], p["b"], mask, _pad_w(res4))
    else:
        yf = call(xf, p["w"], p["b"], mask)
    return _unpad_w(yf, H, W)


# ---------------------------------------------------------------------------
# Fused ResidualGroup kernel (the hot path: 20 RCABs + tail conv + skip per call)
# ---------------------------------------------------------------------------
def _get_group_call(N, H, W, C, Cr, nb):
    key = (N, H, W, C, Cr, nb)
    if key in _GROUP_CACHE:
        return _GROUP_CACHE[key]

    Wp = W + 2
    M = H * Wp
    Mp = (H + 2) * Wp
    OFF = Wp + 1
    K9 = 9 * C

    def kernel(x_ref, w1_ref, b1_ref, w2_ref, b2_ref,
               cw1_ref, cb1_ref, cw2_ref, cb2_ref, m_ref,
               o_ref, h_sc, xp_sc, col_sc):
        j = pl.program_id(1)
        mask = m_ref[...]                              # (M, 1)

        def conv(x2d, w_flat, bias):
            # x2d: (M, C) f32 width-padded activation (pad columns already zero).
            xp_sc[...] = jnp.zeros((Mp + 8, C), jnp.float32)
            xp_sc[OFF:OFF + M, :] = x2d
            # im2col: each 3x3 tap is a contiguous row-slice of the padded scratch;
            # one K=9*C bf16 MXU matmul instead of 9 small K=C matmuls.
            for t, (ky, kx) in enumerate(_TAPS):
                off = ky * Wp + kx
                col_sc[:, t * C:(t + 1) * C] = xp_sc[off:off + M, :]
            y = jnp.dot(col_sc[...].astype(jnp.bfloat16), w_flat,
                        preferred_element_type=jnp.float32)
            return (y + bias) * mask

        @pl.when(j == 0)
        def _init():
            h_sc[...] = x_ref[0]                       # block-chain state <- group input

        @pl.when(j < nb)
        def _rcab():                                   # one full RCAB
            h = h_sc[...]
            y = conv(h, w1_ref[0], b1_ref[0])
            y = jnp.maximum(y, 0.0)
            y = conv(y, w2_ref[0], b2_ref[0])
            # Channel attention on VPU/XLU: M=1 matmuls are not worth MXU push/pop.
            pooled = jnp.sum(y, axis=0, keepdims=True) * (1.0 / (H * W))       # (1, C)
            t1 = jnp.sum(cw1_ref[0] * pooled, axis=1, keepdims=True) + cb1_ref[0]
            t1 = jnp.maximum(t1, 0.0)                                          # (Cr, 1)
            t2 = jnp.sum(cw2_ref[0] * t1, axis=0, keepdims=True) + cb2_ref[0]  # (1, C)
            scale = jax.nn.sigmoid(t2)
            h_sc[...] = y * scale + h                  # CA rescale + RCAB residual

        @pl.when(j == nb)
        def _tail():                                   # group tail conv + group skip
            y = conv(h_sc[...], w1_ref[0], b1_ref[0])
            o_ref[0] = y + x_ref[0]

    def _clamp(j):                                     # last step reuses block nb-1's
        return jnp.minimum(j, nb - 1)                  # conv2/CA blocks (unused there)

    in_specs = [
        pl.BlockSpec((1, M, C), lambda n, j: (n, 0, 0)),           # group input (resident)
        pl.BlockSpec((1, K9, C), lambda n, j: (j, 0, 0)),          # conv1 / tail weights
        pl.BlockSpec((1, 1, C), lambda n, j: (j, 0, 0)),           # conv1 / tail bias
        pl.BlockSpec((1, K9, C), lambda n, j: (_clamp(j), 0, 0)),  # conv2 weights
        pl.BlockSpec((1, 1, C), lambda n, j: (_clamp(j), 0, 0)),   # conv2 bias
        pl.BlockSpec((1, Cr, C), lambda n, j: (_clamp(j), 0, 0)),  # CA W1 (Cr, C)
        pl.BlockSpec((1, Cr, 1), lambda n, j: (_clamp(j), 0, 0)),  # CA b1
        pl.BlockSpec((1, Cr, C), lambda n, j: (_clamp(j), 0, 0)),  # CA W2 (Cr, C)
        pl.BlockSpec((1, 1, C), lambda n, j: (_clamp(j), 0, 0)),   # CA b2
        pl.BlockSpec((M, 1), lambda n, j: (0, 0)),                 # pad-column mask
    ]
    call = pl.pallas_call(
        kernel,
        grid=(N, nb + 1),
        in_specs=in_specs,
        out_specs=pl.BlockSpec((1, M, C), lambda n, j: (n, 0, 0)),
        out_shape=jax.ShapeDtypeStruct((N, M, C), jnp.float32),
        scratch_shapes=[
            pltpu.VMEM((M, C), jnp.float32),        # carried activation h (across blocks)
            pltpu.VMEM((Mp + 8, C), jnp.float32),   # zero-bordered padded image
            pltpu.VMEM((M, K9), jnp.float32),       # im2col buffer
        ],
        compiler_params=pltpu.CompilerParams(
            dimension_semantics=("parallel", "arbitrary")),
    )
    _GROUP_CACHE[key] = call
    return call


def _groups_apply(groups, x4):
    """Apply a list of fused ResidualGroups.  Dense NHWC in/out; the width-padded
    layout is kept across the whole group stack (no per-group glue ops)."""
    N, H, W, C = x4.shape
    nb = groups[0]["w2s"].shape[0]
    Cr = groups[0]["cw1s"].shape[1]
    call = _get_group_call(N, H, W, C, Cr, nb)
    mask = _wmask(H, W)
    xf = _pad_w(x4)
    for g in groups:
        xf = call(xf, g["w1s"], g["b1s"], g["w2s"], g["b2s"],
                  g["cw1s"], g["cb1s"], g["cw2s"], g["cb2s"], mask)
    return _unpad_w(xf, H, W)


# ---------------------------------------------------------------------------
# Plain-JAX layout glue
# ---------------------------------------------------------------------------
def _pixel_shuffle_nhwc(x, r):
    # nn.PixelShuffle: in channel k = c*r*r + i*r + j -> out[n, h*r+i, w*r+j, c]
    N, H, W, Crr = x.shape
    C = Crr // (r * r)
    x = x.reshape(N, H, W, C, r, r)
    x = jnp.transpose(x, (0, 1, 4, 2, 5, 3))
    return x.reshape(N, H * r, W * r, C)


# ---------------------------------------------------------------------------
# Parameter construction (deterministic synthetic params; mirrors RCAN.__init__)
# ---------------------------------------------------------------------------
def init_rcan_params(scale, n_colors, n_resgroups=10, n_resblocks=20,
                     n_feats=64, reduction=16):
    rng = np.random.default_rng(0)

    def conv_flat_np(cin, cout):
        bnd = 1.0 / math.sqrt(cin * 9)
        w = rng.uniform(-bnd, bnd, (3, 3, cin, cout)).astype(np.float32)
        b = rng.uniform(-bnd, bnd, (1, cout)).astype(np.float32)
        return w.reshape(9 * cin, cout), b        # rows ordered (ky, kx, cin)

    def ca_np(c, red):
        cr = c // red
        b1 = 1.0 / math.sqrt(c)
        b2 = 1.0 / math.sqrt(cr)
        w1 = rng.uniform(-b1, b1, (cr, c)).astype(np.float32)     # maps c -> r
        bb1 = rng.uniform(-b1, b1, (cr, 1)).astype(np.float32)
        w2 = rng.uniform(-b2, b2, (cr, c)).astype(np.float32)     # maps r -> c
        bb2 = rng.uniform(-b2, b2, (1, c)).astype(np.float32)
        return w1, bb1, w2, bb2

    groups = []
    for _ in range(n_resgroups):
        w1l, b1l, w2l, b2l = [], [], [], []
        cw1l, cb1l, cw2l, cb2l = [], [], [], []
        for _ in range(n_resblocks):
            w, b = conv_flat_np(n_feats, n_feats); w1l.append(w); b1l.append(b)
            w, b = conv_flat_np(n_feats, n_feats); w2l.append(w); b2l.append(b)
            a, bb, c2, d = ca_np(n_feats, reduction)
            cw1l.append(a); cb1l.append(bb); cw2l.append(c2); cb2l.append(d)
        wt, bt = conv_flat_np(n_feats, n_feats)        # group tail conv
        w1l.append(wt); b1l.append(bt)
        groups.append({
            # conv weights feed the MXU -> pre-cast to bf16; biases / CA stay f32
            "w1s": jnp.asarray(np.stack(w1l)).astype(jnp.bfloat16),  # (nb+1, 9C, C)
            "b1s": jnp.asarray(np.stack(b1l)),                       # (nb+1, 1, C)
            "w2s": jnp.asarray(np.stack(w2l)).astype(jnp.bfloat16),  # (nb, 9C, C)
            "b2s": jnp.asarray(np.stack(b2l)),                       # (nb, 1, C)
            "cw1s": jnp.asarray(np.stack(cw1l)),                     # (nb, Cr, C)
            "cb1s": jnp.asarray(np.stack(cb1l)),                     # (nb, Cr, 1)
            "cw2s": jnp.asarray(np.stack(cw2l)),                     # (nb, Cr, C)
            "cb2s": jnp.asarray(np.stack(cb2l)),                     # (nb, 1, C)
        })

    def conv_p(cin, cout):                              # cold-path convs stay f32
        w, b = conv_flat_np(cin, cout)
        return {"w": jnp.asarray(w), "b": jnp.asarray(b)}

    up_convs = []
    if (scale & (scale - 1)) == 0:
        for _ in range(int(round(math.log2(scale)))):
            up_convs.append(conv_p(n_feats, 4 * n_feats))
    elif scale == 3:
        up_convs.append(conv_p(n_feats, 9 * n_feats))
    else:
        raise NotImplementedError

    return {"head": conv_p(3, n_feats), "groups": groups,
            "body_tail": conv_p(n_feats, n_feats), "up_convs": up_convs,
            "tail_conv": conv_p(n_feats, n_colors)}


# ---------------------------------------------------------------------------
# RCAN forward (matches the PyTorch module's forward)
# ---------------------------------------------------------------------------
def rcan_forward(params, x_nchw, scale):
    x = jnp.transpose(x_nchw, (0, 2, 3, 1)).astype(jnp.float32)     # NCHW -> NHWC
    xh = _conv3x3(params["head"], x)                                # head
    t = _groups_apply(params["groups"], xh)                         # 10 fused groups
    t = _conv3x3(params["body_tail"], t, res4=xh)                   # body conv + skip
    h = t
    if (scale & (scale - 1)) == 0:                                  # tail: upsampler
        for up in params["up_convs"]:
            h = _conv3x3(up, h)
            h = _pixel_shuffle_nhwc(h, 2)
    elif scale == 3:
        h = _conv3x3(params["up_convs"][0], h)
        h = _pixel_shuffle_nhwc(h, 3)
    else:
        raise NotImplementedError
    out = _conv3x3(params["tail_conv"], h)                          # final conv
    return jnp.transpose(out, (0, 3, 1, 2))                         # NHWC -> NCHW


# ---------------------------------------------------------------------------
# Pure-JAX references for sanity checks
# ---------------------------------------------------------------------------
def _conv_ref_nhwc(x, w_hwio, b):
    y = jax.lax.conv_general_dilated(
        x, w_hwio, window_strides=(1, 1), padding="SAME",
        dimension_numbers=("NHWC", "HWIO", "NHWC"))
    return y + b.reshape(1, 1, 1, -1)


def _group_ref_nhwc(g, x):
    N, H, W, C = x.shape
    nb = g["w2s"].shape[0]
    h = x
    for i in range(nb):
        w1 = g["w1s"][i].astype(jnp.float32).reshape(3, 3, C, C)
        w2 = g["w2s"][i].astype(jnp.float32).reshape(3, 3, C, C)
        y = jax.nn.relu(_conv_ref_nhwc(h, w1, g["b1s"][i]))
        y = _conv_ref_nhwc(y, w2, g["b2s"][i])
        pooled = jnp.mean(y, axis=(1, 2))                                  # (N, C)
        t1 = jax.nn.relu(pooled @ g["cw1s"][i].T + g["cb1s"][i][:, 0])     # (N, Cr)
        t2 = t1 @ g["cw2s"][i] + g["cb2s"][i][0]                           # (N, C)
        scale = jax.nn.sigmoid(t2)[:, None, None, :]
        h = y * scale + h
    wt = g["w1s"][nb].astype(jnp.float32).reshape(3, 3, C, C)
    return _conv_ref_nhwc(h, wt, g["b1s"][nb]) + x


# ---------------------------------------------------------------------------
if __name__ == "__main__":
    scale, n_colors = 2, 3
    params = init_rcan_params(scale=scale, n_colors=n_colors)

    key = jax.random.PRNGKey(0)
    x_nchw = jax.random.normal(key, (2, 3, 16, 16), dtype=jnp.float32)
    x_nhwc = jnp.transpose(x_nchw, (0, 2, 3, 1))

    # check 1: standalone fused conv kernel vs lax.conv (head layer)
    hp = params["head"]
    y_pallas = _conv3x3(hp, x_nhwc)
    w_hwio = hp["w"].reshape(3, 3, 3, -1)
    y_ref = _conv_ref_nhwc(x_nhwc, w_hwio, hp["b"])
    np.testing.assert_allclose(np.asarray(y_pallas), np.asarray(y_ref),
                               rtol=2e-2, atol=2e-2)

    # check 2: one fused ResidualGroup pallas_call vs pure-JAX reference
    g0 = params["groups"][0]
    y_grp = _groups_apply([g0], y_ref)
    y_grp_ref = jax.jit(_group_ref_nhwc)(g0, y_ref)
    np.testing.assert_allclose(np.asarray(y_grp), np.asarray(y_grp_ref),
                               rtol=5e-2, atol=5e-2)

    # full forward
    fwd = jax.jit(rcan_forward, static_argnames=("scale",))
    out = jax.block_until_ready(fwd(params, x_nchw, scale=scale))
    assert out.shape == (2, n_colors, 16 * scale, 16 * scale), out.shape
    assert bool(jnp.all(jnp.isfinite(out)))
    print("KERNEL_OK")
</pallas_src>

<mosaic_0001>
module attributes {stable_mosaic.version = 11 : i64} {
  func.func @kernel(%arg0: i32, %arg1: memref<1x288x3xf32, #tpu.memory_space<vmem>>, %arg2: memref<27x64xf32, #tpu.memory_space<vmem>>, %arg3: memref<1x64xf32, #tpu.memory_space<vmem>>, %arg4: memref<288x1xf32, #tpu.memory_space<vmem>>, %arg5: memref<1x288x64xf32, #tpu.memory_space<vmem>>, %arg6: memref<332x3xf32, #tpu.memory_space<vmem>>) attributes {dimension_semantics = [#tpu.dimension_semantics<parallel>], iteration_bounds = array<i64: 2>, scalar_prefetch = 0 : i64, scratch_operands = 1 : i64, tpu.core_type = #tpu.core_type<tc>, window_params = [{transform_indices = @transform_0, window_bounds = array<i64: 1, 288, 3>}, {pipeline_mode = #tpu.pipeline_mode<synchronous>, transform_indices = @transform_1, window_bounds = array<i64: 27, 64>}, {pipeline_mode = #tpu.pipeline_mode<synchronous>, transform_indices = @transform_2, window_bounds = array<i64: 1, 64>}, {pipeline_mode = #tpu.pipeline_mode<synchronous>, transform_indices = @transform_3, window_bounds = array<i64: 288, 1>}, {transform_indices = @transform_4, window_bounds = array<i64: 1, 288, 64>}]} {
    %cst = arith.constant 0.000000e+00 : f32
    %0 = vector.broadcast %cst : f32 to vector<332x3xf32>
    %c0 = arith.constant 0 : index
    %c0_0 = arith.constant 0 : index
    %1 = vector.load %arg6[%c0, %c0_0] : memref<332x3xf32, #tpu.memory_space<vmem>>, vector<332x3xf32>
    tpu.vector_store %arg6[%c0, %c0_0], %0 {strides = array<i32>} : memref<332x3xf32, #tpu.memory_space<vmem>>, vector<332x3xf32>,
    %c0_1 = arith.constant 0 : index
    %c0_2 = arith.constant 0 : index
    %c0_3 = arith.constant 0 : index
    %2 = vector.load %arg1[%c0_1, %c0_2, %c0_3] : memref<1x288x3xf32, #tpu.memory_space<vmem>>, vector<1x288x3xf32>
    %3 = vector.shape_cast %2 : vector<1x288x3xf32> to vector<288x3xf32>
    %c19 = arith.constant 19 : index
    %c0_4 = arith.constant 0 : index
    %4 = vector.load %arg6[%c19, %c0_4] : memref<332x3xf32, #tpu.memory_space<vmem>>, vector<288x3xf32>
    tpu.vector_store %arg6[%c19, %c0_4], %3 {strides = array<i32>} : memref<332x3xf32, #tpu.memory_space<vmem>>, vector<288x3xf32>,
    %cst_5 = arith.constant 0.000000e+00 : f32
    %5 = vector.broadcast %cst_5 : f32 to vector<288x64xf32>
    %c0_6 = arith.constant 0 : index
    %c0_7 = arith.constant 0 : index
    %6 = vector.load %arg6[%c0_6, %c0_7] : memref<332x3xf32, #tpu.memory_space<vmem>>, vector<288x3xf32>
    %7 = arith.truncf %6 : vector<288x3xf32> to vector<288x3xbf16>
    %c0_8 = arith.constant 0 : index
    %c0_9 = arith.constant 0 : index
    %8 = vector.load %arg2[%c0_8, %c0_9] : memref<27x64xf32, #tpu.memory_space<vmem>>, vector<3x64xf32>
    %9 = arith.truncf %8 : vector<3x64xf32> to vector<3x64xbf16>
    %cst_10 = arith.constant dense<0.000000e+00> : vector<288x64xf32>
    %10 = tpu.matmul %7, %9, %cst_10 {dimension_numbers = #tpu.dot_dimension_numbers<[1], [0], [0], [1], [0, 0, 1, 1], [], []>} : vector<288x3xbf16>, vector<3x64xbf16>, vector<288x64xf32> -> vector<288x64xf32>
    %11 = arith.addf %5, %10 : vector<288x64xf32>
    %c1 = arith.constant 1 : index
    %c0_11 = arith.constant 0 : index
    %12 = vector.load %arg6[%c1, %c0_11] : memref<332x3xf32, #tpu.memory_space<vmem>>, vector<288x3xf32>
    %13 = arith.truncf %12 : vector<288x3xf32> to vector<288x3xbf16>
    %c3 = arith.constant 3 : index
    %c0_12 = arith.constant 0 : index
    %14 = vector.load %arg2[%c3, %c0_12] : memref<27x64xf32, #tpu.memory_space<vmem>>, vector<3x64xf32>
    %15 = arith.truncf %14 : vector<3x64xf32> to vector<3x64xbf16>
    %cst_13 = arith.constant dense<0.000000e+00> : vector<288x64xf32>
    %16 = tpu.matmul %13, %15, %cst_13 {dimension_numbers = #tpu.dot_dimension_numbers<[1], [0], [0], [1], [0, 0, 1, 1], [], []>} : vector<288x3xbf16>, vector<3x64xbf16>, vector<288x64xf32> -> vector<288x64xf32>
    %17 = arith.addf %11, %16 : vector<288x64xf32>
    %c2 = arith.constant 2 : index
    %c0_14 = arith.constant 0 : index
    %18 = vector.load %arg6[%c2, %c0_14] : memref<332x3xf32, #tpu.memory_space<vmem>>, vector<288x3xf32>
    %19 = arith.truncf %18 : vector<288x3xf32> to vector<288x3xbf16>
    %c6 = arith.constant 6 : index
    %c0_15 = arith.constant 0 : index
    %20 = vector.load %arg2[%c6, %c0_15] : memref<27x64xf32, #tpu.memory_space<vmem>>, vector<3x64xf32>
    %21 = arith.truncf %20 : vector<3x64xf32> to vector<3x64xbf16>
    %cst_16 = arith.constant dense<0.000000e+00> : vector<288x64xf32>
    %22 = tpu.matmul %19, %21, %cst_16 {dimension_numbers = #tpu.dot_dimension_numbers<[1], [0], [0], [1], [0, 0, 1, 1], [], []>} : vector<288x3xbf16>, vector<3x64xbf16>, vector<288x64xf32> -> vector<288x64xf32>
    %23 = arith.addf %17, %22 : vector<288x64xf32>
    %c18 = arith.constant 18 : index
    %c0_17 = arith.constant 0 : index
    %24 = vector.load %arg6[%c18, %c0_17] : memref<332x3xf32, #tpu.memory_space<vmem>>, vector<288x3xf32>
    %25 = arith.truncf %24 : vector<288x3xf32> to vector<288x3xbf16>
    %c9 = arith.constant 9 : index
    %c0_18 = arith.constant 0 : index
    %26 = vector.load %arg2[%c9, %c0_18] : memref<27x64xf32, #tpu.memory_space<vmem>>, vector<3x64xf32>
    %27 = arith.truncf %26 : vector<3x64xf32> to vector<3x64xbf16>
    %cst_19 = arith.constant dense<0.000000e+00> : vector<288x64xf32>
    %28 = tpu.matmul %25, %27, %cst_19 {dimension_numbers = #tpu.dot_dimension_numbers<[1], [0], [0], [1], [0, 0, 1, 1], [], []>} : vector<288x3xbf16>, vector<3x64xbf16>, vector<288x64xf32> -> vector<288x64xf32>
    %29 = arith.addf %23, %28 : vector<288x64xf32>
    %c19_20 = arith.constant 19 : index
    %c0_21 = arith.constant 0 : index
    %30 = vector.load %arg6[%c19_20, %c0_21] : memref<332x3xf32, #tpu.memory_space<vmem>>, vector<288x3xf32>
    %31 = arith.truncf %30 : vector<288x3xf32> to vector<288x3xbf16>
    %c12 = arith.constant 12 : index
    %c0_22 = arith.constant 0 : index
    %32 = vector.load %arg2[%c12, %c0_22] : memref<27x64xf32, #tpu.memory_space<vmem>>, vector<3x64xf32>
    %33 = arith.truncf %32 : vector<3x64xf32> to vector<3x64xbf16>
    %cst_23 = arith.constant dense<0.000000e+00> : vector<288x64xf32>
    %34 = tpu.matmul %31, %33, %cst_23 {dimension_numbers = #tpu.dot_dimension_numbers<[1], [0], [0], [1], [0, 0, 1, 1], [], []>} : vector<288x3xbf16>, vector<3x64xbf16>, vector<288x64xf32> -> vector<288x64xf32>
    %35 = arith.addf %29, %34 : vector<288x64xf32>
    %c20 = arith.constant 20 : index
    %c0_24 = arith.constant 0 : index
    %36 = vector.load %arg6[%c20, %c0_24] : memref<332x3xf32, #tpu.memory_space<vmem>>, vector<288x3xf32>
    %37 = arith.truncf %36 : vector<288x3xf32> to vector<288x3xbf16>
    %c15 = arith.constant 15 : index
    %c0_25 = arith.constant 0 : index
    %38 = vector.load %arg2[%c15, %c0_25] : memref<27x64xf32, #tpu.memory_space<vmem>>, vector<3x64xf32>
    %39 = arith.truncf %38 : vector<3x64xf32> to vector<3x64xbf16>
    %cst_26 = arith.constant dense<0.000000e+00> : vector<288x64xf32>
    %40 = tpu.matmul %37, %39, %cst_26 {dimension_numbers = #tpu.dot_dimension_numbers<[1], [0], [0], [1], [0, 0, 1, 1], [], []>} : vector<288x3xbf16>, vector<3x64xbf16>, vector<288x64xf32> -> vector<288x64xf32>
    %41 = arith.addf %35, %40 : vector<288x64xf32>
    %c36 = arith.constant 36 : index
    %c0_27 = arith.constant 0 : index
    %42 = vector.load %arg6[%c36, %c0_27] : memref<332x3xf32, #tpu.memory_space<vmem>>, vector<288x3xf32>
    %43 = arith.truncf %42 : vector<288x3xf32> to vector<288x3xbf16>
    %c18_28 = arith.constant 18 : index
    %c0_29 = arith.constant 0 : index
    %44 = vector.load %arg2[%c18_28, %c0_29] : memref<27x64xf32, #tpu.memory_space<vmem>>, vector<3x64xf32>
    %45 = arith.truncf %44 : vector<3x64xf32> to vector<3x64xbf16>
    %cst_30 = arith.constant dense<0.000000e+00> : vector<288x64xf32>
    %46 = tpu.matmul %43, %45, %cst_30 {dimension_numbers = #tpu.dot_dimension_numbers<[1], [0], [0], [1], [0, 0, 1, 1], [], []>} : vector<288x3xbf16>, vector<3x64xbf16>, vector<288x64xf32> -> vector<288x64xf32>
    %47 = arith.addf %41, %46 : vector<288x64xf32>
    %c37 = arith.constant 37 : index
    %c0_31 = arith.constant 0 : index
    %48 = vector.load %arg6[%c37, %c0_31] : memref<332x3xf32, #tpu.memory_space<vmem>>, vector<288x3xf32>
    %49 = arith.truncf %48 : vector<288x3xf32> to vector<288x3xbf16>
    %c21 = arith.constant 21 : index
    %c0_32 = arith.constant 0 : index
    %50 = vector.load %arg2[%c21, %c0_32] : memref<27x64xf32, #tpu.memory_space<vmem>>, vector<3x64xf32>
    %51 = arith.truncf %50 : vector<3x64xf32> to vector<3x64xbf16>
    %cst_33 = arith.constant dense<0.000000e+00> : vector<288x64xf32>
    %52 = tpu.matmul %49, %51, %cst_33 {dimension_numbers = #tpu.dot_dimension_numbers<[1], [0], [0], [1], [0, 0, 1, 1], [], []>} : vector<288x3xbf16>, vector<3x64xbf16>, vector<288x64xf32> -> vector<288x64xf32>
    %53 = arith.addf %47, %52 : vector<288x64xf32>
    %c38 = arith.constant 38 : index
    %c0_34 = arith.constant 0 : index
    %54 = vector.load %arg6[%c38, %c0_34] : memref<332x3xf32, #tpu.memory_space<vmem>>, vector<288x3xf32>
    %55 = arith.truncf %54 : vector<288x3xf32> to vector<288x3xbf16>
    %c24 = arith.constant 24 : index
    %c0_35 = arith.constant 0 : index
    %56 = vector.load %arg2[%c24, %c0_35] : memref<27x64xf32, #tpu.memory_space<vmem>>, vector<3x64xf32>
    %57 = arith.truncf %56 : vector<3x64xf32> to vector<3x64xbf16>
    %cst_36 = arith.constant dense<0.000000e+00> : vector<288x64xf32>
    %58 = tpu.matmul %55, %57, %cst_36 {dimension_numbers = #tpu.dot_dimension_numbers<[1], [0], [0], [1], [0, 0, 1, 1], [], []>} : vector<288x3xbf16>, vector<3x64xbf16>, vector<288x64xf32> -> vector<288x64xf32>
    %59 = arith.addf %53, %58 : vector<288x64xf32>
    %c0_37 = arith.constant 0 : index
    %c0_38 = arith.constant 0 : index
    %60 = vector.load %arg3[%c0_37, %c0_38] : memref<1x64xf32, #tpu.memory_space<vmem>>, vector<1x64xf32>
    %61 = vector.broadcast %60 : vector<1x64xf32> to vector<288x64xf32>
    %62 = arith.addf %59, %61 : vector<288x64xf32>
    %c0_39 = arith.constant 0 : index
    %c0_40 = arith.constant 0 : index
    %63 = vector.load %arg4[%c0_39, %c0_40] : memref<288x1xf32, #tpu.memory_space<vmem>>, vector<288x1xf32>
    %64 = vector.broadcast %63 : vector<288x1xf32> to vector<288x64xf32>
    %65 = arith.mulf %62, %64 : vector<288x64xf32>
    %c0_41 = arith.constant 0 : index
    %c0_42 = arith.constant 0 : index
    %c0_43 = arith.constant 0 : index
    %66 = vector.load %arg5[%c0_41, %c0_42, %c0_43] : memref<1x288x64xf32, #tpu.memory_space<vmem>>, vector<1x288x64xf32>
    %67 = vector.shape_cast %66 : vector<1x288x64xf32> to vector<288x64xf32>
    %68 = vector.shape_cast %65 : vector<288x64xf32> to vector<1x288x64xf32>
    tpu.vector_store %arg5[%c0_41, %c0_42, %c0_43], %68 {strides = array<i32>} : memref<1x288x64xf32, #tpu.memory_space<vmem>>, vector<1x288x64xf32>,
    return
  }
  func.func @transform_0(%arg0: i32) -> (i32, i32, i32) {
    %c0_i32 = arith.constant 0 : i32
    %c0_i32_0 = arith.constant 0 : i32
    %c0_i32_1 = arith.constant 0 : i32
    return %arg0, %c0_i32, %c0_i32_0 : i32, i32, i32
  }
  func.func @transform_1(%arg0: i32) -> (i32, i32) {
    %c0_i32 = arith.constant 0 : i32
    %c0_i32_0 = arith.constant 0 : i32
    %c0_i32_1 = arith.constant 0 : i32
    return %c0_i32, %c0_i32_0 : i32, i32
  }
  func.func @transform_2(%arg0: i32) -> (i32, i32) {
    %c0_i32 = arith.constant 0 : i32
    %c0_i32_0 = arith.constant 0 : i32
    %c0_i32_1 = arith.constant 0 : i32
    return %c0_i32, %c0_i32_0 : i32, i32
  }
  func.func @transform_3(%arg0: i32) -> (i32, i32) {
    %c0_i32 = arith.constant 0 : i32
    %c0_i32_0 = arith.constant 0 : i32
    %c0_i32_1 = arith.constant 0 : i32
    return %c0_i32, %c0_i32_0 : i32, i32
  }
  func.func @transform_4(%arg0: i32) -> (i32, i32, i32) {
    %c0_i32 = arith.constant 0 : i32
    %c0_i32_0 = arith.constant 0 : i32
    %c0_i32_1 = arith.constant 0 : i32
    return %arg0, %c0_i32, %c0_i32_0 : i32, i32, i32
  }
}

</mosaic_0001>

<llo_original>
// kernel: tpu_custom_call.1
$region0: #{tpu_custom_call.1}
  #allocation0 [shape = 'u32[]', space=smem, size = 0x4, offset = 0x4, fixed_abs, tag = 'smem constant byte address 0x4 - core index']
  #allocation1 [shape = 'u32[144,128]{1,0:T(1,128)}', space=vmem, size = 0x12000, scoped, tag = 'internal scratch']
  #allocation2 [shape = 'f32[332,3]{1,0:T(8,128)}', space=vmem, size = 0x2a000, scoped, tag = 'scratch operand']
  %s0 = inlined_call_operand.vmem [shape: f32[2,288,3], index: 0, kind: input, shape index: {}]
  %s1 = inlined_call_operand.vmem [shape: f32[27,64], index: 1, kind: input, shape index: {}]
  %s2 = inlined_call_operand.vmem [shape: f32[1,64], index: 2, kind: input, shape index: {}]
  %s3 = inlined_call_operand.vmem [shape: f32[288,1], index: 3, kind: input, shape index: {}]
  %s4 = inlined_call_operand.vmem [shape: f32[2,288,64], index: 4, kind: output, shape index: {}]
  %s5 = sld [smem:[#allocation0]]
  $region49: #{tpu_custom_call.1} parent=0
    _
  %s7 = ssub.s32 1, %s5
  %s8 = scalar_select 0, %s7, %s5
  loop: start=0, step=1, limit=4
  $region2: #{tpu_custom_call.1} parent=0 // loop_pre_header
    _
  $region3: #{tpu_custom_call.1} parent=0 // loop_header
    %s10 = sphi 0, %s14
    %p11 = scmp.ge.s32.totalorder %s10, 4
    %s20 = sphi 0, %s22
    %s23 = sphi 0, %s20
    %s24 = sphi 0, %s23
    %s40 = sphi 0, %s24
    %s44 = sphi 0, %s44
    %s46 = sphi 0, %s44
    %s47 = sphi 0, %s46
    %s61 = sphi 0, %s47
    %s65 = sphi 0, %s65
    %s67 = sphi 0, %s65
    %s68 = sphi 0, %s67
    %s82 = sphi 0, %s68
    %s86 = sphi 0, %s86
    %s88 = sphi 0, %s86
    %s89 = sphi 0, %s88
    %s103 = sphi 0, %s89
    %s109 = sphi 0, %s111
    %s112 = sphi 0, %s109
    %s113 = sphi 0, %s112
    %s129 = sphi 0, %s113
  $region4: #{tpu_custom_call.1} parent=0 // loop_header_branch
    %13 = sbr.rel (%p11) target = $region8
  $region5: #{tpu_custom_call.1} parent=0 // loop_body
    %s15 = ssub.s32 %s10, 1
    %s16 = ssub.s32 %s10, 2
    %s17 = sadd.s32 %s10, 1
    %s18 = ssub.s32 %s10, %s17
    %p19 = scmp.eq.s32.totalorder %s18, 0
    %s21 = sadd.s32 %s20, 1
    %s22 = scalar_select %p19, %s20, %s21
    %p25 = pneg %p19
    %p26 = scmp.eq.s32.totalorder %s10, 1
    %p27 = por %p25, %p26
    %p28 = scmp.ne.s32.totalorder %s20, %s23
    %p29 = scmp.eq.s32.totalorder %s10, 0
    %p30 = por %p28, %p29
    %p31 = scmp.ne.s32.totalorder %s20, %s23
    %p32 = scmp.eq.s32.totalorder %s15, 1
    %p33 = por %p31, %p32
    %p34 = scmp.ne.s32.totalorder %s23, %s24
    %p35 = scmp.eq.s32.totalorder %s15, 0
    %p36 = por %p34, %p35
    %p37 = scmp.ne.s32.totalorder %s23, %s24
    %p38 = scmp.eq.s32.totalorder %s16, 1
    %p39 = por %p37, %p38
    %p41 = scmp.ne.s32.totalorder %s24, %s40
    %p42 = scmp.eq.s32.totalorder %s16, 0
    %p43 = por %p41, %p42
    %s45 = sadd.s32 %s44, 1
    %p48 = scmp.eq.s32.totalorder %s10, 1
    %p49 = scmp.ne.s32.totalorder %s44, %s46
    %p50 = scmp.eq.s32.totalorder %s10, 0
    %p51 = por %p49, %p50
    %p52 = scmp.ne.s32.totalorder %s44, %s46
    %p53 = scmp.eq.s32.totalorder %s15, 1
    %p54 = por %p52, %p53
    %p55 = scmp.ne.s32.totalorder %s46, %s47
    %p56 = scmp.eq.s32.totalorder %s15, 0
    %p57 = por %p55, %p56
    %p58 = scmp.ne.s32.totalorder %s46, %s47
    %p59 = scmp.eq.s32.totalorder %s16, 1
    %p60 = por %p58, %p59
    %p62 = scmp.ne.s32.totalorder %s47, %s61
    %p63 = scmp.eq.s32.totalorder %s16, 0
    %p64 = por %p62, %p63
    %s66 = sadd.s32 %s65, 1
    %p69 = scmp.eq.s32.totalorder %s10, 1
    %p70 = scmp.ne.s32.totalorder %s65, %s67
    %p71 = scmp.eq.s32.totalorder %s10, 0
    %p72 = por %p70, %p71
    %p73 = scmp.ne.s32.totalorder %s65, %s67
    %p74 = scmp.eq.s32.totalorder %s15, 1
    %p75 = por %p73, %p74
    %p76 = scmp.ne.s32.totalorder %s67, %s68
    %p77 = scmp.eq.s32.totalorder %s15, 0
    %p78 = por %p76, %p77
    %p79 = scmp.ne.s32.totalorder %s67, %s68
    %p80 = scmp.eq.s32.totalorder %s16, 1
    %p81 = por %p79, %p80
    %p83 = scmp.ne.s32.totalorder %s68, %s82
    %p84 = scmp.eq.s32.totalorder %s16, 0
    %p85 = por %p83, %p84
    %s87 = sadd.s32 %s86, 1
    %p90 = scmp.eq.s32.totalorder %s10, 1
    %p91 = scmp.ne.s32.totalorder %s86, %s88
    %p92 = scmp.eq.s32.totalorder %s10, 0
    %p93 = por %p91, %p92
    %p94 = scmp.ne.s32.totalorder %s86, %s88
    %p95 = scmp.eq.s32.totalorder %s15, 1
    %p96 = por %p94, %p95
    %p97 = scmp.ne.s32.totalorder %s88, %s89
    %p98 = scmp.eq.s32.totalorder %s15, 0
    %p99 = por %p97, %p98
    %p100 = scmp.ne.s32.totalorder %s88, %s89
    %p101 = scmp.eq.s32.totalorder %s16, 1
    %p102 = por %p100, %p101
    %p104 = scmp.ne.s32.totalorder %s89, %s103
    %p105 = scmp.eq.s32.totalorder %s16, 0
    %p106 = por %p104, %p105
    %s107 = ssub.s32 %s10, %s17
    %p108 = scmp.eq.s32.totalorder %s107, 0
    %s110 = sadd.s32 %s109, 1
    %s111 = scalar_select %p108, %s109, %s110
    %p114 = pneg %p108
    %p115 = scmp.eq.s32.totalorder %s10, 1
    %p116 = por %p114, %p115
    %p117 = scmp.ne.s32.totalorder %s109, %s112
    %p118 = scmp.eq.s32.totalorder %s10, 0
    %p119 = por %p117, %p118
    %p120 = scmp.ne.s32.totalorder %s109, %s112
    %p121 = scmp.eq.s32.totalorder %s15, 1
    %p122 = por %p120, %p121
    %p123 = scmp.ne.s32.totalorder %s112, %s113
    %p124 = scmp.eq.s32.totalorder %s15, 0
    %p125 = por %p123, %p124
    %p126 = scmp.ne.s32.totalorder %s112, %s113
    %p127 = scmp.eq.s32.totalorder %s16, 1
    %p128 = por %p126, %p127
    %p130 = scmp.ne.s32.totalorder %s113, %s129
    %p131 = scmp.eq.s32.totalorder %s16, 0
    %p132 = por %p130, %p131
    %p133 = scmp.le.s32.totalorder 1, %s10
    %p134 = scmp.lt.s32.totalorder %s10, 3
    %p135 = pnand %p133, %p134
    %p136 = pneg %p135
    // Predicated region
    $region9: #{tpu_custom_call.1} parent=5 // pred_check
      _
    $region10: #{tpu_custom_call.1} parent=5 // pred_check_branch
      %138 = sbr.rel (%p135) target = $region12
    $region11: #{tpu_custom_call.1} parent=5 // pred_region
      %s139 = ssub.s32 %s10, 1
      // Predicated region
      $region13: #{tpu_custom_call.1} parent=11 // pred_check
        %p140 = pneg %p57
      $region14: #{tpu_custom_call.1} parent=11 // pred_check_branch
        %142 = sbr.rel (%p140) target = $region16
      $region15: #{tpu_custom_call.1} parent=11 // pred_region
        _
      $region16: #{tpu_custom_call.1} parent=11 // pred_fallthru
        _
      // Predicated region
      $region17: #{tpu_custom_call.1} parent=11 // pred_check
        %p143 = pneg %p78
      $region18: #{tpu_custom_call.1} parent=11 // pred_check_branch
        %145 = sbr.rel (%p143) target = $region20
      $region19: #{tpu_custom_call.1} parent=11 // pred_region
        _
      $region20: #{tpu_custom_call.1} parent=11 // pred_fallthru
        _
      // Predicated region
      $region21: #{tpu_custom_call.1} parent=11 // pred_check
        %p146 = pneg %p99
      $region22: #{tpu_custom_call.1} parent=11 // pred_check_branch
        %148 = sbr.rel (%p146) target = $region24
      $region23: #{tpu_custom_call.1} parent=11 // pred_region
        _
      $region24: #{tpu_custom_call.1} parent=11 // pred_fallthru
        _
    $region12: #{tpu_custom_call.1} parent=5 // pred_fallthru
      _
    %p149 = scmp.lt.s32.totalorder %s10, 2
    // Predicated region
    $region25: #{tpu_custom_call.1} parent=5 // pred_check
      %p150 = pneg %p149
    $region26: #{tpu_custom_call.1} parent=5 // pred_check_branch
      %152 = sbr.rel (%p150) target = $region28
    $region27: #{tpu_custom_call.1} parent=5 // pred_region
      // Predicated region
      $region29: #{tpu_custom_call.1} parent=27 // pred_check
        %p153 = pneg %p30
      $region30: #{tpu_custom_call.1} parent=27 // pred_check_branch
        %155 = sbr.rel (%p153) target = $region32
      $region31: #{tpu_custom_call.1} parent=27 // pred_region
        %p156 = scmp.lt.s32.totalorder %s10, 1
        %s157 = scalar_select %p156, %s10, 1
        %s158 = smul.addr %s157, 36
        %s159 = smul.addr %s158, 8
        %s160 = scalar_lea.vmem %s0, %s159
      $region32: #{tpu_custom_call.1} parent=27 // pred_fallthru
        _
    $region28: #{tpu_custom_call.1} parent=5 // pred_fallthru
      _
    %p161 = scmp.le.s32.totalorder 1, %s10
    %p162 = scmp.lt.s32.totalorder %s10, 3
    %p163 = pnand %p161, %p162
    %p164 = pneg %p163
    // Predicated region
    $region33: #{tpu_custom_call.1} parent=5 // pred_check
      _
    $region34: #{tpu_custom_call.1} parent=5 // pred_check_branch
      %166 = sbr.rel (%p163) target = $region36
    $region35: #{tpu_custom_call.1} parent=5 // pred_region
      %s167 = ssub.s32 %s10, 1
      %p168 = scmp.lt.s32.totalorder %s15, 1
      %s169 = scalar_select %p168, %s15, 1
      %s170 = smul.addr %s169, 36
      %s171 = smul.addr %s170, 8
      %s172 = scalar_lea.vmem %s0, %s171
      %p173 = pneg %p36
      %p174 = pneg %p33
      %p175 = pneg %p57
      %p176 = pneg %p54
      %p177 = pneg %p78
      %p178 = pneg %p75
      %p179 = pneg %p99
      %p180 = pneg %p96
      %p181 = pneg %p125
      %p182 = pneg %p122
      %p183 = scmp.lt.s32.totalorder %s15, 1
      %s184 = scalar_select %p183, %s15, 1
      %s185 = smul.addr %s184, 36
      %s186 = smul.addr %s185, 8
      %s187 = scalar_lea.vmem %s4, %s186
      %p188 = scmp.lt.s32.totalorder %s15, 1
      %s189 = scalar_select %p188, %s15, 1
      %s190 = smul.addr %s189, 36
      %s191 = smul.addr %s190, 8
      %s192 = scalar_lea.vmem %s0, %s191
      %p193 = scmp.lt.s32.totalorder %s15, 1
      %s194 = scalar_select %p193, %s15, 1
      %s195 = smul.addr %s194, 36
      %s196 = smul.addr %s195, 8
      %s197 = scalar_lea.vmem %s4, %s196
      %vm199 = vcmask 23552
      %200 = vst.msk [vmem:[#allocation2] sm:$0xff] %vm199, 0.0
      %201 = vst.msk [vmem:[#allocation2 + $0x8] sm:$0xff] %vm199, 0.0
      %202 = vst.msk [vmem:[#allocation2 + $0x10] sm:$0xff] %vm199, 0.0
      %203 = vst.msk [vmem:[#allocation2 + $0x18] sm:$0xff] %vm199, 0.0
      %204 = vst.msk [vmem:[#allocation2 + $0x20] sm:$0xff] %vm199, 0.0
      %205 = vst.msk [vmem:[#allocation2 + $0x28] sm:$0xff] %vm199, 0.0
      %206 = vst.msk [vmem:[#allocation2 + $0x30] sm:$0xff] %vm199, 0.0
      %207 = vst.msk [vmem:[#allocation2 + $0x38] sm:$0xff] %vm199, 0.0
      %208 = vst.msk [vmem:[#allocation2 + $0x40] sm:$0xff] %vm199, 0.0
      %209 = vst.msk [vmem:[#allocation2 + $0x48] sm:$0xff] %vm199, 0.0
      %210 = vst.msk [vmem:[#allocation2 + $0x50] sm:$0xff] %vm199, 0.0
      %211 = vst.msk [vmem:[#allocation2 + $0x58] sm:$0xff] %vm199, 0.0
      %212 = vst.msk [vmem:[#allocation2 + $0x60] sm:$0xff] %vm199, 0.0
      %213 = vst.msk [vmem:[#allocation2 + $0x68] sm:$0xff] %vm199, 0.0
      %214 = vst.msk [vmem:[#allocation2 + $0x70] sm:$0xff] %vm199, 0.0
      %215 = vst.msk [vmem:[#allocation2 + $0x78] sm:$0xff] %vm199, 0.0
      %216 = vst.msk [vmem:[#allocation2 + $0x80] sm:$0xff] %vm199, 0.0
      %217 = vst.msk [vmem:[#allocation2 + $0x88] sm:$0xff] %vm199, 0.0
      %218 = vst.msk [vmem:[#allocation2 + $0x90] sm:$0xff] %vm199, 0.0
      %219 = vst.msk [vmem:[#allocation2 + $0x98] sm:$0xff] %vm199, 0.0
      %220 = vst.msk [vmem:[#allocation2 + $0xa0] sm:$0xff] %vm199, 0.0
      %221 = vst.msk [vmem:[#allocation2 + $0xa8] sm:$0xff] %vm199, 0.0
      %222 = vst.msk [vmem:[#allocation2 + $0xb0] sm:$0xff] %vm199, 0.0
      %223 = vst.msk [vmem:[#allocation2 + $0xb8] sm:$0xff] %vm199, 0.0
      %224 = vst.msk [vmem:[#allocation2 + $0xc0] sm:$0xff] %vm199, 0.0
      %225 = vst.msk [vmem:[#allocation2 + $0xc8] sm:$0xff] %vm199, 0.0
      %226 = vst.msk [vmem:[#allocation2 + $0xd0] sm:$0xff] %vm199, 0.0
      %227 = vst.msk [vmem:[#allocation2 + $0xd8] sm:$0xff] %vm199, 0.0
      %228 = vst.msk [vmem:[#allocation2 + $0xe0] sm:$0xff] %vm199, 0.0
      %229 = vst.msk [vmem:[#allocation2 + $0xe8] sm:$0xff] %vm199, 0.0
      %230 = vst.msk [vmem:[#allocation2 + $0xf0] sm:$0xff] %vm199, 0.0
      %231 = vst.msk [vmem:[#allocation2 + $0xf8] sm:$0xff] %vm199, 0.0
      %232 = vst.msk [vmem:[#allocation2 + $0x100] sm:$0xff] %vm199, 0.0
      %233 = vst.msk [vmem:[#allocation2 + $0x108] sm:$0xff] %vm199, 0.0
      %234 = vst.msk [vmem:[#allocation2 + $0x110] sm:$0xff] %vm199, 0.0
      %235 = vst.msk [vmem:[#allocation2 + $0x118] sm:$0xff] %vm199, 0.0
      %236 = vst.msk [vmem:[#allocation2 + $0x120] sm:$0xff] %vm199, 0.0
      %237 = vst.msk [vmem:[#allocation2 + $0x128] sm:$0xff] %vm199, 0.0
      %238 = vst.msk [vmem:[#allocation2 + $0x130] sm:$0xff] %vm199, 0.0
      %239 = vst.msk [vmem:[#allocation2 + $0x138] sm:$0xff] %vm199, 0.0
      %240 = vst.msk [vmem:[#allocation2 + $0x140] sm:$0xff] %vm199, 0.0
      %vm241 = vcmask 19456
      %242 = vst.msk [vmem:[#allocation2 + $0x148] sm:$0xf] %vm241, 0.0
      %v243 = vld [vmem:[%s192] sm:$0xff]
      %v244 = vld [vmem:[%s192 + $0x8] sm:$0xff]
      %v245 = vld [vmem:[%s192 + $0x10] sm:$0xff]
      %v246 = vld [vmem:[%s192 + $0x18] sm:$0xff]
      %v247 = vld [vmem:[%s192 + $0x20] sm:$0xff]
      %v248 = vld [vmem:[%s192 + $0x28] sm:$0xff]
      %v249 = vld [vmem:[%s192 + $0x30] sm:$0xff]
      %v250 = vld [vmem:[%s192 + $0x38] sm:$0xff]
      %v251 = vld [vmem:[%s192 + $0x40] sm:$0xff]
      %v252 = vld [vmem:[%s192 + $0x48] sm:$0xff]
      %v253 = vld [vmem:[%s192 + $0x50] sm:$0xff]
      %v254 = vld [vmem:[%s192 + $0x58] sm:$0xff]
      %v255 = vld [vmem:[%s192 + $0x60] sm:$0xff]
      %v256 = vld [vmem:[%s192 + $0x68] sm:$0xff]
      %v257 = vld [vmem:[%s192 + $0x70] sm:$0xff]
      %v258 = vld [vmem:[%s192 + $0x78] sm:$0xff]
      %v259 = vld [vmem:[%s192 + $0x80] sm:$0xff]
      %v260 = vld [vmem:[%s192 + $0x88] sm:$0xff]
      %v261 = vld [vmem:[%s192 + $0x90] sm:$0xff]
      %v262 = vld [vmem:[%s192 + $0x98] sm:$0xff]
      %v263 = vld [vmem:[%s192 + $0xa0] sm:$0xff]
      %v264 = vld [vmem:[%s192 + $0xa8] sm:$0xff]
      %v265 = vld [vmem:[%s192 + $0xb0] sm:$0xff]
      %v266 = vld [vmem:[%s192 + $0xb8] sm:$0xff]
      %v267 = vld [vmem:[%s192 + $0xc0] sm:$0xff]
      %v268 = vld [vmem:[%s192 + $0xc8] sm:$0xff]
      %v269 = vld [vmem:[%s192 + $0xd0] sm:$0xff]
      %v270 = vld [vmem:[%s192 + $0xd8] sm:$0xff]
      %v271 = vld [vmem:[%s192 + $0xe0] sm:$0xff]
      %v272 = vld [vmem:[%s192 + $0xe8] sm:$0xff]
      %v273 = vld [vmem:[%s192 + $0xf0] sm:$0xff]
      %v274 = vld [vmem:[%s192 + $0xf8] sm:$0xff]
      %v275 = vld [vmem:[%s192 + $0x100] sm:$0xff]
      %v276 = vld [vmem:[%s192 + $0x108] sm:$0xff]
      %v277 = vld [vmem:[%s192 + $0x110] sm:$0xff]
      %v278 = vld [vmem:[%s192 + $0x118] sm:$0xff]
      %279 = vst.msk [vmem:[#allocation2 + $0x13] sm:$0xff] %vm199, %v243
      %280 = vst.msk [vmem:[#allocation2 + $0x1b] sm:$0xff] %vm199, %v244
      %281 = vst.msk [vmem:[#allocation2 + $0x23] sm:$0xff] %vm199, %v245
      %282 = vst.msk [vmem:[#allocation2 + $0x2b] sm:$0xff] %vm199, %v246
      %283 = vst.msk [vmem:[#allocation2 + $0x33] sm:$0xff] %vm199, %v247
      %284 = vst.msk [vmem:[#allocation2 + $0x3b] sm:$0xff] %vm199, %v248
      %285 = vst.msk [vmem:[#allocation2 + $0x43] sm:$0xff] %vm199, %v249
      %286 = vst.msk [vmem:[#allocation2 + $0x4b] sm:$0xff] %vm199, %v250
      %287 = vst.msk [vmem:[#allocation2 + $0x53] sm:$0xff] %vm199, %v251
      %288 = vst.msk [vmem:[#allocation2 + $0x5b] sm:$0xff] %vm199, %v252
      %289 = vst.msk [vmem:[#allocation2 + $0x63] sm:$0xff] %vm199, %v253
      %290 = vst.msk [vmem:[#allocation2 + $0x6b] sm:$0xff] %vm199, %v254
      %291 = vst.msk [vmem:[#allocation2 + $0x73] sm:$0xff] %vm199, %v255
      %292 = vst.msk [vmem:[#allocation2 + $0x7b] sm:$0xff] %vm199, %v256
      %293 = vst.msk [vmem:[#allocation2 + $0x83] sm:$0xff] %vm199, %v257
      %294 = vst.msk [vmem:[#allocation2 + $0x8b] sm:$0xff] %vm199, %v258
      %295 = vst.msk [vmem:[#allocation2 + $0x93] sm:$0xff] %vm199, %v259
      %296 = vst.msk [vmem:[#allocation2 + $0x9b] sm:$0xff] %vm199, %v260
      %297 = vst.msk [vmem:[#allocation2 + $0xa3] sm:$0xff] %vm199, %v261
      %298 = vst.msk [vmem:[#allocation2 + $0xab] sm:$0xff] %vm199, %v262
      %299 = vst.msk [vmem:[#allocation2 + $0xb3] sm:$0xff] %vm199, %v263
      %300 = vst.msk [vmem:[#allocation2 + $0xbb] sm:$0xff] %vm199, %v264
      %301 = vst.msk [vmem:[#allocation2 + $0xc3] sm:$0xff] %vm199, %v265
      %302 = vst.msk [vmem:[#allocation2 + $0xcb] sm:$0xff] %vm199, %v266
      %303 = vst.msk [vmem:[#allocation2 + $0xd3] sm:$0xff] %vm199, %v267
      %304 = vst.msk [vmem:[#allocation2 + $0xdb] sm:$0xff] %vm199, %v268
      %305 = vst.msk [vmem:[#allocation2 + $0xe3] sm:$0xff] %vm199, %v269
      %306 = vst.msk [vmem:[#allocation2 + $0xeb] sm:$0xff] %vm199, %v270
      %307 = vst.msk [vmem:[#allocation2 + $0xf3] sm:$0xff] %vm199, %v271
      %308 = vst.msk [vmem:[#allocation2 + $0xfb] sm:$0xff] %vm199, %v272
      %309 = vst.msk [vmem:[#allocation2 + $0x103] sm:$0xff] %vm199, %v273
      %310 = vst.msk [vmem:[#allocation2 + $0x10b] sm:$0xff] %vm199, %v274
      %311 = vst.msk [vmem:[#allocation2 + $0x113] sm:$0xff] %vm199, %v275
      %312 = vst.msk [vmem:[#allocation2 + $0x11b] sm:$0xff] %vm199, %v276
      %313 = vst.msk [vmem:[#allocation2 + $0x123] sm:$0xff] %vm199, %v277
      %314 = vst.msk [vmem:[#allocation2 + $0x12b] sm:$0xff] %vm199, %v278
      %v315 = vld [vmem:[#allocation2] sm:$0xff]
      %v316 = vld [vmem:[#allocation2 + $0x8] sm:$0xff]
      %v317 = vld [vmem:[#allocation2 + $0x10] sm:$0xff]
      %v318 = vld [vmem:[#allocation2 + $0x18] sm:$0xff]
      %v319 = vld [vmem:[#allocation2 + $0x20] sm:$0xff]
      %v320 = vld [vmem:[#allocation2 + $0x28] sm:$0xff]
      %v321 = vld [vmem:[#allocation2 + $0x30] sm:$0xff]
      %v322 = vld [vmem:[#allocation2 + $0x38] sm:$0xff]
      %v323 = vld [vmem:[#allocation2 + $0x40] sm:$0xff]
      %v324 = vld [vmem:[#allocation2 + $0x48] sm:$0xff]
      %v325 = vld [vmem:[#allocation2 + $0x50] sm:$0xff]
      %v326 = vld [vmem:[#allocation2 + $0x58] sm:$0xff]
      %v327 = vld [vmem:[#allocation2 + $0x60] sm:$0xff]
      %v328 = vld [vmem:[#allocation2 + $0x68] sm:$0xff]
      %v329 = vld [vmem:[#allocation2 + $0x70] sm:$0xff]
      %v330 = vld [vmem:[#allocation2 + $0x78] sm:$0xff]
      %v331 = vld [vmem:[#allocation2 + $0x80] sm:$0xff]
      %v332 = vld [vmem:[#allocation2 + $0x88] sm:$0xff]
      %v333 = vld [vmem:[#allocation2 + $0x90] sm:$0xff]
      %v334 = vld [vmem:[#allocation2 + $0x98] sm:$0xff]
      %v335 = vld [vmem:[#allocation2 + $0xa0] sm:$0xff]
      %v336 = vld [vmem:[#allocation2 + $0xa8] sm:$0xff]
      %v337 = vld [vmem:[#allocation2 + $0xb0] sm:$0xff]
      %v338 = vld [vmem:[#allocation2 + $0xb8] sm:$0xff]
      %v339 = vld [vmem:[#allocation2 + $0xc0] sm:$0xff]
      %v340 = vld [vmem:[#allocation2 + $0xc8] sm:$0xff]
      %v341 = vld [vmem:[#allocation2 + $0xd0] sm:$0xff]
      %v342 = vld [vmem:[#allocation2 + $0xd8] sm:$0xff]
      %v343 = vld [vmem:[#allocation2 + $0xe0] sm:$0xff]
      %v344 = vld [vmem:[#allocation2 + $0xe8] sm:$0xff]
      %v345 = vld [vmem:[#allocation2 + $0xf0] sm:$0xff]
      %v346 = vld [vmem:[#allocation2 + $0xf8] sm:$0xff]
      %v347 = vld [vmem:[#allocation2 + $0x100] sm:$0xff]
      %v348 = vld [vmem:[#allocation2 + $0x108] sm:$0xff]
      %v349 = vld [vmem:[#allocation2 + $0x110] sm:$0xff]
      %v350 = vld [vmem:[#allocation2 + $0x118] sm:$0xff]
      %v351 = vpack.c.bf16 %v316, %v315
      %v352 = vpack.c.bf16 %v318, %v317
      %v353 = vpack.c.bf16 %v320, %v319
      %v354 = vpack.c.bf16 %v322, %v321
      %v355 = vpack.c.bf16 %v324, %v323
      %v356 = vpack.c.bf16 %v326, %v325
      %v357 = vpack.c.bf16 %v328, %v327
      %v358 = vpack.c.bf16 %v330, %v329
      %v359 = vpack.c.bf16 %v332, %v331
      %v360 = vpack.c.bf16 %v334, %v333
      %v361 = vpack.c.bf16 %v336, %v335
      %v362 = vpack.c.bf16 %v338, %v337
      %v363 = vpack.c.bf16 %v340, %v339
      %v364 = vpack.c.bf16 %v342, %v341
      %v365 = vpack.c.bf16 %v344, %v343
      %v366 = vpack.c.bf16 %v346, %v345
      %v367 = vpack.c.bf16 %v348, %v347
      %v368 = vpack.c.bf16 %v350, %v349
      %v369 = vld [vmem:[%s1] sm:$0x7]
      %v370 = vpack.c.bf16 %v369, %v369
      %v371 = vld [vmem:[#allocation2 + $0x1] sm:$0xff]
      %v372 = vld [vmem:[#allocation2 + $0x9] sm:$0xff]
      %v373 = vld [vmem:[#allocation2 + $0x11] sm:$0xff]
      %v374 = vld [vmem:[#allocation2 + $0x19] sm:$0xff]
      %v375 = vld [vmem:[#allocation2 + $0x21] sm:$0xff]
      %v376 = vld [vmem:[#allocation2 + $0x29] sm:$0xff]
      %v377 = vld [vmem:[#allocation2 + $0x31] sm:$0xff]
      %v378 = vld [vmem:[#allocation2 + $0x39] sm:$0xff]
      %v379 = vld [vmem:[#allocation2 + $0x41] sm:$0xff]
      %v380 = vld [vmem:[#allocation2 + $0x49] sm:$0xff]
      %v381 = vld [vmem:[#allocation2 + $0x51] sm:$0xff]
      %v382 = vld [vmem:[#allocation2 + $0x59] sm:$0xff]
      %v383 = vld [vmem:[#allocation2 + $0x61] sm:$0xff]
      %v384 = vld [vmem:[#allocation2 + $0x69] sm:$0xff]
      %v385 = vld [vmem:[#allocation2 + $0x71] sm:$0xff]
      %v386 = vld [vmem:[#allocation2 + $0x79] sm:$0xff]
      %v387 = vld [vmem:[#allocation2 + $0x81] sm:$0xff]
      %v388 = vld [vmem:[#allocation2 + $0x89] sm:$0xff]
      %v389 = vld [vmem:[#allocation2 + $0x91] sm:$0xff]
      %v390 = vld [vmem:[#allocation2 + $0x99] sm:$0xff]
      %v391 = vld [vmem:[#allocation2 + $0xa1] sm:$0xff]
      %v392 = vld [vmem:[#allocation2 + $0xa9] sm:$0xff]
      %v393 = vld [vmem:[#allocation2 + $0xb1] sm:$0xff]
      %v394 = vld [vmem:[#allocation2 + $0xb9] sm:$0xff]
      %v395 = vld [vmem:[#allocation2 + $0xc1] sm:$0xff]
      %v396 = vld [vmem:[#allocation2 + $0xc9] sm:$0xff]
      %v397 = vld [vmem:[#allocation2 + $0xd1] sm:$0xff]
      %v398 = vld [vmem:[#allocation2 + $0xd9] sm:$0xff]
      %v399 = vld [vmem:[#allocation2 + $0xe1] sm:$0xff]
      %v400 = vld [vmem:[#allocation2 + $0xe9] sm:$0xff]
      %v401 = vld [vmem:[#allocation2 + $0xf1] sm:$0xff]
      %v402 = vld [vmem:[#allocation2 + $0xf9] sm:$0xff]
      %v403 = vld [vmem:[#allocation2 + $0x101] sm:$0xff]
      %v404 = vld [vmem:[#allocation2 + $0x109] sm:$0xff]
      %v405 = vld [vmem:[#allocation2 + $0x111] sm:$0xff]
      %v406 = vld [vmem:[#allocation2 + $0x119] sm:$0xff]
      %v407 = vpack.c.bf16 %v372, %v371
      %v408 = vpack.c.bf16 %v374, %v373
      %v409 = vpack.c.bf16 %v376, %v375
      %v410 = vpack.c.bf16 %v378, %v377
      %v411 = vpack.c.bf16 %v380, %v379
      %v412 = vpack.c.bf16 %v382, %v381
      %v413 = vpack.c.bf16 %v384, %v383
      %v414 = vpack.c.bf16 %v386, %v385
      %v415 = vpack.c.bf16 %v388, %v387
      %v416 = vpack.c.bf16 %v390, %v389
      %v417 = vpack.c.bf16 %v392, %v391
      %v418 = vpack.c.bf16 %v394, %v393
      %v419 = vpack.c.bf16 %v396, %v395
      %v420 = vpack.c.bf16 %v398, %v397
      %v421 = vpack.c.bf16 %v400, %v399
      %v422 = vpack.c.bf16 %v402, %v401
      %v423 = vpack.c.bf16 %v404, %v403
      %v424 = vpack.c.bf16 %v406, %v405
      %v425 = vld [vmem:[%s1 + $0x3] sm:$0x7]
      %v426 = vpack.c.bf16 %v425, %v425
      %v428 = vsel %vm199, %v407, 0
      %v431 = vsel %vm199, %v408, 0
      %v434 = vsel %vm199, %v409, 0
      %v437 = vsel %vm199, %v410, 0
      %v440 = vsel %vm199, %v411, 0
      %v443 = vsel %vm199, %v412, 0
      %v446 = vsel %vm199, %v413, 0
      %v449 = vsel %vm199, %v414, 0
      %v452 = vsel %vm199, %v415, 0
      %v455 = vsel %vm199, %v416, 0
      %v458 = vsel %vm199, %v417, 0
      %v461 = vsel %vm199, %v418, 0
      %v464 = vsel %vm199, %v419, 0
      %v467 = vsel %vm199, %v420, 0
      %v470 = vsel %vm199, %v421, 0
      %v473 = vsel %vm199, %v422, 0
      %v476 = vsel %vm199, %v423, 0
      %v479 = vsel %vm199, %v424, 0
      %vm481 = vcmask 1040384
      %vm482 = vcmask 1041408
      %v483 = vsel %vm481, 4294967295, 65535
      %v484 = vsel %vm482, %v483, 0
      %v486 = vand.u32 %v426, %v484
      %488 = vmatprep.subr.bf16.mxu0 0
      %489 = vmatpush1.bf16.msra.mxu0 0
      %490 = vmatprep.subr.bf16.mxu0 0
      %491 = vmatpush1.bf16.msra.mxu0 0
      %492 = vmatprep.subr.bf16.mxu0 0
      %493 = vmatpush1.bf16.msra.mxu0 0
      %494 = vmatprep.subr.bf16.mxu0 0
      %495 = vmatpush1.bf16.msra.mxu0 0
      %496 = vmatprep.subr.bf16.mxu0 0
      %497 = vmatpush1.bf16.msra.mxu0 0
      %498 = vmatprep.subr.bf16.mxu0 0
      %499 = vmatpush1.bf16.msra.mxu0 0
      %500 = vmatprep.subr.bf16.mxu0 0
      %501 = vmatpush1.bf16.msra.mxu0 0
      %502 = vmatprep.subr.bf16.mxu0 0
      %503 = vmatpush1.bf16.msra.mxu0 %v486
      %504 = vmatprep.subr.bf16.mxu0 0
      %505 = vmatpush2.bf16.msra.mxu0 0
      %506 = vmatprep.subr.bf16.mxu0 0
      %507 = vmatpush2.bf16.msra.mxu0 0
      %508 = vmatprep.subr.bf16.mxu0 0
      %509 = vmatpush2.bf16.msra.mxu0 0
      %510 = vmatprep.subr.bf16.mxu0 0
      %511 = vmatpush2.bf16.msra.mxu0 0
      %512 = vmatprep.subr.bf16.mxu0 0
      %513 = vmatpush2.bf16.msra.mxu0 0
      %514 = vmatprep.subr.bf16.mxu0 0
      %515 = vmatpush2.bf16.msra.mxu0 0
      %516 = vmatprep.subr.bf16.mxu0 0
      %517 = vmatpush2.bf16.msra.mxu0 0
      %518 = vmatprep.subr.bf16.mxu0 0
      %519 = vmatpush2.bf16.msra.mxu0 0
      %520 = vmatprep.mubr.bf16.mxu0 0
      %521 = vmatmul.mubr.bf16.gmra.mxu0 %v428
      %v522 = vpop.f32.mrf.mxu0
      %v523 = vadd.f32 0.0, %v522
      %v524 = vpop.f32.mrf.mxu0
      %v525 = vpop.f32.mrf.mxu0
      %v526 = vadd.f32 0.0, %v525
      %v527 = vpop.f32.mrf.mxu0
      %528 = vmatprep.mubr.bf16.mxu0 0
      %529 = vmatmul.mubr.bf16.gmra.mxu0 %v431
      %v530 = vpop.f32.mrf.mxu0
      %v531 = vadd.f32 0.0, %v530
      %v532 = vpop.f32.mrf.mxu0
      %v533 = vpop.f32.mrf.mxu0
      %v534 = vadd.f32 0.0, %v533
      %v535 = vpop.f32.mrf.mxu0
      %536 = vmatprep.mubr.bf16.mxu0 0
      %537 = vmatmul.mubr.bf16.gmra.mxu0 %v434
      %v538 = vpop.f32.mrf.mxu0
      %v539 = vadd.f32 0.0, %v538
      %v540 = vpop.f32.mrf.mxu0
      %v541 = vpop.f32.mrf.mxu0
      %v542 = vadd.f32 0.0, %v541
      %v543 = vpop.f32.mrf.mxu0
      %544 = vmatprep.mubr.bf16.mxu0 0
      %545 = vmatmul.mubr.bf16.gmra.mxu0 %v437
      %v546 = vpop.f32.mrf.mxu0
      %v547 = vadd.f32 0.0, %v546
      %v548 = vpop.f32.mrf.mxu0
      %v549 = vpop.f32.mrf.mxu0
      %v550 = vadd.f32 0.0, %v549
      %v551 = vpop.f32.mrf.mxu0
      %552 = vmatprep.mubr.bf16.mxu0 0
      %553 = vmatmul.mubr.bf16.gmra.mxu0 %v440
      %v554 = vpop.f32.mrf.mxu0
      %v555 = vadd.f32 0.0, %v554
      %v556 = vpop.f32.mrf.mxu0
      %v557 = vpop.f32.mrf.mxu0
      %v558 = vadd.f32 0.0, %v557
      %v559 = vpop.f32.mrf.mxu0
      %560 = vmatprep.mubr.bf16.mxu0 0
      %561 = vmatmul.mubr.bf16.gmra.mxu0 %v443
      %v562 = vpop.f32.mrf.mxu0
      %v563 = vadd.f32 0.0, %v562
      %v564 = vpop.f32.mrf.mxu0
      %v565 = vpop.f32.mrf.mxu0
      %v566 = vadd.f32 0.0, %v565
      %v567 = vpop.f32.mrf.mxu0
      %568 = vmatprep.mubr.bf16.mxu0 0
      %569 = vmatmul.mubr.bf16.gmra.mxu0 %v446
      %v570 = vpop.f32.mrf.mxu0
      %v571 = vadd.f32 0.0, %v570
      %v572 = vpop.f32.mrf.mxu0
      %v573 = vpop.f32.mrf.mxu0
      %v574 = vadd.f32 0.0, %v573
      %v575 = vpop.f32.mrf.mxu0
      %576 = vmatprep.mubr.bf16.mxu0 0
      %577 = vmatmul.mubr.bf16.gmra.mxu0 %v449
      %v578 = vpop.f32.mrf.mxu0
      %v579 = vadd.f32 0.0, %v578
      %v580 = vpop.f32.mrf.mxu0
      %v581 = vpop.f32.mrf.mxu0
      %v582 = vadd.f32 0.0, %v581
      %v583 = vpop.f32.mrf.mxu0
      %584 = vmatprep.mubr.bf16.mxu0 0
      %585 = vmatmul.mubr.bf16.gmra.mxu0 %v452
      %v586 = vpop.f32.mrf.mxu0
      %v587 = vadd.f32 0.0, %v586
      %v588 = vpop.f32.mrf.mxu0
      %v589 = vpop.f32.mrf.mxu0
      %v590 = vadd.f32 0.0, %v589
      %v591 = vpop.f32.mrf.mxu0
      %592 = vmatprep.mubr.bf16.mxu0 0
      %593 = vmatmul.mubr.bf16.gmra.mxu0 %v455
      %v594 = vpop.f32.mrf.mxu0
      %v595 = vadd.f32 0.0, %v594
      %v596 = vpop.f32.mrf.mxu0
      %v597 = vpop.f32.mrf.mxu0
      %v598 = vadd.f32 0.0, %v597
      %v599 = vpop.f32.mrf.mxu0
      %600 = vmatprep.mubr.bf16.mxu0 0
      %601 = vmatmul.mubr.bf16.gmra.mxu0 %v458
      %v602 = vpop.f32.mrf.mxu0
      %v603 = vadd.f32 0.0, %v602
      %v604 = vpop.f32.mrf.mxu0
      %v605 = vpop.f32.mrf.mxu0
      %v606 = vadd.f32 0.0, %v605
      %v607 = vpop.f32.mrf.mxu0
      %608 = vmatprep.mubr.bf16.mxu0 0
      %609 = vmatmul.mubr.bf16.gmra.mxu0 %v461
      %v610 = vpop.f32.mrf.mxu0
      %v611 = vadd.f32 0.0, %v610
      %v612 = vpop.f32.mrf.mxu0
      %v613 = vpop.f32.mrf.mxu0
      %v614 = vadd.f32 0.0, %v613
      %v615 = vpop.f32.mrf.mxu0
      %616 = vmatprep.mubr.bf16.mxu0 0
      %617 = vmatmul.mubr.bf16.gmra.mxu0 %v464
      %v618 = vpop.f32.mrf.mxu0
      %v619 = vadd.f32 0.0, %v618
      %v620 = vpop.f32.mrf.mxu0
      %v621 = vpop.f32.mrf.mxu0
      %v622 = vadd.f32 0.0, %v621
      %v623 = vpop.f32.mrf.mxu0
      %624 = vmatprep.mubr.bf16.mxu0 0
      %625 = vmatmul.mubr.bf16.gmra.mxu0 %v467
      %v626 = vpop.f32.mrf.mxu0
      %v627 = vadd.f32 0.0, %v626
      %v628 = vpop.f32.mrf.mxu0
      %v629 = vpop.f32.mrf.mxu0
      %v630 = vadd.f32 0.0, %v629
      %v631 = vpop.f32.mrf.mxu0
      %632 = vmatprep.mubr.bf16.mxu0 0
      %633 = vmatmul.mubr.bf16.gmra.mxu0 %v470
      %v634 = vpop.f32.mrf.mxu0
      %v635 = vadd.f32 0.0, %v634
      %v636 = vpop.f32.mrf.mxu0
      %v637 = vpop.f32.mrf.mxu0
      %v638 = vadd.f32 0.0, %v637
      %v639 = vpop.f32.mrf.mxu0
      %640 = vmatprep.mubr.bf16.mxu0 0
      %641 = vmatmul.mubr.bf16.gmra.mxu0 %v473
      %v642 = vpop.f32.mrf.mxu0
      %v643 = vadd.f32 0.0, %v642
      %v644 = vpop.f32.mrf.mxu0
      %v645 = vpop.f32.mrf.mxu0
      %v646 = vadd.f32 0.0, %v645
      %v647 = vpop.f32.mrf.mxu0
      %648 = vmatprep.mubr.bf16.mxu0 0
      %649 = vmatmul.mubr.bf16.gmra.mxu0 %v476
      %v650 = vpop.f32.mrf.mxu0
      %v651 = vadd.f32 0.0, %v650
      %v652 = vpop.f32.mrf.mxu0
      %v653 = vpop.f32.mrf.mxu0
      %v654 = vadd.f32 0.0, %v653
      %v655 = vpop.f32.mrf.mxu0
      %656 = vmatprep.mubr.bf16.mxu0 0
      %657 = vmatmul.mubr.bf16.gmra.mxu0 %v479
      %v658 = vpop.f32.mrf.mxu0
      %v659 = vadd.f32 0.0, %v658
      %v660 = vpop.f32.mrf.mxu0
      %v661 = vpop.f32.mrf.mxu0
      %v662 = vadd.f32 0.0, %v661
      %v663 = vpop.f32.mrf.mxu0
      %664 = vdwg.mxu0
      %v666 = vsel %vm199, %v351, 0
      %v669 = vsel %vm199, %v352, 0
      %v672 = vsel %vm199, %v353, 0
      %v675 = vsel %vm199, %v354, 0
      %v678 = vsel %vm199, %v355, 0
      %v681 = vsel %vm199, %v356, 0
      %v684 = vsel %vm199, %v357, 0
      %v687 = vsel %vm199, %v358, 0
      %v690 = vsel %vm199, %v359, 0
      %v693 = vsel %vm199, %v360, 0
      %v696 = vsel %vm199, %v361, 0
      %v699 = vsel %vm199, %v362, 0
      %v702 = vsel %vm199, %v363, 0
      %v705 = vsel %vm199, %v364, 0
      %v708 = vsel %vm199, %v365, 0
      %v711 = vsel %vm199, %v366, 0
      %v714 = vsel %vm199, %v367, 0
      %v717 = vsel %vm199, %v368, 0
      %v720 = vand.u32 %v370, %v484
      %722 = vmatprep.subr.bf16.mxu0 0
      %723 = vmatpush1.bf16.msra.mxu0 0
      %724 = vmatprep.subr.bf16.mxu0 0
      %725 = vmatpush1.bf16.msra.mxu0 0
      %726 = vmatprep.subr.bf16.mxu0 0
      %727 = vmatpush1.bf16.msra.mxu0 0
      %728 = vmatprep.subr.bf16.mxu0 0
      %729 = vmatpush1.bf16.msra.mxu0 0
      %730 = vmatprep.subr.bf16.mxu0 0
      %731 = vmatpush1.bf16.msra.mxu0 0
      %732 = vmatprep.subr.bf16.mxu0 0
      %733 = vmatpush1.bf16.msra.mxu0 0
      %734 = vmatprep.subr.bf16.mxu0 0
      %735 = vmatpush1.bf16.msra.mxu0 0
      %736 = vmatprep.subr.bf16.mxu0 0
      %737 = vmatpush1.bf16.msra.mxu0 %v720
      %738 = vmatprep.subr.bf16.mxu0 0
      %739 = vmatpush2.bf16.msra.mxu0 0
      %740 = vmatprep.subr.bf16.mxu0 0
      %741 = vmatpush2.bf16.msra.mxu0 0
      %742 = vmatprep.subr.bf16.mxu0 0
      %743 = vmatpush2.bf16.msra.mxu0 0
      %744 = vmatprep.subr.bf16.mxu0 0
      %745 = vmatpush2.bf16.msra.mxu0 0
      %746 = vmatprep.subr.bf16.mxu0 0
      %747 = vmatpush2.bf16.msra.mxu0 0
      %748 = vmatprep.subr.bf16.mxu0 0
      %749 = vmatpush2.bf16.msra.mxu0 0
      %750 = vmatprep.subr.bf16.mxu0 0
      %751 = vmatpush2.bf16.msra.mxu0 0
      %752 = vmatprep.subr.bf16.mxu0 0
      %753 = vmatpush2.bf16.msra.mxu0 0
      %754 = vmatprep.mubr.bf16.mxu0 0
      %755 = vmatmul.mubr.bf16.gmra.mxu0 %v666
      %v756 = vpop.f32.mrf.mxu0
      %v757 = vadd.f32 %v523, %v756
      %v758 = vpop.f32.mrf.mxu0
      %v759 = vpop.f32.mrf.mxu0
      %v760 = vadd.f32 %v526, %v759
      %v761 = vpop.f32.mrf.mxu0
      %762 = vmatprep.mubr.bf16.mxu0 0
      %763 = vmatmul.mubr.bf16.gmra.mxu0 %v669
      %v764 = vpop.f32.mrf.mxu0
      %v765 = vadd.f32 %v531, %v764
      %v766 = vpop.f32.mrf.mxu0
      %v767 = vpop.f32.mrf.mxu0
      %v768 = vadd.f32 %v534, %v767
      %v769 = vpop.f32.mrf.mxu0
      %770 = vmatprep.mubr.bf16.mxu0 0
      %771 = vmatmul.mubr.bf16.gmra.mxu0 %v672
      %v772 = vpop.f32.mrf.mxu0
      %v773 = vadd.f32 %v539, %v772
      %v774 = vpop.f32.mrf.mxu0
      %v775 = vpop.f32.mrf.mxu0
      %v776 = vadd.f32 %v542, %v775
      %v777 = vpop.f32.mrf.mxu0
      %778 = vmatprep.mubr.bf16.mxu0 0
      %779 = vmatmul.mubr.bf16.gmra.mxu0 %v675
      %v780 = vpop.f32.mrf.mxu0
      %v781 = vadd.f32 %v547, %v780
      %v782 = vpop.f32.mrf.mxu0
      %v783 = vpop.f32.mrf.mxu0
      %v784 = vadd.f32 %v550, %v783
      %v785 = vpop.f32.mrf.mxu0
      %786 = vmatprep.mubr.bf16.mxu0 0
      %787 = vmatmul.mubr.bf16.gmra.mxu0 %v678
      %v788 = vpop.f32.mrf.mxu0
      %v789 = vadd.f32 %v555, %v788
      %v790 = vpop.f32.mrf.mxu0
      %v791 = vpop.f32.mrf.mxu0
      %v792 = vadd.f32 %v558, %v791
      %v793 = vpop.f32.mrf.mxu0
      %794 = vmatprep.mubr.bf16.mxu0 0
      %795 = vmatmul.mubr.bf16.gmra.mxu0 %v681
      %v796 = vpop.f32.mrf.mxu0
      %v797 = vadd.f32 %v563, %v796
      %v798 = vpop.f32.mrf.mxu0
      %v799 = vpop.f32.mrf.mxu0
      %v800 = vadd.f32 %v566, %v799
      %v801 = vpop.f32.mrf.mxu0
      %802 = vmatprep.mubr.bf16.mxu0 0
      %803 = vmatmul.mubr.bf16.gmra.mxu0 %v684
      %v804 = vpop.f32.mrf.mxu0
      %v805 = vadd.f32 %v571, %v804
      %v806 = vpop.f32.mrf.mxu0
      %v807 = vpop.f32.mrf.mxu0
      %v808 = vadd.f32 %v574, %v807
      %v809 = vpop.f32.mrf.mxu0
      %810 = vmatprep.mubr.bf16.mxu0 0
      %811 = vmatmul.mubr.bf16.gmra.mxu0 %v687
      %v812 = vpop.f32.mrf.mxu0
      %v813 = vadd.f32 %v579, %v812
      %v814 = vpop.f32.mrf.mxu0
      %v815 = vpop.f32.mrf.mxu0
      %v816 = vadd.f32 %v582, %v815
      %v817 = vpop.f32.mrf.mxu0
      %818 = vmatprep.mubr.bf16.mxu0 0
      %819 = vmatmul.mubr.bf16.gmra.mxu0 %v690
      %v820 = vpop.f32.mrf.mxu0
      %v821 = vadd.f32 %v587, %v820
      %v822 = vpop.f32.mrf.mxu0
      %v823 = vpop.f32.mrf.mxu0
      %v824 = vadd.f32 %v590, %v823
      %v825 = vpop.f32.mrf.mxu0
      %826 = vmatprep.mubr.bf16.mxu0 0
      %827 = vmatmul.mubr.bf16.gmra.mxu0 %v693
      %v828 = vpop.f32.mrf.mxu0
      %v829 = vadd.f32 %v595, %v828
      %v830 = vpop.f32.mrf.mxu0
      %v831 = vpop.f32.mrf.mxu0
      %v832 = vadd.f32 %v598, %v831
      %v833 = vpop.f32.mrf.mxu0
      %834 = vmatprep.mubr.bf16.mxu0 0
      %835 = vmatmul.mubr.bf16.gmra.mxu0 %v696
      %v836 = vpop.f32.mrf.mxu0
      %v837 = vadd.f32 %v603, %v836
      %v838 = vpop.f32.mrf.mxu0
      %v839 = vpop.f32.mrf.mxu0
      %v840 = vadd.f32 %v606, %v839
      %v841 = vpop.f32.mrf.mxu0
      %842 = vmatprep.mubr.bf16.mxu0 0
      %843 = vmatmul.mubr.bf16.gmra.mxu0 %v699
      %v844 = vpop.f32.mrf.mxu0
      %v845 = vadd.f32 %v611, %v844
      %v846 = vpop.f32.mrf.mxu0
      %v847 = vpop.f32.mrf.mxu0
      %v848 = vadd.f32 %v614, %v847
      %v849 = vpop.f32.mrf.mxu0
      %850 = vmatprep.mubr.bf16.mxu0 0
      %851 = vmatmul.mubr.bf16.gmra.mxu0 %v702
      %v852 = vpop.f32.mrf.mxu0
      %v853 = vadd.f32 %v619, %v852
      %v854 = vpop.f32.mrf.mxu0
      %v855 = vpop.f32.mrf.mxu0
      %v856 = vadd.f32 %v622, %v855
      %v857 = vpop.f32.mrf.mxu0
      %858 = vmatprep.mubr.bf16.mxu0 0
      %859 = vmatmul.mubr.bf16.gmra.mxu0 %v705
      %v860 = vpop.f32.mrf.mxu0
      %v861 = vadd.f32 %v627, %v860
      %v862 = vpop.f32.mrf.mxu0
      %v863 = vpop.f32.mrf.mxu0
      %v864 = vadd.f32 %v630, %v863
      %v865 = vpop.f32.mrf.mxu0
      %866 = vmatprep.mubr.bf16.mxu0 0
      %867 = vmatmul.mubr.bf16.gmra.mxu0 %v708
      %v868 = vpop.f32.mrf.mxu0
      %v869 = vadd.f32 %v635, %v868
      %v870 = vpop.f32.mrf.mxu0
      %v871 = vpop.f32.mrf.mxu0
      %v872 = vadd.f32 %v638, %v871
      %v873 = vpop.f32.mrf.mxu0
      %874 = vmatprep.mubr.bf16.mxu0 0
      %875 = vmatmul.mubr.bf16.gmra.mxu0 %v711
      %v876 = vpop.f32.mrf.mxu0
      %v877 = vadd.f32 %v643, %v876
      %v878 = vpop.f32.mrf.mxu0
      %v879 = vpop.f32.mrf.mxu0
      %v880 = vadd.f32 %v646, %v879
      %v881 = vpop.f32.mrf.mxu0
      %882 = vmatprep.mubr.bf16.mxu0 0
      %883 = vmatmul.mubr.bf16.gmra.mxu0 %v714
      %v884 = vpop.f32.mrf.mxu0
      %v885 = vadd.f32 %v651, %v884
      %v886 = vpop.f32.mrf.mxu0
      %v887 = vpop.f32.mrf.mxu0
      %v888 = vadd.f32 %v654, %v887
      %v889 = vpop.f32.mrf.mxu0
      %890 = vmatprep.mubr.bf16.mxu0 0
      %891 = vmatmul.mubr.bf16.gmra.mxu0 %v717
      %v892 = vpop.f32.mrf.mxu0
      %v893 = vadd.f32 %v659, %v892
      %v894 = vpop.f32.mrf.mxu0
      %v895 = vpop.f32.mrf.mxu0
      %v896 = vadd.f32 %v662, %v895
      %v897 = vpop.f32.mrf.mxu0
      %898 = vdwg.mxu0
      %v899 = vld [vmem:[#allocation2 + $0x2] sm:$0xff]
      %v900 = vld [vmem:[#allocation2 + $0xa] sm:$0xff]
      %v901 = vld [vmem:[#allocation2 + $0x12] sm:$0xff]
      %v902 = vld [vmem:[#allocation2 + $0x1a] sm:$0xff]
      %v903 = vld [vmem:[#allocation2 + $0x22] sm:$0xff]
      %v904 = vld [vmem:[#allocation2 + $0x2a] sm:$0xff]
      %v905 = vld [vmem:[#allocation2 + $0x32] sm:$0xff]
      %v906 = vld [vmem:[#allocation2 + $0x3a] sm:$0xff]
      %v907 = vld [vmem:[#allocation2 + $0x42] sm:$0xff]
      %v908 = vld [vmem:[#allocation2 + $0x4a] sm:$0xff]
      %v909 = vld [vmem:[#allocation2 + $0x52] sm:$0xff]
      %v910 = vld [vmem:[#allocation2 + $0x5a] sm:$0xff]
      %v911 = vld [vmem:[#allocation2 + $0x62] sm:$0xff]
      %v912 = vld [vmem:[#allocation2 + $0x6a] sm:$0xff]
      %v913 = vld [vmem:[#allocation2 + $0x72] sm:$0xff]
      %v914 = vld [vmem:[#allocation2 + $0x7a] sm:$0xff]
      %v915 = vld [vmem:[#allocation2 + $0x82] sm:$0xff]
      %v916 = vld [vmem:[#allocation2 + $0x8a] sm:$0xff]
      %v917 = vld [vmem:[#allocation2 + $0x92] sm:$0xff]
      %v918 = vld [vmem:[#allocation2 + $0x9a] sm:$0xff]
      %v919 = vld [vmem:[#allocation2 + $0xa2] sm:$0xff]
      %v920 = vld [vmem:[#allocation2 + $0xaa] sm:$0xff]
      %v921 = vld [vmem:[#allocation2 + $0xb2] sm:$0xff]
      %v922 = vld [vmem:[#allocation2 + $0xba] sm:$0xff]
      %v923 = vld [vmem:[#allocation2 + $0xc2] sm:$0xff]
      %v924 = vld [vmem:[#allocation2 + $0xca] sm:$0xff]
      %v925 = vld [vmem:[#allocation2 + $0xd2] sm:$0xff]
      %v926 = vld [vmem:[#allocation2 + $0xda] sm:$0xff]
      %v927 = vld [vmem:[#allocation2 + $0xe2] sm:$0xff]
      %v928 = vld [vmem:[#allocation2 + $0xea] sm:$0xff]
      %v929 = vld [vmem:[#allocation2 + $0xf2] sm:$0xff]
      %v930 = vld [vmem:[#allocation2 + $0xfa] sm:$0xff]
      %v931 = vld [vmem:[#allocation2 + $0x102] sm:$0xff]
      %v932 = vld [vmem:[#allocation2 + $0x10a] sm:$0xff]
      %v933 = vld [vmem:[#allocation2 + $0x112] sm:$0xff]
      %v934 = vld [vmem:[#allocation2 + $0x11a] sm:$0xff]
      %v935 = vpack.c.bf16 %v900, %v899
      %v936 = vpack.c.bf16 %v902, %v901
      %v937 = vpack.c.bf16 %v904, %v903
      %v938 = vpack.c.bf16 %v906, %v905
      %v939 = vpack.c.bf16 %v908, %v907
      %v940 = vpack.c.bf16 %v910, %v909
      %v941 = vpack.c.bf16 %v912, %v911
      %v942 = vpack.c.bf16 %v914, %v913
      %v943 = vpack.c.bf16 %v916, %v915
      %v944 = vpack.c.bf16 %v918, %v917
      %v945 = vpack.c.bf16 %v920, %v919
      %v946 = vpack.c.bf16 %v922, %v921
      %v947 = vpack.c.bf16 %v924, %v923
      %v948 = vpack.c.bf16 %v926, %v925
      %v949 = vpack.c.bf16 %v928, %v927
      %v950 = vpack.c.bf16 %v930, %v929
      %v951 = vpack.c.bf16 %v932, %v931
      %v952 = vpack.c.bf16 %v934, %v933
      %v953 = vld [vmem:[%s1 + $0x6] sm:$0x7]
      %v954 = vpack.c.bf16 %v953, %v953
      %v956 = vsel %vm199, %v935, 0
      %v959 = vsel %vm199, %v936, 0
      %v962 = vsel %vm199, %v937, 0
      %v965 = vsel %vm199, %v938, 0
      %v968 = vsel %vm199, %v939, 0
      %v971 = vsel %vm199, %v940, 0
      %v974 = vsel %vm199, %v941, 0
      %v977 = vsel %vm199, %v942, 0
      %v980 = vsel %vm199, %v943, 0
      %v983 = vsel %vm199, %v944, 0
      %v986 = vsel %vm199, %v945, 0
      %v989 = vsel %vm199, %v946, 0
      %v992 = vsel %vm199, %v947, 0
      %v995 = vsel %vm199, %v948, 0
      %v998 = vsel %vm199, %v949, 0
      %v1001 = vsel %vm199, %v950, 0
      %v1004 = vsel %vm199, %v951, 0
      %v1007 = vsel %vm199, %v952, 0
      %v1010 = vand.u32 %v954, %v484
      %1012 = vmatprep.subr.bf16.mxu0 0
      %1013 = vmatpush1.bf16.msra.mxu0 0
      %1014 = vmatprep.subr.bf16.mxu0 0
      %1015 = vmatpush1.bf16.msra.mxu0 0
      %1016 = vmatprep.subr.bf16.mxu0 0
      %1017 = vmatpush1.bf16.msra.mxu0 0
      %1018 = vmatprep.subr.bf16.mxu0 0
      %1019 = vmatpush1.bf16.msra.mxu0 0
      %1020 = vmatprep.subr.bf16.mxu0 0
      %1021 = vmatpush1.bf16.msra.mxu0 0
      %1022 = vmatprep.subr.bf16.mxu0 0
      %1023 = vmatpush1.bf16.msra.mxu0 0
      %1024 = vmatprep.subr.bf16.mxu0 0
      %1025 = vmatpush1.bf16.msra.mxu0 0
      %1026 = vmatprep.subr.bf16.mxu0 0
      %1027 = vmatpush1.bf16.msra.mxu0 %v1010
      %1028 = vmatprep.subr.bf16.mxu0 0
      %1029 = vmatpush2.bf16.msra.mxu0 0
      %1030 = vmatprep.subr.bf16.mxu0 0
      %1031 = vmatpush2.bf16.msra.mxu0 0
      %1032 = vmatprep.subr.bf16.mxu0 0
      %1033 = vmatpush2.bf16.msra.mxu0 0
      %1034 = vmatprep.subr.bf16.mxu0 0
      %1035 = vmatpush2.bf16.msra.mxu0 0
      %1036 = vmatprep.subr.bf16.mxu0 0
      %1037 = vmatpush2.bf16.msra.mxu0 0
      %1038 = vmatprep.subr.bf16.mxu0 0
      %1039 = vmatpush2.bf16.msra.mxu0 0
      %1040 = vmatprep.subr.bf16.mxu0 0
      %1041 = vmatpush2.bf16.msra.mxu0 0
      %1042 = vmatprep.subr.bf16.mxu0 0
      %1043 = vmatpush2.bf16.msra.mxu0 0
      %1044 = vmatprep.mubr.bf16.mxu0 0
      %1045 = vmatmul.mubr.bf16.gmra.mxu0 %v956
      %v1046 = vpop.f32.mrf.mxu0
      %v1047 = vadd.f32 0.0, %v1046
      %v1048 = vpop.f32.mrf.mxu0
      %v1049 = vpop.f32.mrf.mxu0
      %v1050 = vadd.f32 0.0, %v1049
      %v1051 = vpop.f32.mrf.mxu0
      %1052 = vmatprep.mubr.bf16.mxu0 0
      %1053 = vmatmul.mubr.bf16.gmra.mxu0 %v959
      %v1054 = vpop.f32.mrf.mxu0
      %v1055 = vadd.f32 0.0, %v1054
      %v1056 = vpop.f32.mrf.mxu0
      %v1057 = vpop.f32.mrf.mxu0
      %v1058 = vadd.f32 0.0, %v1057
      %v1059 = vpop.f32.mrf.mxu0
      %1060 = vmatprep.mubr.bf16.mxu0 0
      %1061 = vmatmul.mubr.bf16.gmra.mxu0 %v962
      %v1062 = vpop.f32.mrf.mxu0
      %v1063 = vadd.f32 0.0, %v1062
      %v1064 = vpop.f32.mrf.mxu0
      %v1065 = vpop.f32.mrf.mxu0
      %v1066 = vadd.f32 0.0, %v1065
      %v1067 = vpop.f32.mrf.mxu0
      %1068 = vmatprep.mubr.bf16.mxu0 0
      %1069 = vmatmul.mubr.bf16.gmra.mxu0 %v965
      %v1070 = vpop.f32.mrf.mxu0
      %v1071 = vadd.f32 0.0, %v1070
      %v1072 = vpop.f32.mrf.mxu0
      %v1073 = vpop.f32.mrf.mxu0
      %v1074 = vadd.f32 0.0, %v1073
      %v1075 = vpop.f32.mrf.mxu0
      %1076 = vmatprep.mubr.bf16.mxu0 0
      %1077 = vmatmul.mubr.bf16.gmra.mxu0 %v968
      %v1078 = vpop.f32.mrf.mxu0
      %v1079 = vadd.f32 0.0, %v1078
      %v1080 = vpop.f32.mrf.mxu0
      %v1081 = vpop.f32.mrf.mxu0
      %v1082 = vadd.f32 0.0, %v1081
      %v1083 = vpop.f32.mrf.mxu0
      %1084 = vmatprep.mubr.bf16.mxu0 0
      %1085 = vmatmul.mubr.bf16.gmra.mxu0 %v971
      %v1086 = vpop.f32.mrf.mxu0
      %v1087 = vadd.f32 0.0, %v1086
      %v1088 = vpop.f32.mrf.mxu0
      %v1089 = vpop.f32.mrf.mxu0
      %v1090 = vadd.f32 0.0, %v1089
      %v1091 = vpop.f32.mrf.mxu0
      %1092 = vmatprep.mubr.bf16.mxu0 0
      %1093 = vmatmul.mubr.bf16.gmra.mxu0 %v974
      %v1094 = vpop.f32.mrf.mxu0
      %v1095 = vadd.f32 0.0, %v1094
      %v1096 = vpop.f32.mrf.mxu0
      %v1097 = vpop.f32.mrf.mxu0
      %v1098 = vadd.f32 0.0, %v1097
      %v1099 = vpop.f32.mrf.mxu0
      %1100 = vmatprep.mubr.bf16.mxu0 0
      %1101 = vmatmul.mubr.bf16.gmra.mxu0 %v977
      %v1102 = vpop.f32.mrf.mxu0
      %v1103 = vadd.f32 0.0, %v1102
      %v1104 = vpop.f32.mrf.mxu0
      %v1105 = vpop.f32.mrf.mxu0
      %v1106 = vadd.f32 0.0, %v1105
      %v1107 = vpop.f32.mrf.mxu0
      %1108 = vmatprep.mubr.bf16.mxu0 0
      %1109 = vmatmul.mubr.bf16.gmra.mxu0 %v980
      %v1110 = vpop.f32.mrf.mxu0
      %v1111 = vadd.f32 0.0, %v1110
      %v1112 = vpop.f32.mrf.mxu0
      %v1113 = vpop.f32.mrf.mxu0
      %v1114 = vadd.f32 0.0, %v1113
      %v1115 = vpop.f32.mrf.mxu0
      %1116 = vmatprep.mubr.bf16.mxu0 0
      %1117 = vmatmul.mubr.bf16.gmra.mxu0 %v983
      %v1118 = vpop.f32.mrf.mxu0
      %v1119 = vadd.f32 0.0, %v1118
      %v1120 = vpop.f32.mrf.mxu0
      %v1121 = vpop.f32.mrf.mxu0
      %v1122 = vadd.f32 0.0, %v1121
      %v1123 = vpop.f32.mrf.mxu0
      %1124 = vmatprep.mubr.bf16.mxu0 0
      %1125 = vmatmul.mubr.bf16.gmra.mxu0 %v986
      %v1126 = vpop.f32.mrf.mxu0
      %v1127 = vadd.f32 0.0, %v1126
      %v1128 = vpop.f32.mrf.mxu0
      %v1129 = vpop.f32.mrf.mxu0
      %v1130 = vadd.f32 0.0, %v1129
      %v1131 = vpop.f32.mrf.mxu0
      %1132 = vmatprep.mubr.bf16.mxu0 0
      %1133 = vmatmul.mubr.bf16.gmra.mxu0 %v989
      %v1134 = vpop.f32.mrf.mxu0
      %v1135 = vadd.f32 0.0, %v1134
      %v1136 = vpop.f32.mrf.mxu0
      %v1137 = vpop.f32.mrf.mxu0
      %v1138 = vadd.f32 0.0, %v1137
      %v1139 = vpop.f32.mrf.mxu0
      %1140 = vmatprep.mubr.bf16.mxu0 0
      %1141 = vmatmul.mubr.bf16.gmra.mxu0 %v992
      %v1142 = vpop.f32.mrf.mxu0
      %v1143 = vadd.f32 0.0, %v1142
      %v1144 = vpop.f32.mrf.mxu0
      %v1145 = vpop.f32.mrf.mxu0
      %v1146 = vadd.f32 0.0, %v1145
      %v1147 = vpop.f32.mrf.mxu0
      %1148 = vmatprep.mubr.bf16.mxu0 0
      %1149 = vmatmul.mubr.bf16.gmra.mxu0 %v995
      %v1150 = vpop.f32.mrf.mxu0
      %v1151 = vadd.f32 0.0, %v1150
      %v1152 = vpop.f32.mrf.mxu0
      %v1153 = vpop.f32.mrf.mxu0
      %v1154 = vadd.f32 0.0, %v1153
      %v1155 = vpop.f32.mrf.mxu0
      %1156 = vmatprep.mubr.bf16.mxu0 0
      %1157 = vmatmul.mubr.bf16.gmra.mxu0 %v998
      %v1158 = vpop.f32.mrf.mxu0
      %v1159 = vadd.f32 0.0, %v1158
      %v1160 = vpop.f32.mrf.mxu0
      %v1161 = vpop.f32.mrf.mxu0
      %v1162 = vadd.f32 0.0, %v1161
      %v1163 = vpop.f32.mrf.mxu0
      %1164 = vmatprep.mubr.bf16.mxu0 0
      %1165 = vmatmul.mubr.bf16.gmra.mxu0 %v1001
      %v1166 = vpop.f32.mrf.mxu0
      %v1167 = vadd.f32 0.0, %v1166
      %v1168 = vpop.f32.mrf.mxu0
      %v1169 = vpop.f32.mrf.mxu0
      %v1170 = vadd.f32 0.0, %v1169
      %v1171 = vpop.f32.mrf.mxu0
      %1172 = vmatprep.mubr.bf16.mxu0 0
      %1173 = vmatmul.mubr.bf16.gmra.mxu0 %v1004
      %v1174 = vpop.f32.mrf.mxu0
      %v1175 = vadd.f32 0.0, %v1174
      %v1176 = vpop.f32.mrf.mxu0
      %v1177 = vpop.f32.mrf.mxu0
      %v1178 = vadd.f32 0.0, %v1177
      %v1179 = vpop.f32.mrf.mxu0
      %1180 = vmatprep.mubr.bf16.mxu0 0
      %1181 = vmatmul.mubr.bf16.gmra.mxu0 %v1007
      %v1182 = vpop.f32.mrf.mxu0
      %v1183 = vadd.f32 0.0, %v1182
      %v1184 = vpop.f32.mrf.mxu0
      %v1185 = vpop.f32.mrf.mxu0
      %v1186 = vadd.f32 0.0, %v1185
      %v1187 = vpop.f32.mrf.mxu0
      %1188 = vdwg.mxu0
      %v1189 = vadd.f32 %v757, %v1047
      %v1190 = vadd.f32 %v760, %v1050
      %v1191 = vadd.f32 %v765, %v1055
      %v1192 = vadd.f32 %v768, %v1058
      %v1193 = vadd.f32 %v773, %v1063
      %v1194 = vadd.f32 %v776, %v1066
      %v1195 = vadd.f32 %v781, %v1071
      %v1196 = vadd.f32 %v784, %v1074
      %v1197 = vadd.f32 %v789, %v1079
      %v1198 = vadd.f32 %v792, %v1082
      %v1199 = vadd.f32 %v797, %v1087
      %v1200 = vadd.f32 %v800, %v1090
      %v1201 = vadd.f32 %v805, %v1095
      %v1202 = vadd.f32 %v808, %v1098
      %v1203 = vadd.f32 %v813, %v1103
      %v1204 = vadd.f32 %v816, %v1106
      %v1205 = vadd.f32 %v821, %v1111
      %v1206 = vadd.f32 %v824, %v1114
      %v1207 = vadd.f32 %v829, %v1119
      %v1208 = vadd.f32 %v832, %v1122
      %v1209 = vadd.f32 %v837, %v1127
      %v1210 = vadd.f32 %v840, %v1130
      %v1211 = vadd.f32 %v845, %v1135
      %v1212 = vadd.f32 %v848, %v1138
      %v1213 = vadd.f32 %v853, %v1143
      %v1214 = vadd.f32 %v856, %v1146
      %v1215 = vadd.f32 %v861, %v1151
      %v1216 = vadd.f32 %v864, %v1154
      %v1217 = vadd.f32 %v869, %v1159
      %v1218 = vadd.f32 %v872, %v1162
      %v1219 = vadd.f32 %v877, %v1167
      %v1220 = vadd.f32 %v880, %v1170
      %v1221 = vadd.f32 %v885, %v1175
      %v1222 = vadd.f32 %v888, %v1178
      %v1223 = vadd.f32 %v893, %v1183
      %v1224 = vadd.f32 %v896, %v1186
      %v1225 = vld [vmem:[#allocation2 + $0x12] sm:$0xff]
      %v1226 = vld [vmem:[#allocation2 + $0x1a] sm:$0xff]
      %v1227 = vld [vmem:[#allocation2 + $0x22] sm:$0xff]
      %v1228 = vld [vmem:[#allocation2 + $0x2a] sm:$0xff]
      %v1229 = vld [vmem:[#allocation2 + $0x32] sm:$0xff]
      %v1230 = vld [vmem:[#allocation2 + $0x3a] sm:$0xff]
      %v1231 = vld [vmem:[#allocation2 + $0x42] sm:$0xff]
      %v1232 = vld [vmem:[#allocation2 + $0x4a] sm:$0xff]
      %v1233 = vld [vmem:[#allocation2 + $0x52] sm:$0xff]
      %v1234 = vld [vmem:[#allocation2 + $0x5a] sm:$0xff]
      %v1235 = vld [vmem:[#allocation2 + $0x62] sm:$0xff]
      %v1236 = vld [vmem:[#allocation2 + $0x6a] sm:$0xff]
      %v1237 = vld [vmem:[#allocation2 + $0x72] sm:$0xff]
      %v1238 = vld [vmem:[#allocation2 + $0x7a] sm:$0xff]
      %v1239 = vld [vmem:[#allocation2 + $0x82] sm:$0xff]
      %v1240 = vld [vmem:[#allocation2 + $0x8a] sm:$0xff]
      %v1241 = vld [vmem:[#allocation2 + $0x92] sm:$0xff]
      %v1242 = vld [vmem:[#allocation2 + $0x9a] sm:$0xff]
      %v1243 = vld [vmem:[#allocation2 + $0xa2] sm:$0xff]
      %v1244 = vld [vmem:[#allocation2 + $0xaa] sm:$0xff]
      %v1245 = vld [vmem:[#allocation2 + $0xb2] sm:$0xff]
      %v1246 = vld [vmem:[#allocation2 + $0xba] sm:$0xff]
      %v1247 = vld [vmem:[#allocation2 + $0xc2] sm:$0xff]
      %v1248 = vld [vmem:[#allocation2 + $0xca] sm:$0xff]
      %v1249 = vld [vmem:[#allocation2 + $0xd2] sm:$0xff]
      %v1250 = vld [vmem:[#allocation2 + $0xda] sm:$0xff]
      %v1251 = vld [vmem:[#allocation2 + $0xe2] sm:$0xff]
      %v1252 = vld [vmem:[#allocation2 + $0xea] sm:$0xff]
      %v1253 = vld [vmem:[#allocation2 + $0xf2] sm:$0xff]
      %v1254 = vld [vmem:[#allocation2 + $0xfa] sm:$0xff]
      %v1255 = vld [vmem:[#allocation2 + $0x102] sm:$0xff]
      %v1256 = vld [vmem:[#allocation2 + $0x10a] sm:$0xff]
      %v1257 = vld [vmem:[#allocation2 + $0x112] sm:$0xff]
      %v1258 = vld [vmem:[#allocation2 + $0x11a] sm:$0xff]
      %v1259 = vld [vmem:[#allocation2 + $0x122] sm:$0xff]
      %v1260 = vld [vmem:[#allocation2 + $0x12a] sm:$0xff]
      %v1261 = vpack.c.bf16 %v1226, %v1225
      %v1262 = vpack.c.bf16 %v1228, %v1227
      %v1263 = vpack.c.bf16 %v1230, %v1229
      %v1264 = vpack.c.bf16 %v1232, %v1231
      %v1265 = vpack.c.bf16 %v1234, %v1233
      %v1266 = vpack.c.bf16 %v1236, %v1235
      %v1267 = vpack.c.bf16 %v1238, %v1237
      %v1268 = vpack.c.bf16 %v1240, %v1239
      %v1269 = vpack.c.bf16 %v1242, %v1241
      %v1270 = vpack.c.bf16 %v1244, %v1243
      %v1271 = vpack.c.bf16 %v1246, %v1245
      %v1272 = vpack.c.bf16 %v1248, %v1247
      %v1273 = vpack.c.bf16 %v1250, %v1249
      %v1274 = vpack.c.bf16 %v1252, %v1251
      %v1275 = vpack.c.bf16 %v1254, %v1253
      %v1276 = vpack.c.bf16 %v1256, %v1255
      %v1277 = vpack.c.bf16 %v1258, %v1257
      %v1278 = vpack.c.bf16 %v1260, %v1259
      %v1279 = vld [vmem:[%s1 + $0x9] sm:$0x7]
      %v1280 = vpack.c.bf16 %v1279, %v1279
      %v1282 = vsel %vm199, %v1261, 0
      %v1285 = vsel %vm199, %v1262, 0
      %v1288 = vsel %vm199, %v1263, 0
      %v1291 = vsel %vm199, %v1264, 0
      %v1294 = vsel %vm199, %v1265, 0
      %v1297 = vsel %vm199, %v1266, 0
      %v1300 = vsel %vm199, %v1267, 0
      %v1303 = vsel %vm199, %v1268, 0
      %v1306 = vsel %vm199, %v1269, 0
      %v1309 = vsel %vm199, %v1270, 0
      %v1312 = vsel %vm199, %v1271, 0
      %v1315 = vsel %vm199, %v1272, 0
      %v1318 = vsel %vm199, %v1273, 0
      %v1321 = vsel %vm199, %v1274, 0
      %v1324 = vsel %vm199, %v1275, 0
      %v1327 = vsel %vm199, %v1276, 0
      %v1330 = vsel %vm199, %v1277, 0
      %v1333 = vsel %vm199, %v1278, 0
      %v1336 = vand.u32 %v1280, %v484
      %1338 = vmatprep.subr.bf16.mxu0 0
      %1339 = vmatpush1.bf16.msra.mxu0 0
      %1340 = vmatprep.subr.bf16.mxu0 0
      %1341 = vmatpush1.bf16.msra.mxu0 0
      %1342 = vmatprep.subr.bf16.mxu0 0
      %1343 = vmatpush1.bf16.msra.mxu0 0
      %1344 = vmatprep.subr.bf16.mxu0 0
      %1345 = vmatpush1.bf16.msra.mxu0 0
      %1346 = vmatprep.subr.bf16.mxu0 0
      %1347 = vmatpush1.bf16.msra.mxu0 0
      %1348 = vmatprep.subr.bf16.mxu0 0
      %1349 = vmatpush1.bf16.msra.mxu0 0
      %1350 = vmatprep.subr.bf16.mxu0 0
      %1351 = vmatpush1.bf16.msra.mxu0 0
      %1352 = vmatprep.subr.bf16.mxu0 0
      %1353 = vmatpush1.bf16.msra.mxu0 %v1336
      %1354 = vmatprep.subr.bf16.mxu0 0
      %1355 = vmatpush2.bf16.msra.mxu0 0
      %1356 = vmatprep.subr.bf16.mxu0 0
      %1357 = vmatpush2.bf16.msra.mxu0 0
      %1358 = vmatprep.subr.bf16.mxu0 0
      %1359 = vmatpush2.bf16.msra.mxu0 0
      %1360 = vmatprep.subr.bf16.mxu0 0
      %1361 = vmatpush2.bf16.msra.mxu0 0
      %1362 = vmatprep.subr.bf16.mxu0 0
      %1363 = vmatpush2.bf16.msra.mxu0 0
      %1364 = vmatprep.subr.bf16.mxu0 0
      %1365 = vmatpush2.bf16.msra.mxu0 0
      %1366 = vmatprep.subr.bf16.mxu0 0
      %1367 = vmatpush2.bf16.msra.mxu0 0
      %1368 = vmatprep.subr.bf16.mxu0 0
      %1369 = vmatpush2.bf16.msra.mxu0 0
      %1370 = vmatprep.mubr.bf16.mxu0 0
      %1371 = vmatmul.mubr.bf16.gmra.mxu0 %v1282
      %v1372 = vpop.f32.mrf.mxu0
      %v1373 = vadd.f32 0.0, %v1372
      %v1374 = vpop.f32.mrf.mxu0
      %v1375 = vpop.f32.mrf.mxu0
      %v1376 = vadd.f32 0.0, %v1375
      %v1377 = vpop.f32.mrf.mxu0
      %1378 = vmatprep.mubr.bf16.mxu0 0
      %1379 = vmatmul.mubr.bf16.gmra.mxu0 %v1285
      %v1380 = vpop.f32.mrf.mxu0
      %v1381 = vadd.f32 0.0, %v1380
      %v1382 = vpop.f32.mrf.mxu0
      %v1383 = vpop.f32.mrf.mxu0
      %v1384 = vadd.f32 0.0, %v1383
      %v1385 = vpop.f32.mrf.mxu0
      %1386 = vmatprep.mubr.bf16.mxu0 0
      %1387 = vmatmul.mubr.bf16.gmra.mxu0 %v1288
      %v1388 = vpop.f32.mrf.mxu0
      %v1389 = vadd.f32 0.0, %v1388
      %v1390 = vpop.f32.mrf.mxu0
      %v1391 = vpop.f32.mrf.mxu0
      %v1392 = vadd.f32 0.0, %v1391
      %v1393 = vpop.f32.mrf.mxu0
      %1394 = vmatprep.mubr.bf16.mxu0 0
      %1395 = vmatmul.mubr.bf16.gmra.mxu0 %v1291
      %v1396 = vpop.f32.mrf.mxu0
      %v1397 = vadd.f32 0.0, %v1396
      %v1398 = vpop.f32.mrf.mxu0
      %v1399 = vpop.f32.mrf.mxu0
      %v1400 = vadd.f32 0.0, %v1399
      %v1401 = vpop.f32.mrf.mxu0
      %1402 = vmatprep.mubr.bf16.mxu0 0
      %1403 = vmatmul.mubr.bf16.gmra.mxu0 %v1294
      %v1404 = vpop.f32.mrf.mxu0
      %v1405 = vadd.f32 0.0, %v1404
      %v1406 = vpop.f32.mrf.mxu0
      %v1407 = vpop.f32.mrf.mxu0
      %v1408 = vadd.f32 0.0, %v1407
      %v1409 = vpop.f32.mrf.mxu0
      %1410 = vmatprep.mubr.bf16.mxu0 0
      %1411 = vmatmul.mubr.bf16.gmra.mxu0 %v1297
      %v1412 = vpop.f32.mrf.mxu0
      %v1413 = vadd.f32 0.0, %v1412
      %v1414 = vpop.f32.mrf.mxu0
      %v1415 = vpop.f32.mrf.mxu0
      %v1416 = vadd.f32 0.0, %v1415
      %v1417 = vpop.f32.mrf.mxu0
      %1418 = vmatprep.mubr.bf16.mxu0 0
      %1419 = vmatmul.mubr.bf16.gmra.mxu0 %v1300
      %v1420 = vpop.f32.mrf.mxu0
      %v1421 = vadd.f32 0.0, %v1420
      %v1422 = vpop.f32.mrf.mxu0
      %v1423 = vpop.f32.mrf.mxu0
      %v1424 = vadd.f32 0.0, %v1423
      %v1425 = vpop.f32.mrf.mxu0
      %1426 = vmatprep.mubr.bf16.mxu0 0
      %1427 = vmatmul.mubr.bf16.gmra.mxu0 %v1303
      %v1428 = vpop.f32.mrf.mxu0
      %v1429 = vadd.f32 0.0, %v1428
      %v1430 = vpop.f32.mrf.mxu0
      %v1431 = vpop.f32.mrf.mxu0
      %v1432 = vadd.f32 0.0, %v1431
      %v1433 = vpop.f32.mrf.mxu0
      %1434 = vmatprep.mubr.bf16.mxu0 0
      %1435 = vmatmul.mubr.bf16.gmra.mxu0 %v1306
      %v1436 = vpop.f32.mrf.mxu0
      %v1437 = vadd.f32 0.0, %v1436
      %v1438 = vpop.f32.mrf.mxu0
      %v1439 = vpop.f32.mrf.mxu0
      %v1440 = vadd.f32 0.0, %v1439
      %v1441 = vpop.f32.mrf.mxu0
      %1442 = vmatprep.mubr.bf16.mxu0 0
      %1443 = vmatmul.mubr.bf16.gmra.mxu0 %v1309
      %v1444 = vpop.f32.mrf.mxu0
      %v1445 = vadd.f32 0.0, %v1444
      %v1446 = vpop.f32.mrf.mxu0
      %v1447 = vpop.f32.mrf.mxu0
      %v1448 = vadd.f32 0.0, %v1447
      %v1449 = vpop.f32.mrf.mxu0
      %1450 = vmatprep.mubr.bf16.mxu0 0
      %1451 = vmatmul.mubr.bf16.gmra.mxu0 %v1312
      %v1452 = vpop.f32.mrf.mxu0
      %v1453 = vadd.f32 0.0, %v1452
      %v1454 = vpop.f32.mrf.mxu0
      %v1455 = vpop.f32.mrf.mxu0
      %v1456 = vadd.f32 0.0, %v1455
      %v1457 = vpop.f32.mrf.mxu0
      %1458 = vmatprep.mubr.bf16.mxu0 0
      %1459 = vmatmul.mubr.bf16.gmra.mxu0 %v1315
      %v1460 = vpop.f32.mrf.mxu0
      %v1461 = vadd.f32 0.0, %v1460
      %v1462 = vpop.f32.mrf.mxu0
      %v1463 = vpop.f32.mrf.mxu0
      %v1464 = vadd.f32 0.0, %v1463
      %v1465 = vpop.f32.mrf.mxu0
      %1466 = vmatprep.mubr.bf16.mxu0 0
      %1467 = vmatmul.mubr.bf16.gmra.mxu0 %v1318
      %v1468 = vpop.f32.mrf.mxu0
      %v1469 = vadd.f32 0.0, %v1468
      %v1470 = vpop.f32.mrf.mxu0
      %v1471 = vpop.f32.mrf.mxu0
      %v1472 = vadd.f32 0.0, %v1471
      %v1473 = vpop.f32.mrf.mxu0
      %1474 = vmatprep.mubr.bf16.mxu0 0
      %1475 = vmatmul.mubr.bf16.gmra.mxu0 %v1321
      %v1476 = vpop.f32.mrf.mxu0
      %v1477 = vadd.f32 0.0, %v1476
      %v1478 = vpop.f32.mrf.mxu0
      %v1479 = vpop.f32.mrf.mxu0
      %v1480 = vadd.f32 0.0, %v1479
      %v1481 = vpop.f32.mrf.mxu0
      %1482 = vmatprep.mubr.bf16.mxu0 0
      %1483 = vmatmul.mubr.bf16.gmra.mxu0 %v1324
      %v1484 = vpop.f32.mrf.mxu0
      %v1485 = vadd.f32 0.0, %v1484
      %v1486 = vpop.f32.mrf.mxu0
      %v1487 = vpop.f32.mrf.mxu0
      %v1488 = vadd.f32 0.0, %v1487
      %v1489 = vpop.f32.mrf.mxu0
      %1490 = vmatprep.mubr.bf16.mxu0 0
      %1491 = vmatmul.mubr.bf16.gmra.mxu0 %v1327
      %v1492 = vpop.f32.mrf.mxu0
      %v1493 = vadd.f32 0.0, %v1492
      %v1494 = vpop.f32.mrf.mxu0
      %v1495 = vpop.f32.mrf.mxu0
      %v1496 = vadd.f32 0.0, %v1495
      %v1497 = vpop.f32.mrf.mxu0
      %1498 = vmatprep.mubr.bf16.mxu0 0
      %1499 = vmatmul.mubr.bf16.gmra.mxu0 %v1330
      %v1500 = vpop.f32.mrf.mxu0
      %v1501 = vadd.f32 0.0, %v1500
      %v1502 = vpop.f32.mrf.mxu0
      %v1503 = vpop.f32.mrf.mxu0
      %v1504 = vadd.f32 0.0, %v1503
      %v1505 = vpop.f32.mrf.mxu0
      %1506 = vmatprep.mubr.bf16.mxu0 0
      %1507 = vmatmul.mubr.bf16.gmra.mxu0 %v1333
      %v1508 = vpop.f32.mrf.mxu0
      %v1509 = vadd.f32 0.0, %v1508
      %v1510 = vpop.f32.mrf.mxu0
      %v1511 = vpop.f32.mrf.mxu0
      %v1512 = vadd.f32 0.0, %v1511
      %v1513 = vpop.f32.mrf.mxu0
      %1514 = vdwg.mxu0
      %v1515 = vadd.f32 %v1189, %v1373
      %v1516 = vadd.f32 %v1190, %v1376
      %v1517 = vadd.f32 %v1191, %v1381
      %v1518 = vadd.f32 %v1192, %v1384
      %v1519 = vadd.f32 %v1193, %v1389
      %v1520 = vadd.f32 %v1194, %v1392
      %v1521 = vadd.f32 %v1195, %v1397
      %v1522 = vadd.f32 %v1196, %v1400
      %v1523 = vadd.f32 %v1197, %v1405
      %v1524 = vadd.f32 %v1198, %v1408
      %v1525 = vadd.f32 %v1199, %v1413
      %v1526 = vadd.f32 %v1200, %v1416
      %v1527 = vadd.f32 %v1201, %v1421
      %v1528 = vadd.f32 %v1202, %v1424
      %v1529 = vadd.f32 %v1203, %v1429
      %v1530 = vadd.f32 %v1204, %v1432
      %v1531 = vadd.f32 %v1205, %v1437
      %v1532 = vadd.f32 %v1206, %v1440
      %v1533 = vadd.f32 %v1207, %v1445
      %v1534 = vadd.f32 %v1208, %v1448
      %v1535 = vadd.f32 %v1209, %v1453
      %v1536 = vadd.f32 %v1210, %v1456
      %v1537 = vadd.f32 %v1211, %v1461
      %v1538 = vadd.f32 %v1212, %v1464
      %v1539 = vadd.f32 %v1213, %v1469
      %v1540 = vadd.f32 %v1214, %v1472
      %v1541 = vadd.f32 %v1215, %v1477
      %v1542 = vadd.f32 %v1216, %v1480
      %v1543 = vadd.f32 %v1217, %v1485
      %v1544 = vadd.f32 %v1218, %v1488
      %v1545 = vadd.f32 %v1219, %v1493
      %v1546 = vadd.f32 %v1220, %v1496
      %v1547 = vadd.f32 %v1221, %v1501
      %v1548 = vadd.f32 %v1222, %v1504
      %v1549 = vadd.f32 %v1223, %v1509
      %v1550 = vadd.f32 %v1224, %v1512
      %v1551 = vld [vmem:[#allocation2 + $0x13] sm:$0xff]
      %v1552 = vld [vmem:[#allocation2 + $0x1b] sm:$0xff]
      %v1553 = vld [vmem:[#allocation2 + $0x23] sm:$0xff]
      %v1554 = vld [vmem:[#allocation2 + $0x2b] sm:$0xff]
      %v1555 = vld [vmem:[#allocation2 + $0x33] sm:$0xff]
      %v1556 = vld [vmem:[#allocation2 + $0x3b] sm:$0xff]
      %v1557 = vld [vmem:[#allocation2 + $0x43] sm:$0xff]
      %v1558 = vld [vmem:[#allocation2 + $0x4b] sm:$0xff]
      %v1559 = vld [vmem:[#allocation2 + $0x53] sm:$0xff]
      %v1560 = vld [vmem:[#allocation2 + $0x5b] sm:$0xff]
      %v1561 = vld [vmem:[#allocation2 + $0x63] sm:$0xff]
      %v1562 = vld [vmem:[#allocation2 + $0x6b] sm:$0xff]
      %v1563 = vld [vmem:[#allocation2 + $0x73] sm:$0xff]
      %v1564 = vld [vmem:[#allocation2 + $0x7b] sm:$0xff]
      %v1565 = vld [vmem:[#allocation2 + $0x83] sm:$0xff]
      %v1566 = vld [vmem:[#allocation2 + $0x8b] sm:$0xff]
      %v1567 = vld [vmem:[#allocation2 + $0x93] sm:$0xff]
      %v1568 = vld [vmem:[#allocation2 + $0x9b] sm:$0xff]
      %v1569 = vld [vmem:[#allocation2 + $0xa3] sm:$0xff]
      %v1570 = vld [vmem:[#allocation2 + $0xab] sm:$0xff]
      %v1571 = vld [vmem:[#allocation2 + $0xb3] sm:$0xff]
      %v1572 = vld [vmem:[#allocation2 + $0xbb] sm:$0xff]
      %v1573 = vld [vmem:[#allocation2 + $0xc3] sm:$0xff]
      %v1574 = vld [vmem:[#allocation2 + $0xcb] sm:$0xff]
      %v1575 = vld [vmem:[#allocation2 + $0xd3] sm:$0xff]
      %v1576 = vld [vmem:[#allocation2 + $0xdb] sm:$0xff]
      %v1577 = vld [vmem:[#allocation2 + $0xe3] sm:$0xff]
      %v1578 = vld [vmem:[#allocation2 + $0xeb] sm:$0xff]
      %v1579 = vld [vmem:[#allocation2 + $0xf3] sm:$0xff]
      %v1580 = vld [vmem:[#allocation2 + $0xfb] sm:$0xff]
      %v1581 = vld [vmem:[#allocation2 + $0x103] sm:$0xff]
      %v1582 = vld [vmem:[#allocation2 + $0x10b] sm:$0xff]
      %v1583 = vld [vmem:[#allocation2 + $0x113] sm:$0xff]
      %v1584 = vld [vmem:[#allocation2 + $0x11b] sm:$0xff]
      %v1585 = vld [vmem:[#allocation2 + $0x123] sm:$0xff]
      %v1586 = vld [vmem:[#allocation2 + $0x12b] sm:$0xff]
      %v1587 = vpack.c.bf16 %v1552, %v1551
      %v1588 = vpack.c.bf16 %v1554, %v1553
      %v1589 = vpack.c.bf16 %v1556, %v1555
      %v1590 = vpack.c.bf16 %v1558, %v1557
      %v1591 = vpack.c.bf16 %v1560, %v1559
      %v1592 = vpack.c.bf16 %v1562, %v1561
      %v1593 = vpack.c.bf16 %v1564, %v1563
      %v1594 = vpack.c.bf16 %v1566, %v1565
      %v1595 = vpack.c.bf16 %v1568, %v1567
      %v1596 = vpack.c.bf16 %v1570, %v1569
      %v1597 = vpack.c.bf16 %v1572, %v1571
      %v1598 = vpack.c.bf16 %v1574, %v1573
      %v1599 = vpack.c.bf16 %v1576, %v1575
      %v1600 = vpack.c.bf16 %v1578, %v1577
      %v1601 = vpack.c.bf16 %v1580, %v1579
      %v1602 = vpack.c.bf16 %v1582, %v1581
      %v1603 = vpack.c.bf16 %v1584, %v1583
      %v1604 = vpack.c.bf16 %v1586, %v1585
      %v1605 = vld [vmem:[%s1 + $0xc] sm:$0x7]
      %v1606 = vpack.c.bf16 %v1605, %v1605
      %v1608 = vsel %vm199, %v1587, 0
      %v1611 = vsel %vm199, %v1588, 0
      %v1614 = vsel %vm199, %v1589, 0
      %v1617 = vsel %vm199, %v1590, 0
      %v1620 = vsel %vm199, %v1591, 0
      %v1623 = vsel %vm199, %v1592, 0
      %v1626 = vsel %vm199, %v1593, 0
      %v1629 = vsel %vm199, %v1594, 0
      %v1632 = vsel %vm199, %v1595, 0
      %v1635 = vsel %vm199, %v1596, 0
      %v1638 = vsel %vm199, %v1597, 0
      %v1641 = vsel %vm199, %v1598, 0
      %v1644 = vsel %vm199, %v1599, 0
      %v1647 = vsel %vm199, %v1600, 0
      %v1650 = vsel %vm199, %v1601, 0
      %v1653 = vsel %vm199, %v1602, 0
      %v1656 = vsel %vm199, %v1603, 0
      %v1659 = vsel %vm199, %v1604, 0
      %v1662 = vand.u32 %v1606, %v484
      %1664 = vmatprep.subr.bf16.mxu0 0
      %1665 = vmatpush1.bf16.msra.mxu0 0
      %1666 = vmatprep.subr.bf16.mxu0 0
      %1667 = vmatpush1.bf16.msra.mxu0 0
      %1668 = vmatprep.subr.bf16.mxu0 0
      %1669 = vmatpush1.bf16.msra.mxu0 0
      %1670 = vmatprep.subr.bf16.mxu0 0
      %1671 = vmatpush1.bf16.msra.mxu0 0
      %1672 = vmatprep.subr.bf16.mxu0 0
      %1673 = vmatpush1.bf16.msra.mxu0 0
      %1674 = vmatprep.subr.bf16.mxu0 0
      %1675 = vmatpush1.bf16.msra.mxu0 0
      %1676 = vmatprep.subr.bf16.mxu0 0
      %1677 = vmatpush1.bf16.msra.mxu0 0
      %1678 = vmatprep.subr.bf16.mxu0 0
      %1679 = vmatpush1.bf16.msra.mxu0 %v1662
      %1680 = vmatprep.subr.bf16.mxu0 0
      %1681 = vmatpush2.bf16.msra.mxu0 0
      %1682 = vmatprep.subr.bf16.mxu0 0
      %1683 = vmatpush2.bf16.msra.mxu0 0
      %1684 = vmatprep.subr.bf16.mxu0 0
      %1685 = vmatpush2.bf16.msra.mxu0 0
      %1686 = vmatprep.subr.bf16.mxu0 0
      %1687 = vmatpush2.bf16.msra.mxu0 0
      %1688 = vmatprep.subr.bf16.mxu0 0
      %1689 = vmatpush2.bf16.msra.mxu0 0
      %1690 = vmatprep.subr.bf16.mxu0 0
      %1691 = vmatpush2.bf16.msra.mxu0 0
      %1692 = vmatprep.subr.bf16.mxu0 0
      %1693 = vmatpush2.bf16.msra.mxu0 0
      %1694 = vmatprep.subr.bf16.mxu0 0
      %1695 = vmatpush2.bf16.msra.mxu0 0
      %1696 = vmatprep.mubr.bf16.mxu0 0
      %1697 = vmatmul.mubr.bf16.gmra.mxu0 %v1608
      %v1698 = vpop.f32.mrf.mxu0
      %v1699 = vadd.f32 0.0, %v1698
      %v1700 = vpop.f32.mrf.mxu0
      %v1701 = vpop.f32.mrf.mxu0
      %v1702 = vadd.f32 0.0, %v1701
      %v1703 = vpop.f32.mrf.mxu0
      %1704 = vmatprep.mubr.bf16.mxu0 0
      %1705 = vmatmul.mubr.bf16.gmra.mxu0 %v1611
      %v1706 = vpop.f32.mrf.mxu0
      %v1707 = vadd.f32 0.0, %v1706
      %v1708 = vpop.f32.mrf.mxu0
      %v1709 = vpop.f32.mrf.mxu0
      %v1710 = vadd.f32 0.0, %v1709
      %v1711 = vpop.f32.mrf.mxu0
      %1712 = vmatprep.mubr.bf16.mxu0 0
      %1713 = vmatmul.mubr.bf16.gmra.mxu0 %v1614
      %v1714 = vpop.f32.mrf.mxu0
      %v1715 = vadd.f32 0.0, %v1714
      %v1716 = vpop.f32.mrf.mxu0
      %v1717 = vpop.f32.mrf.mxu0
      %v1718 = vadd.f32 0.0, %v1717
      %v1719 = vpop.f32.mrf.mxu0
      %1720 = vmatprep.mubr.bf16.mxu0 0
      %1721 = vmatmul.mubr.bf16.gmra.mxu0 %v1617
      %v1722 = vpop.f32.mrf.mxu0
      %v1723 = vadd.f32 0.0, %v1722
      %v1724 = vpop.f32.mrf.mxu0
      %v1725 = vpop.f32.mrf.mxu0
      %v1726 = vadd.f32 0.0, %v1725
      %v1727 = vpop.f32.mrf.mxu0
      %1728 = vmatprep.mubr.bf16.mxu0 0
      %1729 = vmatmul.mubr.bf16.gmra.mxu0 %v1620
      %v1730 = vpop.f32.mrf.mxu0
      %v1731 = vadd.f32 0.0, %v1730
      %v1732 = vpop.f32.mrf.mxu0
      %v1733 = vpop.f32.mrf.mxu0
      %v1734 = vadd.f32 0.0, %v1733
      %v1735 = vpop.f32.mrf.mxu0
      %1736 = vmatprep.mubr.bf16.mxu0 0
      %1737 = vmatmul.mubr.bf16.gmra.mxu0 %v1623
      %v1738 = vpop.f32.mrf.mxu0
      %v1739 = vadd.f32 0.0, %v1738
      %v1740 = vpop.f32.mrf.mxu0
      %v1741 = vpop.f32.mrf.mxu0
      %v1742 = vadd.f32 0.0, %v1741
      %v1743 = vpop.f32.mrf.mxu0
      %1744 = vmatprep.mubr.bf16.mxu0 0
      %1745 = vmatmul.mubr.bf16.gmra.mxu0 %v1626
      %v1746 = vpop.f32.mrf.mxu0
      %v1747 = vadd.f32 0.0, %v1746
      %v1748 = vpop.f32.mrf.mxu0
      %v1749 = vpop.f32.mrf.mxu0
      %v1750 = vadd.f32 0.0, %v1749
      %v1751 = vpop.f32.mrf.mxu0
      %1752 = vmatprep.mubr.bf16.mxu0 0
      %1753 = vmatmul.mubr.bf16.gmra.mxu0 %v1629
      %v1754 = vpop.f32.mrf.mxu0
      %v1755 = vadd.f32 0.0, %v1754
      %v1756 = vpop.f32.mrf.mxu0
      %v1757 = vpop.f32.mrf.mxu0
      %v1758 = vadd.f32 0.0, %v1757
      %v1759 = vpop.f32.mrf.mxu0
      %1760 = vmatprep.mubr.bf16.mxu0 0
      %1761 = vmatmul.mubr.bf16.gmra.mxu0 %v1632
      %v1762 = vpop.f32.mrf.mxu0
      %v1763 = vadd.f32 0.0, %v1762
      %v1764 = vpop.f32.mrf.mxu0
      %v1765 = vpop.f32.mrf.mxu0
      %v1766 = vadd.f32 0.0, %v1765
      %v1767 = vpop.f32.mrf.mxu0
      %1768 = vmatprep.mubr.bf16.mxu0 0
      %1769 = vmatmul.mubr.bf16.gmra.mxu0 %v1635
      %v1770 = vpop.f32.mrf.mxu0
      %v1771 = vadd.f32 0.0, %v1770
      %v1772 = vpop.f32.mrf.mxu0
      %v1773 = vpop.f32.mrf.mxu0
      %v1774 = vadd.f32 0.0, %v1773
      %v1775 = vpop.f32.mrf.mxu0
      %1776 = vmatprep.mubr.bf16.mxu0 0
      %1777 = vmatmul.mubr.bf16.gmra.mxu0 %v1638
      %v1778 = vpop.f32.mrf.mxu0
      %v1779 = vadd.f32 0.0, %v1778
      %v1780 = vpop.f32.mrf.mxu0
      %v1781 = vpop.f32.mrf.mxu0
      %v1782 = vadd.f32 0.0, %v1781
      %v1783 = vpop.f32.mrf.mxu0
      %1784 = vmatprep.mubr.bf16.mxu0 0
      %1785 = vmatmul.mubr.bf16.gmra.mxu0 %v1641
      %v1786 = vpop.f32.mrf.mxu0
      %v1787 = vadd.f32 0.0, %v1786
      %v1788 = vpop.f32.mrf.mxu0
      %v1789 = vpop.f32.mrf.mxu0
      %v1790 = vadd.f32 0.0, %v1789
      %v1791 = vpop.f32.mrf.mxu0
      %1792 = vmatprep.mubr.bf16.mxu0 0
      %1793 = vmatmul.mubr.bf16.gmra.mxu0 %v1644
      %v1794 = vpop.f32.mrf.mxu0
      %v1795 = vadd.f32 0.0, %v1794
      %v1796 = vpop.f32.mrf.mxu0
      %v1797 = vpop.f32.mrf.mxu0
      %v1798 = vadd.f32 0.0, %v1797
      %v1799 = vpop.f32.mrf.mxu0
      %1800 = vmatprep.mubr.bf16.mxu0 0
      %1801 = vmatmul.mubr.bf16.gmra.mxu0 %v1647
      %v1802 = vpop.f32.mrf.mxu0
      %v1803 = vadd.f32 0.0, %v1802
      %v1804 = vpop.f32.mrf.mxu0
      %v1805 = vpop.f32.mrf.mxu0
      %v1806 = vadd.f32 0.0, %v1805
      %v1807 = vpop.f32.mrf.mxu0
      %1808 = vmatprep.mubr.bf16.mxu0 0
      %1809 = vmatmul.mubr.bf16.gmra.mxu0 %v1650
      %v1810 = vpop.f32.mrf.mxu0
      %v1811 = vadd.f32 0.0, %v1810
      %v1812 = vpop.f32.mrf.mxu0
      %v1813 = vpop.f32.mrf.mxu0
      %v1814 = vadd.f32 0.0, %v1813
      %v1815 = vpop.f32.mrf.mxu0
      %1816 = vmatprep.mubr.bf16.mxu0 0
      %1817 = vmatmul.mubr.bf16.gmra.mxu0 %v1653
      %v1818 = vpop.f32.mrf.mxu0
      %v1819 = vadd.f32 0.0, %v1818
      %v1820 = vpop.f32.mrf.mxu0
      %v1821 = vpop.f32.mrf.mxu0
      %v1822 = vadd.f32 0.0, %v1821
      %v1823 = vpop.f32.mrf.mxu0
      %1824 = vmatprep.mubr.bf16.mxu0 0
      %1825 = vmatmul.mubr.bf16.gmra.mxu0 %v1656
      %v1826 = vpop.f32.mrf.mxu0
      %v1827 = vadd.f32 0.0, %v1826
      %v1828 = vpop.f32.mrf.mxu0
      %v1829 = vpop.f32.mrf.mxu0
      %v1830 = vadd.f32 0.0, %v1829
      %v1831 = vpop.f32.mrf.mxu0
      %1832 = vmatprep.mubr.bf16.mxu0 0
      %1833 = vmatmul.mubr.bf16.gmra.mxu0 %v1659
      %v1834 = vpop.f32.mrf.mxu0
      %v1835 = vadd.f32 0.0, %v1834
      %v1836 = vpop.f32.mrf.mxu0
      %v1837 = vpop.f32.mrf.mxu0
      %v1838 = vadd.f32 0.0, %v1837
      %v1839 = vpop.f32.mrf.mxu0
      %1840 = vdwg.mxu0
      %v1841 = vadd.f32 %v1515, %v1699
      %v1842 = vadd.f32 %v1516, %v1702
      %v1843 = vadd.f32 %v1517, %v1707
      %v1844 = vadd.f32 %v1518, %v1710
      %v1845 = vadd.f32 %v1519, %v1715
      %v1846 = vadd.f32 %v1520, %v1718
      %v1847 = vadd.f32 %v1521, %v1723
      %v1848 = vadd.f32 %v1522, %v1726
      %v1849 = vadd.f32 %v1523, %v1731
      %v1850 = vadd.f32 %v1524, %v1734
      %v1851 = vadd.f32 %v1525, %v1739
      %v1852 = vadd.f32 %v1526, %v1742
      %v1853 = vadd.f32 %v1527, %v1747
      %v1854 = vadd.f32 %v1528, %v1750
      %v1855 = vadd.f32 %v1529, %v1755
      %v1856 = vadd.f32 %v1530, %v1758
      %v1857 = vadd.f32 %v1531, %v1763
      %v1858 = vadd.f32 %v1532, %v1766
      %v1859 = vadd.f32 %v1533, %v1771
      %v1860 = vadd.f32 %v1534, %v1774
      %v1861 = vadd.f32 %v1535, %v1779
      %v1862 = vadd.f32 %v1536, %v1782
      %v1863 = vadd.f32 %v1537, %v1787
      %v1864 = vadd.f32 %v1538, %v1790
      %v1865 = vadd.f32 %v1539, %v1795
      %v1866 = vadd.f32 %v1540, %v1798
      %v1867 = vadd.f32 %v1541, %v1803
      %v1868 = vadd.f32 %v1542, %v1806
      %v1869 = vadd.f32 %v1543, %v1811
      %v1870 = vadd.f32 %v1544, %v1814
      %v1871 = vadd.f32 %v1545, %v1819
      %v1872 = vadd.f32 %v1546, %v1822
      %v1873 = vadd.f32 %v1547, %v1827
      %v1874 = vadd.f32 %v1548, %v1830
      %v1875 = vadd.f32 %v1549, %v1835
      %v1876 = vadd.f32 %v1550, %v1838
      %v1877 = vld [vmem:[#allocation2 + $0x14] sm:$0xff]
      %v1878 = vld [vmem:[#allocation2 + $0x1c] sm:$0xff]
      %v1879 = vld [vmem:[#allocation2 + $0x24] sm:$0xff]
      %v1880 = vld [vmem:[#allocation2 + $0x2c] sm:$0xff]
      %v1881 = vld [vmem:[#allocation2 + $0x34] sm:$0xff]
      %v1882 = vld [vmem:[#allocation2 + $0x3c] sm:$0xff]
      %v1883 = vld [vmem:[#allocation2 + $0x44] sm:$0xff]
      %v1884 = vld [vmem:[#allocation2 + $0x4c] sm:$0xff]
      %v1885 = vld [vmem:[#allocation2 + $0x54] sm:$0xff]
      %v1886 = vld [vmem:[#allocation2 + $0x5c] sm:$0xff]
      %v1887 = vld [vmem:[#allocation2 + $0x64] sm:$0xff]
      %v1888 = vld [vmem:[#allocation2 + $0x6c] sm:$0xff]
      %v1889 = vld [vmem:[#allocation2 + $0x74] sm:$0xff]
      %v1890 = vld [vmem:[#allocation2 + $0x7c] sm:$0xff]
      %v1891 = vld [vmem:[#allocation2 + $0x84] sm:$0xff]
      %v1892 = vld [vmem:[#allocation2 + $0x8c] sm:$0xff]
      %v1893 = vld [vmem:[#allocation2 + $0x94] sm:$0xff]
      %v1894 = vld [vmem:[#allocation2 + $0x9c] sm:$0xff]
      %v1895 = vld [vmem:[#allocation2 + $0xa4] sm:$0xff]
      %v1896 = vld [vmem:[#allocation2 + $0xac] sm:$0xff]
      %v1897 = vld [vmem:[#allocation2 + $0xb4] sm:$0xff]
      %v1898 = vld [vmem:[#allocation2 + $0xbc] sm:$0xff]
      %v1899 = vld [vmem:[#allocation2 + $0xc4] sm:$0xff]
      %v1900 = vld [vmem:[#allocation2 + $0xcc] sm:$0xff]
      %v1901 = vld [vmem:[#allocation2 + $0xd4] sm:$0xff]
      %v1902 = vld [vmem:[#allocation2 + $0xdc] sm:$0xff]
      %v1903 = vld [vmem:[#allocation2 + $0xe4] sm:$0xff]
      %v1904 = vld [vmem:[#allocation2 + $0xec] sm:$0xff]
      %v1905 = vld [vmem:[#allocation2 + $0xf4] sm:$0xff]
      %v1906 = vld [vmem:[#allocation2 + $0xfc] sm:$0xff]
      %v1907 = vld [vmem:[#allocation2 + $0x104] sm:$0xff]
      %v1908 = vld [vmem:[#allocation2 + $0x10c] sm:$0xff]
      %v1909 = vld [vmem:[#allocation2 + $0x114] sm:$0xff]
      %v1910 = vld [vmem:[#allocation2 + $0x11c] sm:$0xff]
      %v1911 = vld [vmem:[#allocation2 + $0x124] sm:$0xff]
      %v1912 = vld [vmem:[#allocation2 + $0x12c] sm:$0xff]
      %v1913 = vpack.c.bf16 %v1878, %v1877
      %v1914 = vpack.c.bf16 %v1880, %v1879
      %v1915 = vpack.c.bf16 %v1882, %v1881
      %v1916 = vpack.c.bf16 %v1884, %v1883
      %v1917 = vpack.c.bf16 %v1886, %v1885
      %v1918 = vpack.c.bf16 %v1888, %v1887
      %v1919 = vpack.c.bf16 %v1890, %v1889
      %v1920 = vpack.c.bf16 %v1892, %v1891
      %v1921 = vpack.c.bf16 %v1894, %v1893
      %v1922 = vpack.c.bf16 %v1896, %v1895
      %v1923 = vpack.c.bf16 %v1898, %v1897
      %v1924 = vpack.c.bf16 %v1900, %v1899
      %v1925 = vpack.c.bf16 %v1902, %v1901
      %v1926 = vpack.c.bf16 %v1904, %v1903
      %v1927 = vpack.c.bf16 %v1906, %v1905
      %v1928 = vpack.c.bf16 %v1908, %v1907
      %v1929 = vpack.c.bf16 %v1910, %v1909
      %v1930 = vpack.c.bf16 %v1912, %v1911
      %v1931 = vld [vmem:[%s1 + $0xf] sm:$0x7]
      %v1932 = vpack.c.bf16 %v1931, %v1931
      %v1934 = vsel %vm199, %v1913, 0
      %v1937 = vsel %vm199, %v1914, 0
      %v1940 = vsel %vm199, %v1915, 0
      %v1943 = vsel %vm199, %v1916, 0
      %v1946 = vsel %vm199, %v1917, 0
      %v1949 = vsel %vm199, %v1918, 0
      %v1952 = vsel %vm199, %v1919, 0
      %v1955 = vsel %vm199, %v1920, 0
      %v1958 = vsel %vm199, %v1921, 0
      %v1961 = vsel %vm199, %v1922, 0
      %v1964 = vsel %vm199, %v1923, 0
      %v1967 = vsel %vm199, %v1924, 0
      %v1970 = vsel %vm199, %v1925, 0
      %v1973 = vsel %vm199, %v1926, 0
      %v1976 = vsel %vm199, %v1927, 0
      %v1979 = vsel %vm199, %v1928, 0
      %v1982 = vsel %vm199, %v1929, 0
      %v1985 = vsel %vm199, %v1930, 0
      %v1988 = vand.u32 %v1932, %v484
      %1990 = vmatprep.subr.bf16.mxu0 0
      %1991 = vmatpush1.bf16.msra.mxu0 0
      %1992 = vmatprep.subr.bf16.mxu0 0
      %1993 = vmatpush1.bf16.msra.mxu0 0
      %1994 = vmatprep.subr.bf16.mxu0 0
      %1995 = vmatpush1.bf16.msra.mxu0 0
      %1996 = vmatprep.subr.bf16.mxu0 0
      %1997 = vmatpush1.bf16.msra.mxu0 0
      %1998 = vmatprep.subr.bf16.mxu0 0
      %1999 = vmatpush1.bf16.msra.mxu0 0
      %2000 = vmatprep.subr.bf16.mxu0 0
      %2001 = vmatpush1.bf16.msra.mxu0 0
      %2002 = vmatprep.subr.bf16.mxu0 0
      %2003 = vmatpush1.bf16.msra.mxu0 0
      %2004 = vmatprep.subr.bf16.mxu0 0
      %2005 = vmatpush1.bf16.msra.mxu0 %v1988
      %2006 = vmatprep.subr.bf16.mxu0 0
      %2007 = vmatpush2.bf16.msra.mxu0 0
      %2008 = vmatprep.subr.bf16.mxu0 0
      %2009 = vmatpush2.bf16.msra.mxu0 0
      %2010 = vmatprep.subr.bf16.mxu0 0
      %2011 = vmatpush2.bf16.msra.mxu0 0
      %2012 = vmatprep.subr.bf16.mxu0 0
      %2013 = vmatpush2.bf16.msra.mxu0 0
      %2014 = vmatprep.subr.bf16.mxu0 0
      %2015 = vmatpush2.bf16.msra.mxu0 0
      %2016 = vmatprep.subr.bf16.mxu0 0
      %2017 = vmatpush2.bf16.msra.mxu0 0
      %2018 = vmatprep.subr.bf16.mxu0 0
      %2019 = vmatpush2.bf16.msra.mxu0 0
      %2020 = vmatprep.subr.bf16.mxu0 0
      %2021 = vmatpush2.bf16.msra.mxu0 0
      %2022 = vmatprep.mubr.bf16.mxu0 0
      %2023 = vmatmul.mubr.bf16.gmra.mxu0 %v1934
      %v2024 = vpop.f32.mrf.mxu0
      %v2025 = vadd.f32 0.0, %v2024
      %v2026 = vpop.f32.mrf.mxu0
      %v2027 = vpop.f32.mrf.mxu0
      %v2028 = vadd.f32 0.0, %v2027
      %v2029 = vpop.f32.mrf.mxu0
      %2030 = vmatprep.mubr.bf16.mxu0 0
      %2031 = vmatmul.mubr.bf16.gmra.mxu0 %v1937
      %v2032 = vpop.f32.mrf.mxu0
      %v2033 = vadd.f32 0.0, %v2032
      %v2034 = vpop.f32.mrf.mxu0
      %v2035 = vpop.f32.mrf.mxu0
      %v2036 = vadd.f32 0.0, %v2035
      %v2037 = vpop.f32.mrf.mxu0
      %2038 = vmatprep.mubr.bf16.mxu0 0
      %2039 = vmatmul.mubr.bf16.gmra.mxu0 %v1940
      %v2040 = vpop.f32.mrf.mxu0
      %v2041 = vadd.f32 0.0, %v2040
      %v2042 = vpop.f32.mrf.mxu0
      %v2043 = vpop.f32.mrf.mxu0
      %v2044 = vadd.f32 0.0, %v2043
      %v2045 = vpop.f32.mrf.mxu0
      %2046 = vmatprep.mubr.bf16.mxu0 0
      %2047 = vmatmul.mubr.bf16.gmra.mxu0 %v1943
      %v2048 = vpop.f32.mrf.mxu0
      %v2049 = vadd.f32 0.0, %v2048
      %v2050 = vpop.f32.mrf.mxu0
      %v2051 = vpop.f32.mrf.mxu0
      %v2052 = vadd.f32 0.0, %v2051
      %v2053 = vpop.f32.mrf.mxu0
      %2054 = vmatprep.mubr.bf16.mxu0 0
      %2055 = vmatmul.mubr.bf16.gmra.mxu0 %v1946
      %v2056 = vpop.f32.mrf.mxu0
      %v2057 = vadd.f32 0.0, %v2056
      %v2058 = vpop.f32.mrf.mxu0
      %v2059 = vpop.f32.mrf.mxu0
      %v2060 = vadd.f32 0.0, %v2059
      %v2061 = vpop.f32.mrf.mxu0
      %2062 = vmatprep.mubr.bf16.mxu0 0
      %2063 = vmatmul.mubr.bf16.gmra.mxu0 %v1949
      %v2064 = vpop.f32.mrf.mxu0
      %v2065 = vadd.f32 0.0, %v2064
      %v2066 = vpop.f32.mrf.mxu0
      %v2067 = vpop.f32.mrf.mxu0
      %v2068 = vadd.f32 0.0, %v2067
      %v2069 = vpop.f32.mrf.mxu0
      %2070 = vmatprep.mubr.bf16.mxu0 0
      %2071 = vmatmul.mubr.bf16.gmra.mxu0 %v1952
      %v2072 = vpop.f32.mrf.mxu0
      %v2073 = vadd.f32 0.0, %v2072
      %v2074 = vpop.f32.mrf.mxu0
      %v2075 = vpop.f32.mrf.mxu0
      %v2076 = vadd.f32 0.0, %v2075
      %v2077 = vpop.f32.mrf.mxu0
      %2078 = vmatprep.mubr.bf16.mxu0 0
      %2079 = vmatmul.mubr.bf16.gmra.mxu0 %v1955
      %v2080 = vpop.f32.mrf.mxu0
      %v2081 = vadd.f32 0.0, %v2080
      %v2082 = vpop.f32.mrf.mxu0
      %v2083 = vpop.f32.mrf.mxu0
      %v2084 = vadd.f32 0.0, %v2083
      %v2085 = vpop.f32.mrf.mxu0
      %2086 = vmatprep.mubr.bf16.mxu0 0
      %2087 = vmatmul.mubr.bf16.gmra.mxu0 %v1958
      %v2088 = vpop.f32.mrf.mxu0
      %v2089 = vadd.f32 0.0, %v2088
      %v2090 = vpop.f32.mrf.mxu0
      %v2091 = vpop.f32.mrf.mxu0
      %v2092 = vadd.f32 0.0, %v2091
      %v2093 = vpop.f32.mrf.mxu0
      %2094 = vmatprep.mubr.bf16.mxu0 0
      %2095 = vmatmul.mubr.bf16.gmra.mxu0 %v1961
      %v2096 = vpop.f32.mrf.mxu0
      %v2097 = vadd.f32 0.0, %v2096
      %v2098 = vpop.f32.mrf.mxu0
      %v2099 = vpop.f32.mrf.mxu0
      %v2100 = vadd.f32 0.0, %v2099
      %v2101 = vpop.f32.mrf.mxu0
      %2102 = vmatprep.mubr.bf16.mxu0 0
      %2103 = vmatmul.mubr.bf16.gmra.mxu0 %v1964
      %v2104 = vpop.f32.mrf.mxu0
      %v2105 = vadd.f32 0.0, %v2104
      %v2106 = vpop.f32.mrf.mxu0
      %v2107 = vpop.f32.mrf.mxu0
      %v2108 = vadd.f32 0.0, %v2107
      %v2109 = vpop.f32.mrf.mxu0
      %2110 = vmatprep.mubr.bf16.mxu0 0
      %2111 = vmatmul.mubr.bf16.gmra.mxu0 %v1967
      %v2112 = vpop.f32.mrf.mxu0
      %v2113 = vadd.f32 0.0, %v2112
      %v2114 = vpop.f32.mrf.mxu0
      %v2115 = vpop.f32.mrf.mxu0
      %v2116 = vadd.f32 0.0, %v2115
      %v2117 = vpop.f32.mrf.mxu0
      %2118 = vmatprep.mubr.bf16.mxu0 0
      %2119 = vmatmul.mubr.bf16.gmra.mxu0 %v1970
      %v2120 = vpop.f32.mrf.mxu0
      %v2121 = vadd.f32 0.0, %v2120
      %v2122 = vpop.f32.mrf.mxu0
      %v2123 = vpop.f32.mrf.mxu0
      %v2124 = vadd.f32 0.0, %v2123
      %v2125 = vpop.f32.mrf.mxu0
      %2126 = vmatprep.mubr.bf16.mxu0 0
      %2127 = vmatmul.mubr.bf16.gmra.mxu0 %v1973
      %v2128 = vpop.f32.mrf.mxu0
      %v2129 = vadd.f32 0.0, %v2128
      %v2130 = vpop.f32.mrf.mxu0
      %v2131 = vpop.f32.mrf.mxu0
      %v2132 = vadd.f32 0.0, %v2131
      %v2133 = vpop.f32.mrf.mxu0
      %2134 = vmatprep.mubr.bf16.mxu0 0
      %2135 = vmatmul.mubr.bf16.gmra.mxu0 %v1976
      %v2136 = vpop.f32.mrf.mxu0
      %v2137 = vadd.f32 0.0, %v2136
      %v2138 = vpop.f32.mrf.mxu0
      %v2139 = vpop.f32.mrf.mxu0
      %v2140 = vadd.f32 0.0, %v2139
      %v2141 = vpop.f32.mrf.mxu0
      %2142 = vmatprep.mubr.bf16.mxu0 0
      %2143 = vmatmul.mubr.bf16.gmra.mxu0 %v1979
      %v2144 = vpop.f32.mrf.mxu0
      %v2145 = vadd.f32 0.0, %v2144
      %v2146 = vpop.f32.mrf.mxu0
      %v2147 = vpop.f32.mrf.mxu0
      %v2148 = vadd.f32 0.0, %v2147
      %v2149 = vpop.f32.mrf.mxu0
      %2150 = vmatprep.mubr.bf16.mxu0 0
      %2151 = vmatmul.mubr.bf16.gmra.mxu0 %v1982
      %v2152 = vpop.f32.mrf.mxu0
      %v2153 = vadd.f32 0.0, %v2152
      %v2154 = vpop.f32.mrf.mxu0
      %v2155 = vpop.f32.mrf.mxu0
      %v2156 = vadd.f32 0.0, %v2155
      %v2157 = vpop.f32.mrf.mxu0
      %2158 = vmatprep.mubr.bf16.mxu0 0
      %2159 = vmatmul.mubr.bf16.gmra.mxu0 %v1985
      %v2160 = vpop.f32.mrf.mxu0
      %v2161 = vadd.f32 0.0, %v2160
      %v2162 = vpop.f32.mrf.mxu0
      %v2163 = vpop.f32.mrf.mxu0
      %v2164 = vadd.f32 0.0, %v2163
      %v2165 = vpop.f32.mrf.mxu0
      %2166 = vdwg.mxu0
      %v2167 = vadd.f32 %v1841, %v2025
      %v2168 = vadd.f32 %v1842, %v2028
      %v2169 = vadd.f32 %v1843, %v2033
      %v2170 = vadd.f32 %v1844, %v2036
      %v2171 = vadd.f32 %v1845, %v2041
      %v2172 = vadd.f32 %v1846, %v2044
      %v2173 = vadd.f32 %v1847, %v2049
      %v2174 = vadd.f32 %v1848, %v2052
      %v2175 = vadd.f32 %v1849, %v2057
      %v2176 = vadd.f32 %v1850, %v2060
      %v2177 = vadd.f32 %v1851, %v2065
      %v2178 = vadd.f32 %v1852, %v2068
      %v2179 = vadd.f32 %v1853, %v2073
      %v2180 = vadd.f32 %v1854, %v2076
      %v2181 = vadd.f32 %v1855, %v2081
      %v2182 = vadd.f32 %v1856, %v2084
      %v2183 = vadd.f32 %v1857, %v2089
      %v2184 = vadd.f32 %v1858, %v2092
      %v2185 = vadd.f32 %v1859, %v2097
      %v2186 = vadd.f32 %v1860, %v2100
      %v2187 = vadd.f32 %v1861, %v2105
      %v2188 = vadd.f32 %v1862, %v2108
      %v2189 = vadd.f32 %v1863, %v2113
      %v2190 = vadd.f32 %v1864, %v2116
      %v2191 = vadd.f32 %v1865, %v2121
      %v2192 = vadd.f32 %v1866, %v2124
      %v2193 = vadd.f32 %v1867, %v2129
      %v2194 = vadd.f32 %v1868, %v2132
      %v2195 = vadd.f32 %v1869, %v2137
      %v2196 = vadd.f32 %v1870, %v2140
      %v2197 = vadd.f32 %v1871, %v2145
      %v2198 = vadd.f32 %v1872, %v2148
      %v2199 = vadd.f32 %v1873, %v2153
      %v2200 = vadd.f32 %v1874, %v2156
      %v2201 = vadd.f32 %v1875, %v2161
      %v2202 = vadd.f32 %v1876, %v2164
      %v2203 = vld [vmem:[#allocation2 + $0x24] sm:$0xff]
      %v2204 = vld [vmem:[#allocation2 + $0x2c] sm:$0xff]
      %v2205 = vld [vmem:[#allocation2 + $0x34] sm:$0xff]
      %v2206 = vld [vmem:[#allocation2 + $0x3c] sm:$0xff]
      %v2207 = vld [vmem:[#allocation2 + $0x44] sm:$0xff]
      %v2208 = vld [vmem:[#allocation2 + $0x4c] sm:$0xff]
      %v2209 = vld [vmem:[#allocation2 + $0x54] sm:$0xff]
      %v2210 = vld [vmem:[#allocation2 + $0x5c] sm:$0xff]
      %v2211 = vld [vmem:[#allocation2 + $0x64] sm:$0xff]
      %v2212 = vld [vmem:[#allocation2 + $0x6c] sm:$0xff]
      %v2213 = vld [vmem:[#allocation2 + $0x74] sm:$0xff]
      %v2214 = vld [vmem:[#allocation2 + $0x7c] sm:$0xff]
      %v2215 = vld [vmem:[#allocation2 + $0x84] sm:$0xff]
      %v2216 = vld [vmem:[#allocation2 + $0x8c] sm:$0xff]
      %v2217 = vld [vmem:[#allocation2 + $0x94] sm:$0xff]
      %v2218 = vld [vmem:[#allocation2 + $0x9c] sm:$0xff]
      %v2219 = vld [vmem:[#allocation2 + $0xa4] sm:$0xff]
      %v2220 = vld [vmem:[#allocation2 + $0xac] sm:$0xff]
      %v2221 = vld [vmem:[#allocation2 + $0xb4] sm:$0xff]
      %v2222 = vld [vmem:[#allocation2 + $0xbc] sm:$0xff]
      %v2223 = vld [vmem:[#allocation2 + $0xc4] sm:$0xff]
      %v2224 = vld [vmem:[#allocation2 + $0xcc] sm:$0xff]
      %v2225 = vld [vmem:[#allocation2 + $0xd4] sm:$0xff]
      %v2226 = vld [vmem:[#allocation2 + $0xdc] sm:$0xff]
      %v2227 = vld [vmem:[#allocation2 + $0xe4] sm:$0xff]
      %v2228 = vld [vmem:[#allocation2 + $0xec] sm:$0xff]
      %v2229 = vld [vmem:[#allocation2 + $0xf4] sm:$0xff]
      %v2230 = vld [vmem:[#allocation2 + $0xfc] sm:$0xff]
      %v2231 = vld [vmem:[#allocation2 + $0x104] sm:$0xff]
      %v2232 = vld [vmem:[#allocation2 + $0x10c] sm:$0xff]
      %v2233 = vld [vmem:[#allocation2 + $0x114] sm:$0xff]
      %v2234 = vld [vmem:[#allocation2 + $0x11c] sm:$0xff]
      %v2235 = vld [vmem:[#allocation2 + $0x124] sm:$0xff]
      %v2236 = vld [vmem:[#allocation2 + $0x12c] sm:$0xff]
      %v2237 = vld [vmem:[#allocation2 + $0x134] sm:$0xff]
      %v2238 = vld [vmem:[#allocation2 + $0x13c] sm:$0xff]
      %v2239 = vpack.c.bf16 %v2204, %v2203
      %v2240 = vpack.c.bf16 %v2206, %v2205
      %v2241 = vpack.c.bf16 %v2208, %v2207
      %v2242 = vpack.c.bf16 %v2210, %v2209
      %v2243 = vpack.c.bf16 %v2212, %v2211
      %v2244 = vpack.c.bf16 %v2214, %v2213
      %v2245 = vpack.c.bf16 %v2216, %v2215
      %v2246 = vpack.c.bf16 %v2218, %v2217
      %v2247 = vpack.c.bf16 %v2220, %v2219
      %v2248 = vpack.c.bf16 %v2222, %v2221
      %v2249 = vpack.c.bf16 %v2224, %v2223
      %v2250 = vpack.c.bf16 %v2226, %v2225
      %v2251 = vpack.c.bf16 %v2228, %v2227
      %v2252 = vpack.c.bf16 %v2230, %v2229
      %v2253 = vpack.c.bf16 %v2232, %v2231
      %v2254 = vpack.c.bf16 %v2234, %v2233
      %v2255 = vpack.c.bf16 %v2236, %v2235
      %v2256 = vpack.c.bf16 %v2238, %v2237
      %v2257 = vld [vmem:[%s1 + $0x12] sm:$0x7]
      %v2258 = vpack.c.bf16 %v2257, %v2257
      %v2260 = vsel %vm199, %v2239, 0
      %v2263 = vsel %vm199, %v2240, 0
      %v2266 = vsel %vm199, %v2241, 0
      %v2269 = vsel %vm199, %v2242, 0
      %v2272 = vsel %vm199, %v2243, 0
      %v2275 = vsel %vm199, %v2244, 0
      %v2278 = vsel %vm199, %v2245, 0
      %v2281 = vsel %vm199, %v2246, 0
      %v2284 = vsel %vm199, %v2247, 0
      %v2287 = vsel %vm199, %v2248, 0
      %v2290 = vsel %vm199, %v2249, 0
      %v2293 = vsel %vm199, %v2250, 0
      %v2296 = vsel %vm199, %v2251, 0
      %v2299 = vsel %vm199, %v2252, 0
      %v2302 = vsel %vm199, %v2253, 0
      %v2305 = vsel %vm199, %v2254, 0
      %v2308 = vsel %vm199, %v2255, 0
      %v2311 = vsel %vm199, %v2256, 0
      %v2314 = vand.u32 %v2258, %v484
      %2316 = vmatprep.subr.bf16.mxu0 0
      %2317 = vmatpush1.bf16.msra.mxu0 0
      %2318 = vmatprep.subr.bf16.mxu0 0
      %2319 = vmatpush1.bf16.msra.mxu0 0
      %2320 = vmatprep.subr.bf16.mxu0 0
      %2321 = vmatpush1.bf16.msra.mxu0 0
      %2322 = vmatprep.subr.bf16.mxu0 0
      %2323 = vmatpush1.bf16.msra.mxu0 0
      %2324 = vmatprep.subr.bf16.mxu0 0
      %2325 = vmatpush1.bf16.msra.mxu0 0
      %2326 = vmatprep.subr.bf16.mxu0 0
      %2327 = vmatpush1.bf16.msra.mxu0 0
      %2328 = vmatprep.subr.bf16.mxu0 0
      %2329 = vmatpush1.bf16.msra.mxu0 0
      %2330 = vmatprep.subr.bf16.mxu0 0
      %2331 = vmatpush1.bf16.msra.mxu0 %v2314
      %2332 = vmatprep.subr.bf16.mxu0 0
      %2333 = vmatpush2.bf16.msra.mxu0 0
      %2334 = vmatprep.subr.bf16.mxu0 0
      %2335 = vmatpush2.bf16.msra.mxu0 0
      %2336 = vmatprep.subr.bf16.mxu0 0
      %2337 = vmatpush2.bf16.msra.mxu0 0
      %2338 = vmatprep.subr.bf16.mxu0 0
      %2339 = vmatpush2.bf16.msra.mxu0 0
      %2340 = vmatprep.subr.bf16.mxu0 0
      %2341 = vmatpush2.bf16.msra.mxu0 0
      %2342 = vmatprep.subr.bf16.mxu0 0
      %2343 = vmatpush2.bf16.msra.mxu0 0
      %2344 = vmatprep.subr.bf16.mxu0 0
      %2345 = vmatpush2.bf16.msra.mxu0 0
      %2346 = vmatprep.subr.bf16.mxu0 0
      %2347 = vmatpush2.bf16.msra.mxu0 0
      %2348 = vmatprep.mubr.bf16.mxu0 0
      %2349 = vmatmul.mubr.bf16.gmra.mxu0 %v2260
      %v2350 = vpop.f32.mrf.mxu0
      %v2351 = vadd.f32 0.0, %v2350
      %v2352 = vpop.f32.mrf.mxu0
      %v2353 = vpop.f32.mrf.mxu0
      %v2354 = vadd.f32 0.0, %v2353
      %v2355 = vpop.f32.mrf.mxu0
      %2356 = vmatprep.mubr.bf16.mxu0 0
      %2357 = vmatmul.mubr.bf16.gmra.mxu0 %v2263
      %v2358 = vpop.f32.mrf.mxu0
      %v2359 = vadd.f32 0.0, %v2358
      %v2360 = vpop.f32.mrf.mxu0
      %v2361 = vpop.f32.mrf.mxu0
      %v2362 = vadd.f32 0.0, %v2361
      %v2363 = vpop.f32.mrf.mxu0
      %2364 = vmatprep.mubr.bf16.mxu0 0
      %2365 = vmatmul.mubr.bf16.gmra.mxu0 %v2266
      %v2366 = vpop.f32.mrf.mxu0
      %v2367 = vadd.f32 0.0, %v2366
      %v2368 = vpop.f32.mrf.mxu0
      %v2369 = vpop.f32.mrf.mxu0
      %v2370 = vadd.f32 0.0, %v2369
      %v2371 = vpop.f32.mrf.mxu0
      %2372 = vmatprep.mubr.bf16.mxu0 0
      %2373 = vmatmul.mubr.bf16.gmra.mxu0 %v2269
      %v2374 = vpop.f32.mrf.mxu0
      %v2375 = vadd.f32 0.0, %v2374
      %v2376 = vpop.f32.mrf.mxu0
      %v2377 = vpop.f32.mrf.mxu0
      %v2378 = vadd.f32 0.0, %v2377
      %v2379 = vpop.f32.mrf.mxu0
      %2380 = vmatprep.mubr.bf16.mxu0 0
      %2381 = vmatmul.mubr.bf16.gmra.mxu0 %v2272
      %v2382 = vpop.f32.mrf.mxu0
      %v2383 = vadd.f32 0.0, %v2382
      %v2384 = vpop.f32.mrf.mxu0
      %v2385 = vpop.f32.mrf.mxu0
      %v2386 = vadd.f32 0.0, %v2385
      %v2387 = vpop.f32.mrf.mxu0
      %2388 = vmatprep.mubr.bf16.mxu0 0
      %2389 = vmatmul.mubr.bf16.gmra.mxu0 %v2275
      %v2390 = vpop.f32.mrf.mxu0
      %v2391 = vadd.f32 0.0, %v2390
      %v2392 = vpop.f32.mrf.mxu0
      %v2393 = vpop.f32.mrf.mxu0
      %v2394 = vadd.f32 0.0, %v2393
      %v2395 = vpop.f32.mrf.mxu0
      %2396 = vmatprep.mubr.bf16.mxu0 0
      %2397 = vmatmul.mubr.bf16.gmra.mxu0 %v2278
      %v2398 = vpop.f32.mrf.mxu0
      %v2399 = vadd.f32 0.0, %v2398
      %v2400 = vpop.f32.mrf.mxu0
      %v2401 = vpop.f32.mrf.mxu0
      %v2402 = vadd.f32 0.0, %v2401
      %v2403 = vpop.f32.mrf.mxu0
      %2404 = vmatprep.mubr.bf16.mxu0 0
      %2405 = vmatmul.mubr.bf16.gmra.mxu0 %v2281
      %v2406 = vpop.f32.mrf.mxu0
      %v2407 = vadd.f32 0.0, %v2406
      %v2408 = vpop.f32.mrf.mxu0
      %v2409 = vpop.f32.mrf.mxu0
      %v2410 = vadd.f32 0.0, %v2409
      %v2411 = vpop.f32.mrf.mxu0
      %2412 = vmatprep.mubr.bf16.mxu0 0
      %2413 = vmatmul.mubr.bf16.gmra.mxu0 %v2284
      %v2414 = vpop.f32.mrf.mxu0
      %v2415 = vadd.f32 0.0, %v2414
      %v2416 = vpop.f32.mrf.mxu0
      %v2417 = vpop.f32.mrf.mxu0
      %v2418 = vadd.f32 0.0, %v2417
      %v2419 = vpop.f32.mrf.mxu0
      %2420 = vmatprep.mubr.bf16.mxu0 0
      %2421 = vmatmul.mubr.bf16.gmra.mxu0 %v2287
      %v2422 = vpop.f32.mrf.mxu0
      %v2423 = vadd.f32 0.0, %v2422
      %v2424 = vpop.f32.mrf.mxu0
      %v2425 = vpop.f32.mrf.mxu0
      %v2426 = vadd.f32 0.0, %v2425
      %v2427 = vpop.f32.mrf.mxu0
      %2428 = vmatprep.mubr.bf16.mxu0 0
      %2429 = vmatmul.mubr.bf16.gmra.mxu0 %v2290
      %v2430 = vpop.f32.mrf.mxu0
      %v2431 = vadd.f32 0.0, %v2430
      %v2432 = vpop.f32.mrf.mxu0
      %v2433 = vpop.f32.mrf.mxu0
      %v2434 = vadd.f32 0.0, %v2433
      %v2435 = vpop.f32.mrf.mxu0
      %2436 = vmatprep.mubr.bf16.mxu0 0
      %2437 = vmatmul.mubr.bf16.gmra.mxu0 %v2293
      %v2438 = vpop.f32.mrf.mxu0
      %v2439 = vadd.f32 0.0, %v2438
      %v2440 = vpop.f32.mrf.mxu0
      %v2441 = vpop.f32.mrf.mxu0
      %v2442 = vadd.f32 0.0, %v2441
      %v2443 = vpop.f32.mrf.mxu0
      %2444 = vmatprep.mubr.bf16.mxu0 0
      %2445 = vmatmul.mubr.bf16.gmra.mxu0 %v2296
      %v2446 = vpop.f32.mrf.mxu0
      %v2447 = vadd.f32 0.0, %v2446
      %v2448 = vpop.f32.mrf.mxu0
      %v2449 = vpop.f32.mrf.mxu0
      %v2450 = vadd.f32 0.0, %v2449
      %v2451 = vpop.f32.mrf.mxu0
      %2452 = vmatprep.mubr.bf16.mxu0 0
      %2453 = vmatmul.mubr.bf16.gmra.mxu0 %v2299
      %v2454 = vpop.f32.mrf.mxu0
      %v2455 = vadd.f32 0.0, %v2454
      %v2456 = vpop.f32.mrf.mxu0
      %v2457 = vpop.f32.mrf.mxu0
      %v2458 = vadd.f32 0.0, %v2457
      %v2459 = vpop.f32.mrf.mxu0
      %2460 = vmatprep.mubr.bf16.mxu0 0
      %2461 = vmatmul.mubr.bf16.gmra.mxu0 %v2302
      %v2462 = vpop.f32.mrf.mxu0
      %v2463 = vadd.f32 0.0, %v2462
      %v2464 = vpop.f32.mrf.mxu0
      %v2465 = vpop.f32.mrf.mxu0
      %v2466 = vadd.f32 0.0, %v2465
      %v2467 = vpop.f32.mrf.mxu0
      %2468 = vmatprep.mubr.bf16.mxu0 0
      %2469 = vmatmul.mubr.bf16.gmra.mxu0 %v2305
      %v2470 = vpop.f32.mrf.mxu0
      %v2471 = vadd.f32 0.0, %v2470
      %v2472 = vpop.f32.mrf.mxu0
      %v2473 = vpop.f32.mrf.mxu0
      %v2474 = vadd.f32 0.0, %v2473
      %v2475 = vpop.f32.mrf.mxu0
      %2476 = vmatprep.mubr.bf16.mxu0 0
      %2477 = vmatmul.mubr.bf16.gmra.mxu0 %v2308
      %v2478 = vpop.f32.mrf.mxu0
      %v2479 = vadd.f32 0.0, %v2478
      %v2480 = vpop.f32.mrf.mxu0
      %v2481 = vpop.f32.mrf.mxu0
      %v2482 = vadd.f32 0.0, %v2481
      %v2483 = vpop.f32.mrf.mxu0
      %2484 = vmatprep.mubr.bf16.mxu0 0
      %2485 = vmatmul.mubr.bf16.gmra.mxu0 %v2311
      %v2486 = vpop.f32.mrf.mxu0
      %v2487 = vadd.f32 0.0, %v2486
      %v2488 = vpop.f32.mrf.mxu0
      %v2489 = vpop.f32.mrf.mxu0
      %v2490 = vadd.f32 0.0, %v2489
      %v2491 = vpop.f32.mrf.mxu0
      %2492 = vdwg.mxu0
      %v2493 = vadd.f32 %v2167, %v2351
      %v2494 = vadd.f32 %v2168, %v2354
      %v2495 = vadd.f32 %v2169, %v2359
      %v2496 = vadd.f32 %v2170, %v2362
      %v2497 = vadd.f32 %v2171, %v2367
      %v2498 = vadd.f32 %v2172, %v2370
      %v2499 = vadd.f32 %v2173, %v2375
      %v2500 = vadd.f32 %v2174, %v2378
      %v2501 = vadd.f32 %v2175, %v2383
      %v2502 = vadd.f32 %v2176, %v2386
      %v2503 = vadd.f32 %v2177, %v2391
      %v2504 = vadd.f32 %v2178, %v2394
      %v2505 = vadd.f32 %v2179, %v2399
      %v2506 = vadd.f32 %v2180, %v2402
      %v2507 = vadd.f32 %v2181, %v2407
      %v2508 = vadd.f32 %v2182, %v2410
      %v2509 = vadd.f32 %v2183, %v2415
      %v2510 = vadd.f32 %v2184, %v2418
      %v2511 = vadd.f32 %v2185, %v2423
      %v2512 = vadd.f32 %v2186, %v2426
      %v2513 = vadd.f32 %v2187, %v2431
      %v2514 = vadd.f32 %v2188, %v2434
      %v2515 = vadd.f32 %v2189, %v2439
      %v2516 = vadd.f32 %v2190, %v2442
      %v2517 = vadd.f32 %v2191, %v2447
      %v2518 = vadd.f32 %v2192, %v2450
      %v2519 = vadd.f32 %v2193, %v2455
      %v2520 = vadd.f32 %v2194, %v2458
      %v2521 = vadd.f32 %v2195, %v2463
      %v2522 = vadd.f32 %v2196, %v2466
      %v2523 = vadd.f32 %v2197, %v2471
      %v2524 = vadd.f32 %v2198, %v2474
      %v2525 = vadd.f32 %v2199, %v2479
      %v2526 = vadd.f32 %v2200, %v2482
      %v2527 = vadd.f32 %v2201, %v2487
      %v2528 = vadd.f32 %v2202, %v2490
      %v2529 = vld [vmem:[#allocation2 + $0x25] sm:$0xff]
      %v2530 = vld [vmem:[#allocation2 + $0x2d] sm:$0xff]
      %v2531 = vld [vmem:[#allocation2 + $0x35] sm:$0xff]
      %v2532 = vld [vmem:[#allocation2 + $0x3d] sm:$0xff]
      %v2533 = vld [vmem:[#allocation2 + $0x45] sm:$0xff]
      %v2534 = vld [vmem:[#allocation2 + $0x4d] sm:$0xff]
      %v2535 = vld [vmem:[#allocation2 + $0x55] sm:$0xff]
      %v2536 = vld [vmem:[#allocation2 + $0x5d] sm:$0xff]
      %v2537 = vld [vmem:[#allocation2 + $0x65] sm:$0xff]
      %v2538 = vld [vmem:[#allocation2 + $0x6d] sm:$0xff]
      %v2539 = vld [vmem:[#allocation2 + $0x75] sm:$0xff]
      %v2540 = vld [vmem:[#allocation2 + $0x7d] sm:$0xff]
      %v2541 = vld [vmem:[#allocation2 + $0x85] sm:$0xff]
      %v2542 = vld [vmem:[#allocation2 + $0x8d] sm:$0xff]
      %v2543 = vld [vmem:[#allocation2 + $0x95] sm:$0xff]
      %v2544 = vld [vmem:[#allocation2 + $0x9d] sm:$0xff]
      %v2545 = vld [vmem:[#allocation2 + $0xa5] sm:$0xff]
      %v2546 = vld [vmem:[#allocation2 + $0xad] sm:$0xff]
      %v2547 = vld [vmem:[#allocation2 + $0xb5] sm:$0xff]
      %v2548 = vld [vmem:[#allocation2 + $0xbd] sm:$0xff]
      %v2549 = vld [vmem:[#allocation2 + $0xc5] sm:$0xff]
      %v2550 = vld [vmem:[#allocation2 + $0xcd] sm:$0xff]
      %v2551 = vld [vmem:[#allocation2 + $0xd5] sm:$0xff]
      %v2552 = vld [vmem:[#allocation2 + $0xdd] sm:$0xff]
      %v2553 = vld [vmem:[#allocation2 + $0xe5] sm:$0xff]
      %v2554 = vld [vmem:[#allocation2 + $0xed] sm:$0xff]
      %v2555 = vld [vmem:[#allocation2 + $0xf5] sm:$0xff]
      %v2556 = vld [vmem:[#allocation2 + $0xfd] sm:$0xff]
      %v2557 = vld [vmem:[#allocation2 + $0x105] sm:$0xff]
      %v2558 = vld [vmem:[#allocation2 + $0x10d] sm:$0xff]
      %v2559 = vld [vmem:[#allocation2 + $0x115] sm:$0xff]
      %v2560 = vld [vmem:[#allocation2 + $0x11d] sm:$0xff]
      %v2561 = vld [vmem:[#allocation2 + $0x125] sm:$0xff]
      %v2562 = vld [vmem:[#allocation2 + $0x12d] sm:$0xff]
      %v2563 = vld [vmem:[#allocation2 + $0x135] sm:$0xff]
      %v2564 = vld [vmem:[#allocation2 + $0x13d] sm:$0xff]
      %v2565 = vpack.c.bf16 %v2530, %v2529
      %v2566 = vpack.c.bf16 %v2532, %v2531
      %v2567 = vpack.c.bf16 %v2534, %v2533
      %v2568 = vpack.c.bf16 %v2536, %v2535
      %v2569 = vpack.c.bf16 %v2538, %v2537
      %v2570 = vpack.c.bf16 %v2540, %v2539
      %v2571 = vpack.c.bf16 %v2542, %v2541
      %v2572 = vpack.c.bf16 %v2544, %v2543
      %v2573 = vpack.c.bf16 %v2546, %v2545
      %v2574 = vpack.c.bf16 %v2548, %v2547
      %v2575 = vpack.c.bf16 %v2550, %v2549
      %v2576 = vpack.c.bf16 %v2552, %v2551
      %v2577 = vpack.c.bf16 %v2554, %v2553
      %v2578 = vpack.c.bf16 %v2556, %v2555
      %v2579 = vpack.c.bf16 %v2558, %v2557
      %v2580 = vpack.c.bf16 %v2560, %v2559
      %v2581 = vpack.c.bf16 %v2562, %v2561
      %v2582 = vpack.c.bf16 %v2564, %v2563
      %v2583 = vld [vmem:[%s1 + $0x15] sm:$0x7]
      %v2584 = vpack.c.bf16 %v2583, %v2583
      %v2586 = vsel %vm199, %v2565, 0
      %v2589 = vsel %vm199, %v2566, 0
      %v2592 = vsel %vm199, %v2567, 0
      %v2595 = vsel %vm199, %v2568, 0
      %v2598 = vsel %vm199, %v2569, 0
      %v2601 = vsel %vm199, %v2570, 0
      %v2604 = vsel %vm199, %v2571, 0
      %v2607 = vsel %vm199, %v2572, 0
      %v2610 = vsel %vm199, %v2573, 0
      %v2613 = vsel %vm199, %v2574, 0
      %v2616 = vsel %vm199, %v2575, 0
      %v2619 = vsel %vm199, %v2576, 0
      %v2622 = vsel %vm199, %v2577, 0
      %v2625 = vsel %vm199, %v2578, 0
      %v2628 = vsel %vm199, %v2579, 0
      %v2631 = vsel %vm199, %v2580, 0
      %v2634 = vsel %vm199, %v2581, 0
      %v2637 = vsel %vm199, %v2582, 0
      %v2640 = vand.u32 %v2584, %v484
      %2642 = vmatprep.subr.bf16.mxu0 0
      %2643 = vmatpush1.bf16.msra.mxu0 0
      %2644 = vmatprep.subr.bf16.mxu0 0
      %2645 = vmatpush1.bf16.msra.mxu0 0
      %2646 = vmatprep.subr.bf16.mxu0 0
      %2647 = vmatpush1.bf16.msra.mxu0 0
      %2648 = vmatprep.subr.bf16.mxu0 0
      %2649 = vmatpush1.bf16.msra.mxu0 0
      %2650 = vmatprep.subr.bf16.mxu0 0
      %2651 = vmatpush1.bf16.msra.mxu0 0
      %2652 = vmatprep.subr.bf16.mxu0 0
      %2653 = vmatpush1.bf16.msra.mxu0 0
      %2654 = vmatprep.subr.bf16.mxu0 0
      %2655 = vmatpush1.bf16.msra.mxu0 0
      %2656 = vmatprep.subr.bf16.mxu0 0
      %2657 = vmatpush1.bf16.msra.mxu0 %v2640
      %2658 = vmatprep.subr.bf16.mxu0 0
      %2659 = vmatpush2.bf16.msra.mxu0 0
      %2660 = vmatprep.subr.bf16.mxu0 0
      %2661 = vmatpush2.bf16.msra.mxu0 0
      %2662 = vmatprep.subr.bf16.mxu0 0
      %2663 = vmatpush2.bf16.msra.mxu0 0
      %2664 = vmatprep.subr.bf16.mxu0 0
      %2665 = vmatpush2.bf16.msra.mxu0 0
      %2666 = vmatprep.subr.bf16.mxu0 0
      %2667 = vmatpush2.bf16.msra.mxu0 0
      %2668 = vmatprep.subr.bf16.mxu0 0
      %2669 = vmatpush2.bf16.msra.mxu0 0
      %2670 = vmatprep.subr.bf16.mxu0 0
      %2671 = vmatpush2.bf16.msra.mxu0 0
      %2672 = vmatprep.subr.bf16.mxu0 0
      %2673 = vmatpush2.bf16.msra.mxu0 0
      %2674 = vmatprep.mubr.bf16.mxu0 0
      %2675 = vmatmul.mubr.bf16.gmra.mxu0 %v2586
      %v2676 = vpop.f32.mrf.mxu0
      %v2677 = vadd.f32 0.0, %v2676
      %v2678 = vpop.f32.mrf.mxu0
      %v2679 = vpop.f32.mrf.mxu0
      %v2680 = vadd.f32 0.0, %v2679
      %v2681 = vpop.f32.mrf.mxu0
      %2682 = vmatprep.mubr.bf16.mxu0 0
      %2683 = vmatmul.mubr.bf16.gmra.mxu0 %v2589
      %v2684 = vpop.f32.mrf.mxu0
      %v2685 = vadd.f32 0.0, %v2684
      %v2686 = vpop.f32.mrf.mxu0
      %v2687 = vpop.f32.mrf.mxu0
      %v2688 = vadd.f32 0.0, %v2687
      %v2689 = vpop.f32.mrf.mxu0
      %2690 = vmatprep.mubr.bf16.mxu0 0
      %2691 = vmatmul.mubr.bf16.gmra.mxu0 %v2592
      %v2692 = vpop.f32.mrf.mxu0
      %v2693 = vadd.f32 0.0, %v2692
      %v2694 = vpop.f32.mrf.mxu0
      %v2695 = vpop.f32.mrf.mxu0
      %v2696 = vadd.f32 0.0, %v2695
      %v2697 = vpop.f32.mrf.mxu0
      %2698 = vmatprep.mubr.bf16.mxu0 0
      %2699 = vmatmul.mubr.bf16.gmra.mxu0 %v2595
      %v2700 = vpop.f32.mrf.mxu0
      %v2701 = vadd.f32 0.0, %v2700
      %v2702 = vpop.f32.mrf.mxu0
      %v2703 = vpop.f32.mrf.mxu0
      %v2704 = vadd.f32 0.0, %v2703
      %v2705 = vpop.f32.mrf.mxu0
      %2706 = vmatprep.mubr.bf16.mxu0 0
      %2707 = vmatmul.mubr.bf16.gmra.mxu0 %v2598
      %v2708 = vpop.f32.mrf.mxu0
      %v2709 = vadd.f32 0.0, %v2708
      %v2710 = vpop.f32.mrf.mxu0
      %v2711 = vpop.f32.mrf.mxu0
      %v2712 = vadd.f32 0.0, %v2711
      %v2713 = vpop.f32.mrf.mxu0
      %2714 = vmatprep.mubr.bf16.mxu0 0
      %2715 = vmatmul.mubr.bf16.gmra.mxu0 %v2601
      %v2716 = vpop.f32.mrf.mxu0
      %v2717 = vadd.f32 0.0, %v2716
      %v2718 = vpop.f32.mrf.mxu0
      %v2719 = vpop.f32.mrf.mxu0
      %v2720 = vadd.f32 0.0, %v2719
      %v2721 = vpop.f32.mrf.mxu0
      %2722 = vmatprep.mubr.bf16.mxu0 0
      %2723 = vmatmul.mubr.bf16.gmra.mxu0 %v2604
      %v2724 = vpop.f32.mrf.mxu0
      %v2725 = vadd.f32 0.0, %v2724
      %v2726 = vpop.f32.mrf.mxu0
      %v2727 = vpop.f32.mrf.mxu0
      %v2728 = vadd.f32 0.0, %v2727
      %v2729 = vpop.f32.mrf.mxu0
      %2730 = vmatprep.mubr.bf16.mxu0 0
      %2731 = vmatmul.mubr.bf16.gmra.mxu0 %v2607
      %v2732 = vpop.f32.mrf.mxu0
      %v2733 = vadd.f32 0.0, %v2732
      %v2734 = vpop.f32.mrf.mxu0
      %v2735 = vpop.f32.mrf.mxu0
      %v2736 = vadd.f32 0.0, %v2735
      %v2737 = vpop.f32.mrf.mxu0
      %2738 = vmatprep.mubr.bf16.mxu0 0
      %2739 = vmatmul.mubr.bf16.gmra.mxu0 %v2610
      %v2740 = vpop.f32.mrf.mxu0
      %v2741 = vadd.f32 0.0, %v2740
      %v2742 = vpop.f32.mrf.mxu0
      %v2743 = vpop.f32.mrf.mxu0
      %v2744 = vadd.f32 0.0, %v2743
      %v2745 = vpop.f32.mrf.mxu0
      %2746 = vmatprep.mubr.bf16.mxu0 0
      %2747 = vmatmul.mubr.bf16.gmra.mxu0 %v2613
      %v2748 = vpop.f32.mrf.mxu0
      %v2749 = vadd.f32 0.0, %v2748
      %v2750 = vpop.f32.mrf.mxu0
      %v2751 = vpop.f32.mrf.mxu0
      %v2752 = vadd.f32 0.0, %v2751
      %v2753 = vpop.f32.mrf.mxu0
      %2754 = vmatprep.mubr.bf16.mxu0 0
      %2755 = vmatmul.mubr.bf16.gmra.mxu0 %v2616
      %v2756 = vpop.f32.mrf.mxu0
      %v2757 = vadd.f32 0.0, %v2756
      %v2758 = vpop.f32.mrf.mxu0
      %v2759 = vpop.f32.mrf.mxu0
      %v2760 = vadd.f32 0.0, %v2759
      %v2761 = vpop.f32.mrf.mxu0
      %2762 = vmatprep.mubr.bf16.mxu0 0
      %2763 = vmatmul.mubr.bf16.gmra.mxu0 %v2619
      %v2764 = vpop.f32.mrf.mxu0
      %v2765 = vadd.f32 0.0, %v2764
      %v2766 = vpop.f32.mrf.mxu0
      %v2767 = vpop.f32.mrf.mxu0
      %v2768 = vadd.f32 0.0, %v2767
      %v2769 = vpop.f32.mrf.mxu0
      %2770 = vmatprep.mubr.bf16.mxu0 0
      %2771 = vmatmul.mubr.bf16.gmra.mxu0 %v2622
      %v2772 = vpop.f32.mrf.mxu0
      %v2773 = vadd.f32 0.0, %v2772
      %v2774 = vpop.f32.mrf.mxu0
      %v2775 = vpop.f32.mrf.mxu0
      %v2776 = vadd.f32 0.0, %v2775
      %v2777 = vpop.f32.mrf.mxu0
      %2778 = vmatprep.mubr.bf16.mxu0 0
      %2779 = vmatmul.mubr.bf16.gmra.mxu0 %v2625
      %v2780 = vpop.f32.mrf.mxu0
      %v2781 = vadd.f32 0.0, %v2780
      %v2782 = vpop.f32.mrf.mxu0
      %v2783 = vpop.f32.mrf.mxu0
      %v2784 = vadd.f32 0.0, %v2783
      %v2785 = vpop.f32.mrf.mxu0
      %2786 = vmatprep.mubr.bf16.mxu0 0
      %2787 = vmatmul.mubr.bf16.gmra.mxu0 %v2628
      %v2788 = vpop.f32.mrf.mxu0
      %v2789 = vadd.f32 0.0, %v2788
      %v2790 = vpop.f32.mrf.mxu0
      %v2791 = vpop.f32.mrf.mxu0
      %v2792 = vadd.f32 0.0, %v2791
      %v2793 = vpop.f32.mrf.mxu0
      %2794 = vmatprep.mubr.bf16.mxu0 0
      %2795 = vmatmul.mubr.bf16.gmra.mxu0 %v2631
      %v2796 = vpop.f32.mrf.mxu0
      %v2797 = vadd.f32 0.0, %v2796
      %v2798 = vpop.f32.mrf.mxu0
      %v2799 = vpop.f32.mrf.mxu0
      %v2800 = vadd.f32 0.0, %v2799
      %v2801 = vpop.f32.mrf.mxu0
      %2802 = vmatprep.mubr.bf16.mxu0 0
      %2803 = vmatmul.mubr.bf16.gmra.mxu0 %v2634
      %v2804 = vpop.f32.mrf.mxu0
      %v2805 = vadd.f32 0.0, %v2804
      %v2806 = vpop.f32.mrf.mxu0
      %v2807 = vpop.f32.mrf.mxu0
      %v2808 = vadd.f32 0.0, %v2807
      %v2809 = vpop.f32.mrf.mxu0
      %2810 = vmatprep.mubr.bf16.mxu0 0
      %2811 = vmatmul.mubr.bf16.gmra.mxu0 %v2637
      %v2812 = vpop.f32.mrf.mxu0
      %v2813 = vadd.f32 0.0, %v2812
      %v2814 = vpop.f32.mrf.mxu0
      %v2815 = vpop.f32.mrf.mxu0
      %v2816 = vadd.f32 0.0, %v2815
      %v2817 = vpop.f32.mrf.mxu0
      %2818 = vdwg.mxu0
      %v2819 = vadd.f32 %v2493, %v2677
      %v2820 = vadd.f32 %v2494, %v2680
      %v2821 = vadd.f32 %v2495, %v2685
      %v2822 = vadd.f32 %v2496, %v2688
      %v2823 = vadd.f32 %v2497, %v2693
      %v2824 = vadd.f32 %v2498, %v2696
      %v2825 = vadd.f32 %v2499, %v2701
      %v2826 = vadd.f32 %v2500, %v2704
      %v2827 = vadd.f32 %v2501, %v2709
      %v2828 = vadd.f32 %v2502, %v2712
      %v2829 = vadd.f32 %v2503, %v2717
      %v2830 = vadd.f32 %v2504, %v2720
      %v2831 = vadd.f32 %v2505, %v2725
      %v2832 = vadd.f32 %v2506, %v2728
      %v2833 = vadd.f32 %v2507, %v2733
      %v2834 = vadd.f32 %v2508, %v2736
      %v2835 = vadd.f32 %v2509, %v2741
      %v2836 = vadd.f32 %v2510, %v2744
      %v2837 = vadd.f32 %v2511, %v2749
      %v2838 = vadd.f32 %v2512, %v2752
      %v2839 = vadd.f32 %v2513, %v2757
      %v2840 = vadd.f32 %v2514, %v2760
      %v2841 = vadd.f32 %v2515, %v2765
      %v2842 = vadd.f32 %v2516, %v2768
      %v2843 = vadd.f32 %v2517, %v2773
      %v2844 = vadd.f32 %v2518, %v2776
      %v2845 = vadd.f32 %v2519, %v2781
      %v2846 = vadd.f32 %v2520, %v2784
      %v2847 = vadd.f32 %v2521, %v2789
      %v2848 = vadd.f32 %v2522, %v2792
      %v2849 = vadd.f32 %v2523, %v2797
      %v2850 = vadd.f32 %v2524, %v2800
      %v2851 = vadd.f32 %v2525, %v2805
      %v2852 = vadd.f32 %v2526, %v2808
      %v2853 = vadd.f32 %v2527, %v2813
      %v2854 = vadd.f32 %v2528, %v2816
      %v2855 = vld [vmem:[#allocation2 + $0x26] sm:$0xff]
      %v2856 = vld [vmem:[#allocation2 + $0x2e] sm:$0xff]
      %v2857 = vld [vmem:[#allocation2 + $0x36] sm:$0xff]
      %v2858 = vld [vmem:[#allocation2 + $0x3e] sm:$0xff]
      %v2859 = vld [vmem:[#allocation2 + $0x46] sm:$0xff]
      %v2860 = vld [vmem:[#allocation2 + $0x4e] sm:$0xff]
      %v2861 = vld [vmem:[#allocation2 + $0x56] sm:$0xff]
      %v2862 = vld [vmem:[#allocation2 + $0x5e] sm:$0xff]
      %v2863 = vld [vmem:[#allocation2 + $0x66] sm:$0xff]
      %v2864 = vld [vmem:[#allocation2 + $0x6e] sm:$0xff]
      %v2865 = vld [vmem:[#allocation2 + $0x76] sm:$0xff]
      %v2866 = vld [vmem:[#allocation2 + $0x7e] sm:$0xff]
      %v2867 = vld [vmem:[#allocation2 + $0x86] sm:$0xff]
      %v2868 = vld [vmem:[#allocation2 + $0x8e] sm:$0xff]
      %v2869 = vld [vmem:[#allocation2 + $0x96] sm:$0xff]
      %v2870 = vld [vmem:[#allocation2 + $0x9e] sm:$0xff]
      %v2871 = vld [vmem:[#allocation2 + $0xa6] sm:$0xff]
      %v2872 = vld [vmem:[#allocation2 + $0xae] sm:$0xff]
      %v2873 = vld [vmem:[#allocation2 + $0xb6] sm:$0xff]
      %v2874 = vld [vmem:[#allocation2 + $0xbe] sm:$0xff]
      %v2875 = vld [vmem:[#allocation2 + $0xc6] sm:$0xff]
      %v2876 = vld [vmem:[#allocation2 + $0xce] sm:$0xff]
      %v2877 = vld [vmem:[#allocation2 + $0xd6] sm:$0xff]
      %v2878 = vld [vmem:[#allocation2 + $0xde] sm:$0xff]
      %v2879 = vld [vmem:[#allocation2 + $0xe6] sm:$0xff]
      %v2880 = vld [vmem:[#allocation2 + $0xee] sm:$0xff]
      %v2881 = vld [vmem:[#allocation2 + $0xf6] sm:$0xff]
      %v2882 = vld [vmem:[#allocation2 + $0xfe] sm:$0xff]
      %v2883 = vld [vmem:[#allocation2 + $0x106] sm:$0xff]
      %v2884 = vld [vmem:[#allocation2 + $0x10e] sm:$0xff]
      %v2885 = vld [vmem:[#allocation2 + $0x116] sm:$0xff]
      %v2886 = vld [vmem:[#allocation2 + $0x11e] sm:$0xff]
      %v2887 = vld [vmem:[#allocation2 + $0x126] sm:$0xff]
      %v2888 = vld [vmem:[#allocation2 + $0x12e] sm:$0xff]
      %v2889 = vld [vmem:[#allocation2 + $0x136] sm:$0xff]
      %v2890 = vld [vmem:[#allocation2 + $0x13e] sm:$0xff]
      %v2891 = vpack.c.bf16 %v2856, %v2855
      %v2892 = vpack.c.bf16 %v2858, %v2857
      %v2893 = vpack.c.bf16 %v2860, %v2859
      %v2894 = vpack.c.bf16 %v2862, %v2861
      %v2895 = vpack.c.bf16 %v2864, %v2863
      %v2896 = vpack.c.bf16 %v2866, %v2865
      %v2897 = vpack.c.bf16 %v2868, %v2867
      %v2898 = vpack.c.bf16 %v2870, %v2869
      %v2899 = vpack.c.bf16 %v2872, %v2871
      %v2900 = vpack.c.bf16 %v2874, %v2873
      %v2901 = vpack.c.bf16 %v2876, %v2875
      %v2902 = vpack.c.bf16 %v2878, %v2877
      %v2903 = vpack.c.bf16 %v2880, %v2879
      %v2904 = vpack.c.bf16 %v2882, %v2881
      %v2905 = vpack.c.bf16 %v2884, %v2883
      %v2906 = vpack.c.bf16 %v2886, %v2885
      %v2907 = vpack.c.bf16 %v2888, %v2887
      %v2908 = vpack.c.bf16 %v2890, %v2889
      %v2909 = vld [vmem:[%s1 + $0x18] sm:$0x7]
      %v2910 = vpack.c.bf16 %v2909, %v2909
      %v2912 = vsel %vm199, %v2891, 0
      %v2915 = vsel %vm199, %v2892, 0
      %v2918 = vsel %vm199, %v2893, 0
      %v2921 = vsel %vm199, %v2894, 0
      %v2924 = vsel %vm199, %v2895, 0
      %v2927 = vsel %vm199, %v2896, 0
      %v2930 = vsel %vm199, %v2897, 0
      %v2933 = vsel %vm199, %v2898, 0
      %v2936 = vsel %vm199, %v2899, 0
      %v2939 = vsel %vm199, %v2900, 0
      %v2942 = vsel %vm199, %v2901, 0
      %v2945 = vsel %vm199, %v2902, 0
      %v2948 = vsel %vm199, %v2903, 0
      %v2951 = vsel %vm199, %v2904, 0
      %v2954 = vsel %vm199, %v2905, 0
      %v2957 = vsel %vm199, %v2906, 0
      %v2960 = vsel %vm199, %v2907, 0
      %v2963 = vsel %vm199, %v2908, 0
      %v2966 = vand.u32 %v2910, %v484
      %2968 = vmatprep.subr.bf16.mxu0 0
      %2969 = vmatpush1.bf16.msra.mxu0 0
      %2970 = vmatprep.subr.bf16.mxu0 0
      %2971 = vmatpush1.bf16.msra.mxu0 0
      %2972 = vmatprep.subr.bf16.mxu0 0
      %2973 = vmatpush1.bf16.msra.mxu0 0
      %2974 = vmatprep.subr.bf16.mxu0 0
      %2975 = vmatpush1.bf16.msra.mxu0 0
      %2976 = vmatprep.subr.bf16.mxu0 0
      %2977 = vmatpush1.bf16.msra.mxu0 0
      %2978 = vmatprep.subr.bf16.mxu0 0
      %2979 = vmatpush1.bf16.msra.mxu0 0
      %2980 = vmatprep.subr.bf16.mxu0 0
      %2981 = vmatpush1.bf16.msra.mxu0 0
      %2982 = vmatprep.subr.bf16.mxu0 0
      %2983 = vmatpush1.bf16.msra.mxu0 %v2966
      %2984 = vmatprep.subr.bf16.mxu0 0
      %2985 = vmatpush2.bf16.msra.mxu0 0
      %2986 = vmatprep.subr.bf16.mxu0 0
      %2987 = vmatpush2.bf16.msra.mxu0 0
      %2988 = vmatprep.subr.bf16.mxu0 0
      %2989 = vmatpush2.bf16.msra.mxu0 0
      %2990 = vmatprep.subr.bf16.mxu0 0
      %2991 = vmatpush2.bf16.msra.mxu0 0
      %2992 = vmatprep.subr.bf16.mxu0 0
      %2993 = vmatpush2.bf16.msra.mxu0 0
      %2994 = vmatprep.subr.bf16.mxu0 0
      %2995 = vmatpush2.bf16.msra.mxu0 0
      %2996 = vmatprep.subr.bf16.mxu0 0
      %2997 = vmatpush2.bf16.msra.mxu0 0
      %2998 = vmatprep.subr.bf16.mxu0 0
      %2999 = vmatpush2.bf16.msra.mxu0 0
      %3000 = vmatprep.mubr.bf16.mxu0 0
      %3001 = vmatmul.mubr.bf16.gmra.mxu0 %v2912
      %v3002 = vpop.f32.mrf.mxu0
      %v3003 = vadd.f32 0.0, %v3002
      %v3004 = vpop.f32.mrf.mxu0
      %v3005 = vpop.f32.mrf.mxu0
      %v3006 = vadd.f32 0.0, %v3005
      %v3007 = vpop.f32.mrf.mxu0
      %3008 = vmatprep.mubr.bf16.mxu0 0
      %3009 = vmatmul.mubr.bf16.gmra.mxu0 %v2915
      %v3010 = vpop.f32.mrf.mxu0
      %v3011 = vadd.f32 0.0, %v3010
      %v3012 = vpop.f32.mrf.mxu0
      %v3013 = vpop.f32.mrf.mxu0
      %v3014 = vadd.f32 0.0, %v3013
      %v3015 = vpop.f32.mrf.mxu0
      %3016 = vmatprep.mubr.bf16.mxu0 0
      %3017 = vmatmul.mubr.bf16.gmra.mxu0 %v2918
      %v3018 = vpop.f32.mrf.mxu0
      %v3019 = vadd.f32 0.0, %v3018
      %v3020 = vpop.f32.mrf.mxu0
      %v3021 = vpop.f32.mrf.mxu0
      %v3022 = vadd.f32 0.0, %v3021
      %v3023 = vpop.f32.mrf.mxu0
      %3024 = vmatprep.mubr.bf16.mxu0 0
      %3025 = vmatmul.mubr.bf16.gmra.mxu0 %v2921
      %v3026 = vpop.f32.mrf.mxu0
      %v3027 = vadd.f32 0.0, %v3026
      %v3028 = vpop.f32.mrf.mxu0
      %v3029 = vpop.f32.mrf.mxu0
      %v3030 = vadd.f32 0.0, %v3029
      %v3031 = vpop.f32.mrf.mxu0
      %3032 = vmatprep.mubr.bf16.mxu0 0
      %3033 = vmatmul.mubr.bf16.gmra.mxu0 %v2924
      %v3034 = vpop.f32.mrf.mxu0
      %v3035 = vadd.f32 0.0, %v3034
      %v3036 = vpop.f32.mrf.mxu0
      %v3037 = vpop.f32.mrf.mxu0
      %v3038 = vadd.f32 0.0, %v3037
      %v3039 = vpop.f32.mrf.mxu0
      %3040 = vmatprep.mubr.bf16.mxu0 0
      %3041 = vmatmul.mubr.bf16.gmra.mxu0 %v2927
      %v3042 = vpop.f32.mrf.mxu0
      %v3043 = vadd.f32 0.0, %v3042
      %v3044 = vpop.f32.mrf.mxu0
      %v3045 = vpop.f32.mrf.mxu0
      %v3046 = vadd.f32 0.0, %v3045
      %v3047 = vpop.f32.mrf.mxu0
      %3048 = vmatprep.mubr.bf16.mxu0 0
      %3049 = vmatmul.mubr.bf16.gmra.mxu0 %v2930
      %v3050 = vpop.f32.mrf.mxu0
      %v3051 = vadd.f32 0.0, %v3050
      %v3052 = vpop.f32.mrf.mxu0
      %v3053 = vpop.f32.mrf.mxu0
      %v3054 = vadd.f32 0.0, %v3053
      %v3055 = vpop.f32.mrf.mxu0
      %3056 = vmatprep.mubr.bf16.mxu0 0
      %3057 = vmatmul.mubr.bf16.gmra.mxu0 %v2933
      %v3058 = vpop.f32.mrf.mxu0
      %v3059 = vadd.f32 0.0, %v3058
      %v3060 = vpop.f32.mrf.mxu0
      %v3061 = vpop.f32.mrf.mxu0
      %v3062 = vadd.f32 0.0, %v3061
      %v3063 = vpop.f32.mrf.mxu0
      %3064 = vmatprep.mubr.bf16.mxu0 0
      %3065 = vmatmul.mubr.bf16.gmra.mxu0 %v2936
      %v3066 = vpop.f32.mrf.mxu0
      %v3067 = vadd.f32 0.0, %v3066
      %v3068 = vpop.f32.mrf.mxu0
      %v3069 = vpop.f32.mrf.mxu0
      %v3070 = vadd.f32 0.0, %v3069
      %v3071 = vpop.f32.mrf.mxu0
      %3072 = vmatprep.mubr.bf16.mxu0 0
      %3073 = vmatmul.mubr.bf16.gmra.mxu0 %v2939
      %v3074 = vpop.f32.mrf.mxu0
      %v3075 = vadd.f32 0.0, %v3074
      %v3076 = vpop.f32.mrf.mxu0
      %v3077 = vpop.f32.mrf.mxu0
      %v3078 = vadd.f32 0.0, %v3077
      %v3079 = vpop.f32.mrf.mxu0
      %3080 = vmatprep.mubr.bf16.mxu0 0
      %3081 = vmatmul.mubr.bf16.gmra.mxu0 %v2942
      %v3082 = vpop.f32.mrf.mxu0
      %v3083 = vadd.f32 0.0, %v3082
      %v3084 = vpop.f32.mrf.mxu0
      %v3085 = vpop.f32.mrf.mxu0
      %v3086 = vadd.f32 0.0, %v3085
      %v3087 = vpop.f32.mrf.mxu0
      %3088 = vmatprep.mubr.bf16.mxu0 0
      %3089 = vmatmul.mubr.bf16.gmra.mxu0 %v2945
      %v3090 = vpop.f32.mrf.mxu0
      %v3091 = vadd.f32 0.0, %v3090
      %v3092 = vpop.f32.mrf.mxu0
      %v3093 = vpop.f32.mrf.mxu0
      %v3094 = vadd.f32 0.0, %v3093
      %v3095 = vpop.f32.mrf.mxu0
      %3096 = vmatprep.mubr.bf16.mxu0 0
      %3097 = vmatmul.mubr.bf16.gmra.mxu0 %v2948
      %v3098 = vpop.f32.mrf.mxu0
      %v3099 = vadd.f32 0.0, %v3098
      %v3100 = vpop.f32.mrf.mxu0
      %v3101 = vpop.f32.mrf.mxu0
      %v3102 = vadd.f32 0.0, %v3101
      %v3103 = vpop.f32.mrf.mxu0
      %3104 = vmatprep.mubr.bf16.mxu0 0
      %3105 = vmatmul.mubr.bf16.gmra.mxu0 %v2951
      %v3106 = vpop.f32.mrf.mxu0
      %v3107 = vadd.f32 0.0, %v3106
      %v3108 = vpop.f32.mrf.mxu0
      %v3109 = vpop.f32.mrf.mxu0
      %v3110 = vadd.f32 0.0, %v3109
      %v3111 = vpop.f32.mrf.mxu0
      %3112 = vmatprep.mubr.bf16.mxu0 0
      %3113 = vmatmul.mubr.bf16.gmra.mxu0 %v2954
      %v3114 = vpop.f32.mrf.mxu0
      %v3115 = vadd.f32 0.0, %v3114
      %v3116 = vpop.f32.mrf.mxu0
      %v3117 = vpop.f32.mrf.mxu0
      %v3118 = vadd.f32 0.0, %v3117
      %v3119 = vpop.f32.mrf.mxu0
      %3120 = vmatprep.mubr.bf16.mxu0 0
      %3121 = vmatmul.mubr.bf16.gmra.mxu0 %v2957
      %v3122 = vpop.f32.mrf.mxu0
      %v3123 = vadd.f32 0.0, %v3122
      %v3124 = vpop.f32.mrf.mxu0
      %v3125 = vpop.f32.mrf.mxu0
      %v3126 = vadd.f32 0.0, %v3125
      %v3127 = vpop.f32.mrf.mxu0
      %3128 = vmatprep.mubr.bf16.mxu0 0
      %3129 = vmatmul.mubr.bf16.gmra.mxu0 %v2960
      %v3130 = vpop.f32.mrf.mxu0
      %v3131 = vadd.f32 0.0, %v3130
      %v3132 = vpop.f32.mrf.mxu0
      %v3133 = vpop.f32.mrf.mxu0
      %v3134 = vadd.f32 0.0, %v3133
      %v3135 = vpop.f32.mrf.mxu0
      %3136 = vmatprep.mubr.bf16.mxu0 0
      %3137 = vmatmul.mubr.bf16.gmra.mxu0 %v2963
      %v3138 = vpop.f32.mrf.mxu0
      %v3139 = vadd.f32 0.0, %v3138
      %v3140 = vpop.f32.mrf.mxu0
      %v3141 = vpop.f32.mrf.mxu0
      %v3142 = vadd.f32 0.0, %v3141
      %v3143 = vpop.f32.mrf.mxu0
      %3144 = vdwg.mxu0
      %v3145 = vadd.f32 %v2819, %v3003
      %v3146 = vadd.f32 %v2820, %v3006
      %v3147 = vadd.f32 %v2821, %v3011
      %v3148 = vadd.f32 %v2822, %v3014
      %v3149 = vadd.f32 %v2823, %v3019
      %v3150 = vadd.f32 %v2824, %v3022
      %v3151 = vadd.f32 %v2825, %v3027
      %v3152 = vadd.f32 %v2826, %v3030
      %v3153 = vadd.f32 %v2827, %v3035
      %v3154 = vadd.f32 %v2828, %v3038
      %v3155 = vadd.f32 %v2829, %v3043
      %v3156 = vadd.f32 %v2830, %v3046
      %v3157 = vadd.f32 %v2831, %v3051
      %v3158 = vadd.f32 %v2832, %v3054
      %v3159 = vadd.f32 %v2833, %v3059
      %v3160 = vadd.f32 %v2834, %v3062
      %v3161 = vadd.f32 %v2835, %v3067
      %v3162 = vadd.f32 %v2836, %v3070
      %v3163 = vadd.f32 %v2837, %v3075
      %v3164 = vadd.f32 %v2838, %v3078
      %v3165 = vadd.f32 %v2839, %v3083
      %v3166 = vadd.f32 %v2840, %v3086
      %v3167 = vadd.f32 %v2841, %v3091
      %v3168 = vadd.f32 %v2842, %v3094
      %v3169 = vadd.f32 %v2843, %v3099
      %v3170 = vadd.f32 %v2844, %v3102
      %v3171 = vadd.f32 %v2845, %v3107
      %v3172 = vadd.f32 %v2846, %v3110
      %v3173 = vadd.f32 %v2847, %v3115
      %v3174 = vadd.f32 %v2848, %v3118
      %v3175 = vadd.f32 %v2849, %v3123
      %v3176 = vadd.f32 %v2850, %v3126
      %v3177 = vadd.f32 %v2851, %v3131
      %v3178 = vadd.f32 %v2852, %v3134
      %v3179 = vadd.f32 %v2853, %v3139
      %v3180 = vadd.f32 %v2854, %v3142
      %v3181 = vld [vmem:[%s2] sm:$0x1]
      %v3183 = vlaneseq
      %v3184 = vshrl.u32 %v3183, 7
      %v3185 = vsub.s32 0, %v3184
      %v3186 = vrot.slane %v3181, %v3185
      %v3188 = vadd.f32 %v3145, %v3186
      %v3189 = vadd.f32 %v3146, %v3186
      %v3190 = vadd.f32 %v3147, %v3186
      %v3191 = vadd.f32 %v3148, %v3186
      %v3192 = vadd.f32 %v3149, %v3186
      %v3193 = vadd.f32 %v3150, %v3186
      %v3194 = vadd.f32 %v3151, %v3186
      %v3195 = vadd.f32 %v3152, %v3186
      %v3196 = vadd.f32 %v3153, %v3186
      %v3197 = vadd.f32 %v3154, %v3186
      %v3198 = vadd.f32 %v3155, %v3186
      %v3199 = vadd.f32 %v3156, %v3186
      %v3200 = vadd.f32 %v3157, %v3186
      %v3201 = vadd.f32 %v3158, %v3186
      %v3202 = vadd.f32 %v3159, %v3186
      %v3203 = vadd.f32 %v3160, %v3186
      %v3204 = vadd.f32 %v3161, %v3186
      %v3205 = vadd.f32 %v3162, %v3186
      %v3206 = vadd.f32 %v3163, %v3186
      %v3207 = vadd.f32 %v3164, %v3186
      %v3208 = vadd.f32 %v3165, %v3186
      %v3209 = vadd.f32 %v3166, %v3186
      %v3210 = vadd.f32 %v3167, %v3186
      %v3211 = vadd.f32 %v3168, %v3186
      %v3212 = vadd.f32 %v3169, %v3186
      %v3213 = vadd.f32 %v3170, %v3186
      %v3214 = vadd.f32 %v3171, %v3186
      %v3215 = vadd.f32 %v3172, %v3186
      %v3216 = vadd.f32 %v3173, %v3186
      %v3217 = vadd.f32 %v3174, %v3186
      %v3218 = vadd.f32 %v3175, %v3186
      %v3219 = vadd.f32 %v3176, %v3186
      %v3220 = vadd.f32 %v3177, %v3186
      %v3221 = vadd.f32 %v3178, %v3186
      %v3222 = vadd.f32 %v3179, %v3186
      %v3223 = vadd.f32 %v3180, %v3186
      %v3224 = vld [vmem:[%s3] sm:$0xff]
      %v3225 = vld [vmem:[%s3 + $0x8] sm:$0xff]
      %v3226 = vld [vmem:[%s3 + $0x10] sm:$0xff]
      %v3227 = vld [vmem:[%s3 + $0x18] sm:$0xff]
      %v3228 = vld [vmem:[%s3 + $0x20] sm:$0xff]
      %v3229 = vld [vmem:[%s3 + $0x28] sm:$0xff]
      %v3230 = vld [vmem:[%s3 + $0x30] sm:$0xff]
      %v3231 = vld [vmem:[%s3 + $0x38] sm:$0xff]
      %v3232 = vld [vmem:[%s3 + $0x40] sm:$0xff]
      %v3233 = vld [vmem:[%s3 + $0x48] sm:$0xff]
      %v3234 = vld [vmem:[%s3 + $0x50] sm:$0xff]
      %v3235 = vld [vmem:[%s3 + $0x58] sm:$0xff]
      %v3236 = vld [vmem:[%s3 + $0x60] sm:$0xff]
      %v3237 = vld [vmem:[%s3 + $0x68] sm:$0xff]
      %v3238 = vld [vmem:[%s3 + $0x70] sm:$0xff]
      %v3239 = vld [vmem:[%s3 + $0x78] sm:$0xff]
      %v3240 = vld [vmem:[%s3 + $0x80] sm:$0xff]
      %v3241 = vld [vmem:[%s3 + $0x88] sm:$0xff]
      %v3242 = vld [vmem:[%s3 + $0x90] sm:$0xff]
      %v3243 = vld [vmem:[%s3 + $0x98] sm:$0xff]
      %v3244 = vld [vmem:[%s3 + $0xa0] sm:$0xff]
      %v3245 = vld [vmem:[%s3 + $0xa8] sm:$0xff]
      %v3246 = vld [vmem:[%s3 + $0xb0] sm:$0xff]
      %v3247 = vld [vmem:[%s3 + $0xb8] sm:$0xff]
      %v3248 = vld [vmem:[%s3 + $0xc0] sm:$0xff]
      %v3249 = vld [vmem:[%s3 + $0xc8] sm:$0xff]
      %v3250 = vld [vmem:[%s3 + $0xd0] sm:$0xff]
      %v3251 = vld [vmem:[%s3 + $0xd8] sm:$0xff]
      %v3252 = vld [vmem:[%s3 + $0xe0] sm:$0xff]
      %v3253 = vld [vmem:[%s3 + $0xe8] sm:$0xff]
      %v3254 = vld [vmem:[%s3 + $0xf0] sm:$0xff]
      %v3255 = vld [vmem:[%s3 + $0xf8] sm:$0xff]
      %v3256 = vld [vmem:[%s3 + $0x100] sm:$0xff]
      %v3257 = vld [vmem:[%s3 + $0x108] sm:$0xff]
      %v3258 = vld [vmem:[%s3 + $0x110] sm:$0xff]
      %v3259 = vld [vmem:[%s3 + $0x118] sm:$0xff]
      %3261 = vset.pattern.permute.xlu0 0
      %3262 = vperm.xlu0 %3261, %v3224
      %v3263 = vpop.permute.xlu0 %3262
      %3266 = vset.pattern.permute.xlu0 0
      %3267 = vperm.xlu0 %3266, %v3225
      %v3268 = vpop.permute.xlu0 %3267
      %3271 = vset.pattern.permute.xlu0 0
      %3272 = vperm.xlu0 %3271, %v3226
      %v3273 = vpop.permute.xlu0 %3272
      %3276 = vset.pattern.permute.xlu0 0
      %3277 = vperm.xlu0 %3276, %v3227
      %v3278 = vpop.permute.xlu0 %3277
      %3281 = vset.pattern.permute.xlu0 0
      %3282 = vperm.xlu0 %3281, %v3228
      %v3283 = vpop.permute.xlu0 %3282
      %3286 = vset.pattern.permute.xlu0 0
      %3287 = vperm.xlu0 %3286, %v3229
      %v3288 = vpop.permute.xlu0 %3287
      %3291 = vset.pattern.permute.xlu0 0
      %3292 = vperm.xlu0 %3291, %v3230
      %v3293 = vpop.permute.xlu0 %3292
      %3296 = vset.pattern.permute.xlu0 0
      %3297 = vperm.xlu0 %3296, %v3231
      %v3298 = vpop.permute.xlu0 %3297
      %3301 = vset.pattern.permute.xlu0 0
      %3302 = vperm.xlu0 %3301, %v3232
      %v3303 = vpop.permute.xlu0 %3302
      %3306 = vset.pattern.permute.xlu0 0
      %3307 = vperm.xlu0 %3306, %v3233
      %v3308 = vpop.permute.xlu0 %3307
      %3311 = vset.pattern.permute.xlu0 0
      %3312 = vperm.xlu0 %3311, %v3234
      %v3313 = vpop.permute.xlu0 %3312
      %3316 = vset.pattern.permute.xlu0 0
      %3317 = vperm.xlu0 %3316, %v3235
      %v3318 = vpop.permute.xlu0 %3317
      %3321 = vset.pattern.permute.xlu0 0
      %3322 = vperm.xlu0 %3321, %v3236
      %v3323 = vpop.permute.xlu0 %3322
      %3326 = vset.pattern.permute.xlu0 0
      %3327 = vperm.xlu0 %3326, %v3237
      %v3328 = vpop.permute.xlu0 %3327
      %3331 = vset.pattern.permute.xlu0 0
      %3332 = vperm.xlu0 %3331, %v3238
      %v3333 = vpop.permute.xlu0 %3332
      %3336 = vset.pattern.permute.xlu0 0
      %3337 = vperm.xlu0 %3336, %v3239
      %v3338 = vpop.permute.xlu0 %3337
      %3341 = vset.pattern.permute.xlu0 0
      %3342 = vperm.xlu0 %3341, %v3240
      %v3343 = vpop.permute.xlu0 %3342
      %3346 = vset.pattern.permute.xlu0 0
      %3347 = vperm.xlu0 %3346, %v3241
      %v3348 = vpop.permute.xlu0 %3347
      %3351 = vset.pattern.permute.xlu0 0
      %3352 = vperm.xlu0 %3351, %v3242
      %v3353 = vpop.permute.xlu0 %3352
      %3356 = vset.pattern.permute.xlu0 0
      %3357 = vperm.xlu0 %3356, %v3243
      %v3358 = vpop.permute.xlu0 %3357
      %3361 = vset.pattern.permute.xlu0 0
      %3362 = vperm.xlu0 %3361, %v3244
      %v3363 = vpop.permute.xlu0 %3362
      %3366 = vset.pattern.permute.xlu0 0
      %3367 = vperm.xlu0 %3366, %v3245
      %v3368 = vpop.permute.xlu0 %3367
      %3371 = vset.pattern.permute.xlu0 0
      %3372 = vperm.xlu0 %3371, %v3246
      %v3373 = vpop.permute.xlu0 %3372
      %3376 = vset.pattern.permute.xlu0 0
      %3377 = vperm.xlu0 %3376, %v3247
      %v3378 = vpop.permute.xlu0 %3377
      %3381 = vset.pattern.permute.xlu0 0
      %3382 = vperm.xlu0 %3381, %v3248
      %v3383 = vpop.permute.xlu0 %3382
      %3386 = vset.pattern.permute.xlu0 0
      %3387 = vperm.xlu0 %3386, %v3249
      %v3388 = vpop.permute.xlu0 %3387
      %3391 = vset.pattern.permute.xlu0 0
      %3392 = vperm.xlu0 %3391, %v3250
      %v3393 = vpop.permute.xlu0 %3392
      %3396 = vset.pattern.permute.xlu0 0
      %3397 = vperm.xlu0 %3396, %v3251
      %v3398 = vpop.permute.xlu0 %3397
      %3401 = vset.pattern.permute.xlu0 0
      %3402 = vperm.xlu0 %3401, %v3252
      %v3403 = vpop.permute.xlu0 %3402
      %3406 = vset.pattern.permute.xlu0 0
      %3407 = vperm.xlu0 %3406, %v3253
      %v3408 = vpop.permute.xlu0 %3407
      %3411 = vset.pattern.permute.xlu0 0
      %3412 = vperm.xlu0 %3411, %v3254
      %v3413 = vpop.permute.xlu0 %3412
      %3416 = vset.pattern.permute.xlu0 0
      %3417 = vperm.xlu0 %3416, %v3255
      %v3418 = vpop.permute.xlu0 %3417
      %3421 = vset.pattern.permute.xlu0 0
      %3422 = vperm.xlu0 %3421, %v3256
      %v3423 = vpop.permute.xlu0 %3422
      %3426 = vset.pattern.permute.xlu0 0
      %3427 = vperm.xlu0 %3426, %v3257
      %v3428 = vpop.permute.xlu0 %3427
      %3431 = vset.pattern.permute.xlu0 0
      %3432 = vperm.xlu0 %3431, %v3258
      %v3433 = vpop.permute.xlu0 %3432
      %3436 = vset.pattern.permute.xlu0 0
      %3437 = vperm.xlu0 %3436, %v3259
      %v3438 = vpop.permute.xlu0 %3437
      %v3440 = vmul.f32 %v3188, %v3263
      %v3441 = vmul.f32 %v3189, %v3268
      %v3442 = vmul.f32 %v3190, %v3273
      %v3443 = vmul.f32 %v3191, %v3278
      %v3444 = vmul.f32 %v3192, %v3283
      %v3445 = vmul.f32 %v3193, %v3288
      %v3446 = vmul.f32 %v3194, %v3293
      %v3447 = vmul.f32 %v3195, %v3298
      %v3448 = vmul.f32 %v3196, %v3303
      %v3449 = vmul.f32 %v3197, %v3308
      %v3450 = vmul.f32 %v3198, %v3313
      %v3451 = vmul.f32 %v3199, %v3318
      %v3452 = vmul.f32 %v3200, %v3323
      %v3453 = vmul.f32 %v3201, %v3328
      %v3454 = vmul.f32 %v3202, %v3333
      %v3455 = vmul.f32 %v3203, %v3338
      %v3456 = vmul.f32 %v3204, %v3343
      %v3457 = vmul.f32 %v3205, %v3348
      %v3458 = vmul.f32 %v3206, %v3353
      %v3459 = vmul.f32 %v3207, %v3358
      %v3460 = vmul.f32 %v3208, %v3363
      %v3461 = vmul.f32 %v3209, %v3368
      %v3462 = vmul.f32 %v3210, %v3373
      %v3463 = vmul.f32 %v3211, %v3378
      %v3464 = vmul.f32 %v3212, %v3383
      %v3465 = vmul.f32 %v3213, %v3388
      %v3466 = vmul.f32 %v3214, %v3393
      %v3467 = vmul.f32 %v3215, %v3398
      %v3468 = vmul.f32 %v3216, %v3403
      %v3469 = vmul.f32 %v3217, %v3408
      %v3470 = vmul.f32 %v3218, %v3413
      %v3471 = vmul.f32 %v3219, %v3418
      %v3472 = vmul.f32 %v3220, %v3423
      %v3473 = vmul.f32 %v3221, %v3428
      %v3474 = vmul.f32 %v3222, %v3433
      %v3475 = vmul.f32 %v3223, %v3438
      %vm3476 = vcmask 523264
      %3477 = vst.msk [vmem:[%s197] sm:$0xff] %vm3476, %v3440
      %3478 = vst.msk [vmem:[%s197 + $0x8] sm:$0xff] %vm3476, %v3441
      %3479 = vst.msk [vmem:[%s197 + $0x10] sm:$0xff] %vm3476, %v3442
      %3480 = vst.msk [vmem:[%s197 + $0x18] sm:$0xff] %vm3476, %v3443
      %3481 = vst.msk [vmem:[%s197 + $0x20] sm:$0xff] %vm3476, %v3444
      %3482 = vst.msk [vmem:[%s197 + $0x28] sm:$0xff] %vm3476, %v3445
      %3483 = vst.msk [vmem:[%s197 + $0x30] sm:$0xff] %vm3476, %v3446
      %3484 = vst.msk [vmem:[%s197 + $0x38] sm:$0xff] %vm3476, %v3447
      %3485 = vst.msk [vmem:[%s197 + $0x40] sm:$0xff] %vm3476, %v3448
      %3486 = vst.msk [vmem:[%s197 + $0x48] sm:$0xff] %vm3476, %v3449
      %3487 = vst.msk [vmem:[%s197 + $0x50] sm:$0xff] %vm3476, %v3450
      %3488 = vst.msk [vmem:[%s197 + $0x58] sm:$0xff] %vm3476, %v3451
      %3489 = vst.msk [vmem:[%s197 + $0x60] sm:$0xff] %vm3476, %v3452
      %3490 = vst.msk [vmem:[%s197 + $0x68] sm:$0xff] %vm3476, %v3453
      %3491 = vst.msk [vmem:[%s197 + $0x70] sm:$0xff] %vm3476, %v3454
      %3492 = vst.msk [vmem:[%s197 + $0x78] sm:$0xff] %vm3476, %v3455
      %3493 = vst.msk [vmem:[%s197 + $0x80] sm:$0xff] %vm3476, %v3456
      %3494 = vst.msk [vmem:[%s197 + $0x88] sm:$0xff] %vm3476, %v3457
      %3495 = vst.msk [vmem:[%s197 + $0x90] sm:$0xff] %vm3476, %v3458
      %3496 = vst.msk [vmem:[%s197 + $0x98] sm:$0xff] %vm3476, %v3459
      %3497 = vst.msk [vmem:[%s197 + $0xa0] sm:$0xff] %vm3476, %v3460
      %3498 = vst.msk [vmem:[%s197 + $0xa8] sm:$0xff] %vm3476, %v3461
      %3499 = vst.msk [vmem:[%s197 + $0xb0] sm:$0xff] %vm3476, %v3462
      %3500 = vst.msk [vmem:[%s197 + $0xb8] sm:$0xff] %vm3476, %v3463
      %3501 = vst.msk [vmem:[%s197 + $0xc0] sm:$0xff] %vm3476, %v3464
      %3502 = vst.msk [vmem:[%s197 + $0xc8] sm:$0xff] %vm3476, %v3465
      %3503 = vst.msk [vmem:[%s197 + $0xd0] sm:$0xff] %vm3476, %v3466
      %3504 = vst.msk [vmem:[%s197 + $0xd8] sm:$0xff] %vm3476, %v3467
      %3505 = vst.msk [vmem:[%s197 + $0xe0] sm:$0xff] %vm3476, %v3468
      %3506 = vst.msk [vmem:[%s197 + $0xe8] sm:$0xff] %vm3476, %v3469
      %3507 = vst.msk [vmem:[%s197 + $0xf0] sm:$0xff] %vm3476, %v3470
      %3508 = vst.msk [vmem:[%s197 + $0xf8] sm:$0xff] %vm3476, %v3471
      %3509 = vst.msk [vmem:[%s197 + $0x100] sm:$0xff] %vm3476, %v3472
      %3510 = vst.msk [vmem:[%s197 + $0x108] sm:$0xff] %vm3476, %v3473
      %3511 = vst.msk [vmem:[%s197 + $0x110] sm:$0xff] %vm3476, %v3474
      %3512 = vst.msk [vmem:[%s197 + $0x118] sm:$0xff] %vm3476, %v3475
      %p3513 = scmp.lt.s32.totalorder %s15, 1
      %s3514 = scalar_select %p3513, %s15, 1
      %s3515 = smul.addr %s3514, 36
      %s3516 = smul.addr %s3515, 8
      %s3517 = scalar_lea.vmem %s4, %s3516
      // Predicated region
      $region37: #{tpu_custom_call.1} parent=35 // pred_check
        %p3518 = pneg %p122
      $region38: #{tpu_custom_call.1} parent=35 // pred_check_branch
        %3520 = sbr.rel (%p3518) target = $region40
      $region39: #{tpu_custom_call.1} parent=35 // pred_region
        _
      $region40: #{tpu_custom_call.1} parent=35 // pred_fallthru
        _
    $region36: #{tpu_custom_call.1} parent=5 // pred_fallthru
      _
    %p3521 = scmp.le.s32.totalorder 2, %s10
    // Predicated region
    $region41: #{tpu_custom_call.1} parent=5 // pred_check
      %p3522 = pneg %p3521
    $region42: #{tpu_custom_call.1} parent=5 // pred_check_branch
      %3524 = sbr.rel (%p3522) target = $region44
    $region43: #{tpu_custom_call.1} parent=5 // pred_region
      %s3525 = ssub.s32 %s10, 2
      // Predicated region
      $region45: #{tpu_custom_call.1} parent=43 // pred_check
        %p3526 = pneg %p128
      $region46: #{tpu_custom_call.1} parent=43 // pred_check_branch
        %3528 = sbr.rel (%p3526) target = $region48
      $region47: #{tpu_custom_call.1} parent=43 // pred_region
        %p3529 = scmp.lt.s32.totalorder %s16, 1
        %s3530 = scalar_select %p3529, %s16, 1
        %s3531 = smul.addr %s3530, 36
        %s3532 = smul.addr %s3531, 8
        %s3533 = scalar_lea.vmem %s4, %s3532
      $region48: #{tpu_custom_call.1} parent=43 // pred_fallthru
        _
    $region44: #{tpu_custom_call.1} parent=5 // pred_fallthru
      _
  $region6: #{tpu_custom_call.1} parent=0 // loop_footer
    %s14 = sadd.s32 1, %s10
  $region7: #{tpu_custom_call.1} parent=0 // loop_footer_branch
    %9 = sbr.rel target = $region3
  $region8: #{tpu_custom_call.1} parent=0 // loop_exit
    _

</llo_original>
